<compile_context>
chip_gen: v6e
topology: v6e:2x2x1
jax: 0.10.0
libtpu: 0.0.40
codegen_flags: <defaults>
</compile_context>

<pallas_src>
import jax
import jax.numpy as jnp
import numpy as np
from jax.experimental import pallas as pl
from jax.experimental.pallas import tpu as pltpu

K = 3  # Conv2d kernel size (both convs)


def model_kernel(x_ref, w0_ref, b0_ref, w1_ref, b1_ref, out_ref, t1_ref):
    n_b, c, h, w = x_ref.shape
    th1, tw1 = h - (K - 1), w - (K - 1)          # t1 spatial size (valid conv)
    th2, tw2 = h - 2 * (K - 1), w - 2 * (K - 1)  # t2 / output spatial size

    for n in range(n_b):
        # ---------- conv0: x -> t1 (stored in its VMEM scratch home) ----------
        accs = [jnp.full((th1, tw1), b0_ref[co], jnp.float32) for co in range(c)]
        for ci in range(c):
            for kh in range(K):
                for kw in range(K):
                    # Exact valid-conv window: one load, consumed by 3 MACs, then dead.
                    tap = x_ref[n, ci, pl.ds(kh, th1), pl.ds(kw, tw1)].astype(jnp.float32)
                    for co in range(c):
                        wv = w0_ref[((co * c + ci) * K + kh) * K + kw]
                        accs[co] = accs[co] + tap * wv
        for co in range(c):
            t1_ref[n, co, :, :] = accs[co]

        # ---------- conv1: t1 -> t2, fused with t3 = crop(t1) + t2 ----------
        accs = [jnp.full((th2, tw2), b1_ref[co], jnp.float32) for co in range(c)]
        for ci in range(c):
            for kh in range(K):
                for kw in range(K):
                    tap = t1_ref[n, ci, pl.ds(kh, th2), pl.ds(kw, tw2)]
                    for co in range(c):
                        wv = w1_ref[((co * c + ci) * K + kh) * K + kw]
                        accs[co] = accs[co] + tap * wv
        for co in range(c):
            # t1 center-cropped by (1,1) aligns with t2's grid: direct window
            # load from the scratch (recomputed, not a cached rolled tap).
            t1_crop = t1_ref[n, co, pl.ds(1, th2), pl.ds(1, tw2)]
            out_ref[n, co, :, :] = (accs[co] + t1_crop).astype(out_ref.dtype)


def model_forward(x, w0, b0, w1, b1):
    n, c, h, w = x.shape
    assert w0.shape == (c, c, K, K) and w1.shape == (c, c, K, K)
    th1, tw1 = h - (K - 1), w - (K - 1)
    th2, tw2 = h - 2 * (K - 1), w - 2 * (K - 1)

    vmem = pl.BlockSpec(memory_space=pltpu.MemorySpace.VMEM)
    smem = pl.BlockSpec(memory_space=pltpu.MemorySpace.SMEM)

    return pl.pallas_call(
        model_kernel,
        out_shape=jax.ShapeDtypeStruct((n, c, th2, tw2), jnp.float32),
        in_specs=[vmem, smem, smem, smem, smem],
        out_specs=vmem,
        scratch_shapes=[pltpu.VMEM((n, c, th1, tw1), jnp.float32)],
    )(x, w0.reshape(-1), b0, w1.reshape(-1), b1)


def _reference(x, w0, b0, w1, b1):
    """Plain-JAX reference (same semantics) for a correctness check."""
    dn = ("NCHW", "OIHW", "NCHW")
    t1 = jax.lax.conv_general_dilated(x, w0, (1, 1), "VALID",
                                      dimension_numbers=dn) + b0.reshape(1, -1, 1, 1)
    t2 = jax.lax.conv_general_dilated(t1, w1, (1, 1), "VALID",
                                      dimension_numbers=dn) + b1.reshape(1, -1, 1, 1)
    return t1[:, :, 1:-1, 1:-1] + t2


if __name__ == "__main__":
    key = jax.random.PRNGKey(0)
    kx, kw0, kb0, kw1, kb1 = jax.random.split(key, 5)

    # Deterministic Conv2d-style init: U(-1/sqrt(fan_in), 1/sqrt(fan_in)), fan_in = 3*3*3.
    bound = 1.0 / np.sqrt(3 * 3 * 3)
    w0 = jax.random.uniform(kw0, (3, 3, 3, 3), jnp.float32, -bound, bound)
    b0 = jax.random.uniform(kb0, (3,), jnp.float32, -bound, bound)
    w1 = jax.random.uniform(kw1, (3, 3, 3, 3), jnp.float32, -bound, bound)
    b1 = jax.random.uniform(kb1, (3,), jnp.float32, -bound, bound)

    # Small test shape + the module's real shape (1,3,64,64), where the
    # vreg-pressure / sublane-occupancy behavior actually matters.
    for (N, C, H, W) in [(2, 3, 16, 16), (1, 3, 64, 64)]:
        x = jax.random.normal(kx, (N, C, H, W), dtype=jnp.float32)
        out = model_forward(x, w0, b0, w1, b1)
        jax.block_until_ready(out)
        ref = _reference(x, w0, b0, w1, b1)
        assert out.shape == (N, C, H - 4, W - 4), out.shape
        np.testing.assert_allclose(np.asarray(out), np.asarray(ref),
                                   rtol=1e-5, atol=1e-5)

    print("KERNEL_OK")
</pallas_src>

<mosaic_0001>
module attributes {stable_mosaic.version = 11 : i64} {
  func.func @model_kernel(%arg0: memref<2x3x16x16xf32, #tpu.memory_space<vmem>>, %arg1: memref<81xf32, #tpu.memory_space<smem>>, %arg2: memref<3xf32, #tpu.memory_space<smem>>, %arg3: memref<81xf32, #tpu.memory_space<smem>>, %arg4: memref<3xf32, #tpu.memory_space<smem>>, %arg5: memref<2x3x12x12xf32, #tpu.memory_space<vmem>>, %arg6: memref<2x3x14x14xf32, #tpu.memory_space<vmem>>) attributes {dimension_semantics = [], scalar_prefetch = 0 : i64, scratch_operands = 1 : i64, tpu.core_type = #tpu.core_type<tc>} {
    %c0 = arith.constant 0 : index
    %0 = memref.load %arg2[%c0] : memref<3xf32, #tpu.memory_space<smem>>
    %1 = vector.broadcast %0 : f32 to vector<14x14xf32>
    %c1 = arith.constant 1 : index
    %2 = memref.load %arg2[%c1] : memref<3xf32, #tpu.memory_space<smem>>
    %3 = vector.broadcast %2 : f32 to vector<14x14xf32>
    %c2 = arith.constant 2 : index
    %4 = memref.load %arg2[%c2] : memref<3xf32, #tpu.memory_space<smem>>
    %5 = vector.broadcast %4 : f32 to vector<14x14xf32>
    %c0_0 = arith.constant 0 : index
    %c0_1 = arith.constant 0 : index
    %c0_2 = arith.constant 0 : index
    %c0_3 = arith.constant 0 : index
    %6 = vector.load %arg0[%c0_0, %c0_1, %c0_2, %c0_3] : memref<2x3x16x16xf32, #tpu.memory_space<vmem>>, vector<1x1x14x14xf32>
    %7 = vector.shape_cast %6 : vector<1x1x14x14xf32> to vector<14x14xf32>
    %c0_4 = arith.constant 0 : index
    %8 = memref.load %arg1[%c0_4] : memref<81xf32, #tpu.memory_space<smem>>
    %9 = vector.broadcast %8 : f32 to vector<14x14xf32>
    %10 = arith.mulf %7, %9 : vector<14x14xf32>
    %11 = arith.addf %1, %10 : vector<14x14xf32>
    %c27 = arith.constant 27 : index
    %12 = memref.load %arg1[%c27] : memref<81xf32, #tpu.memory_space<smem>>
    %13 = vector.broadcast %12 : f32 to vector<14x14xf32>
    %14 = arith.mulf %7, %13 : vector<14x14xf32>
    %15 = arith.addf %3, %14 : vector<14x14xf32>
    %c54 = arith.constant 54 : index
    %16 = memref.load %arg1[%c54] : memref<81xf32, #tpu.memory_space<smem>>
    %17 = vector.broadcast %16 : f32 to vector<14x14xf32>
    %18 = arith.mulf %7, %17 : vector<14x14xf32>
    %19 = arith.addf %5, %18 : vector<14x14xf32>
    %c0_5 = arith.constant 0 : index
    %c0_6 = arith.constant 0 : index
    %c0_7 = arith.constant 0 : index
    %c1_8 = arith.constant 1 : index
    %20 = vector.load %arg0[%c0_5, %c0_6, %c0_7, %c1_8] : memref<2x3x16x16xf32, #tpu.memory_space<vmem>>, vector<1x1x14x14xf32>
    %21 = vector.shape_cast %20 : vector<1x1x14x14xf32> to vector<14x14xf32>
    %c1_9 = arith.constant 1 : index
    %22 = memref.load %arg1[%c1_9] : memref<81xf32, #tpu.memory_space<smem>>
    %23 = vector.broadcast %22 : f32 to vector<14x14xf32>
    %24 = arith.mulf %21, %23 : vector<14x14xf32>
    %25 = arith.addf %11, %24 : vector<14x14xf32>
    %c28 = arith.constant 28 : index
    %26 = memref.load %arg1[%c28] : memref<81xf32, #tpu.memory_space<smem>>
    %27 = vector.broadcast %26 : f32 to vector<14x14xf32>
    %28 = arith.mulf %21, %27 : vector<14x14xf32>
    %29 = arith.addf %15, %28 : vector<14x14xf32>
    %c55 = arith.constant 55 : index
    %30 = memref.load %arg1[%c55] : memref<81xf32, #tpu.memory_space<smem>>
    %31 = vector.broadcast %30 : f32 to vector<14x14xf32>
    %32 = arith.mulf %21, %31 : vector<14x14xf32>
    %33 = arith.addf %19, %32 : vector<14x14xf32>
    %c0_10 = arith.constant 0 : index
    %c0_11 = arith.constant 0 : index
    %c0_12 = arith.constant 0 : index
    %c2_13 = arith.constant 2 : index
    %34 = vector.load %arg0[%c0_10, %c0_11, %c0_12, %c2_13] : memref<2x3x16x16xf32, #tpu.memory_space<vmem>>, vector<1x1x14x14xf32>
    %35 = vector.shape_cast %34 : vector<1x1x14x14xf32> to vector<14x14xf32>
    %c2_14 = arith.constant 2 : index
    %36 = memref.load %arg1[%c2_14] : memref<81xf32, #tpu.memory_space<smem>>
    %37 = vector.broadcast %36 : f32 to vector<14x14xf32>
    %38 = arith.mulf %35, %37 : vector<14x14xf32>
    %39 = arith.addf %25, %38 : vector<14x14xf32>
    %c29 = arith.constant 29 : index
    %40 = memref.load %arg1[%c29] : memref<81xf32, #tpu.memory_space<smem>>
    %41 = vector.broadcast %40 : f32 to vector<14x14xf32>
    %42 = arith.mulf %35, %41 : vector<14x14xf32>
    %43 = arith.addf %29, %42 : vector<14x14xf32>
    %c56 = arith.constant 56 : index
    %44 = memref.load %arg1[%c56] : memref<81xf32, #tpu.memory_space<smem>>
    %45 = vector.broadcast %44 : f32 to vector<14x14xf32>
    %46 = arith.mulf %35, %45 : vector<14x14xf32>
    %47 = arith.addf %33, %46 : vector<14x14xf32>
    %c0_15 = arith.constant 0 : index
    %c0_16 = arith.constant 0 : index
    %c1_17 = arith.constant 1 : index
    %c0_18 = arith.constant 0 : index
    %48 = vector.load %arg0[%c0_15, %c0_16, %c1_17, %c0_18] : memref<2x3x16x16xf32, #tpu.memory_space<vmem>>, vector<1x1x14x14xf32>
    %49 = vector.shape_cast %48 : vector<1x1x14x14xf32> to vector<14x14xf32>
    %c3 = arith.constant 3 : index
    %50 = memref.load %arg1[%c3] : memref<81xf32, #tpu.memory_space<smem>>
    %51 = vector.broadcast %50 : f32 to vector<14x14xf32>
    %52 = arith.mulf %49, %51 : vector<14x14xf32>
    %53 = arith.addf %39, %52 : vector<14x14xf32>
    %c30 = arith.constant 30 : index
    %54 = memref.load %arg1[%c30] : memref<81xf32, #tpu.memory_space<smem>>
    %55 = vector.broadcast %54 : f32 to vector<14x14xf32>
    %56 = arith.mulf %49, %55 : vector<14x14xf32>
    %57 = arith.addf %43, %56 : vector<14x14xf32>
    %c57 = arith.constant 57 : index
    %58 = memref.load %arg1[%c57] : memref<81xf32, #tpu.memory_space<smem>>
    %59 = vector.broadcast %58 : f32 to vector<14x14xf32>
    %60 = arith.mulf %49, %59 : vector<14x14xf32>
    %61 = arith.addf %47, %60 : vector<14x14xf32>
    %c0_19 = arith.constant 0 : index
    %c0_20 = arith.constant 0 : index
    %c1_21 = arith.constant 1 : index
    %c1_22 = arith.constant 1 : index
    %62 = vector.load %arg0[%c0_19, %c0_20, %c1_21, %c1_22] : memref<2x3x16x16xf32, #tpu.memory_space<vmem>>, vector<1x1x14x14xf32>
    %63 = vector.shape_cast %62 : vector<1x1x14x14xf32> to vector<14x14xf32>
    %c4 = arith.constant 4 : index
    %64 = memref.load %arg1[%c4] : memref<81xf32, #tpu.memory_space<smem>>
    %65 = vector.broadcast %64 : f32 to vector<14x14xf32>
    %66 = arith.mulf %63, %65 : vector<14x14xf32>
    %67 = arith.addf %53, %66 : vector<14x14xf32>
    %c31 = arith.constant 31 : index
    %68 = memref.load %arg1[%c31] : memref<81xf32, #tpu.memory_space<smem>>
    %69 = vector.broadcast %68 : f32 to vector<14x14xf32>
    %70 = arith.mulf %63, %69 : vector<14x14xf32>
    %71 = arith.addf %57, %70 : vector<14x14xf32>
    %c58 = arith.constant 58 : index
    %72 = memref.load %arg1[%c58] : memref<81xf32, #tpu.memory_space<smem>>
    %73 = vector.broadcast %72 : f32 to vector<14x14xf32>
    %74 = arith.mulf %63, %73 : vector<14x14xf32>
    %75 = arith.addf %61, %74 : vector<14x14xf32>
    %c0_23 = arith.constant 0 : index
    %c0_24 = arith.constant 0 : index
    %c1_25 = arith.constant 1 : index
    %c2_26 = arith.constant 2 : index
    %76 = vector.load %arg0[%c0_23, %c0_24, %c1_25, %c2_26] : memref<2x3x16x16xf32, #tpu.memory_space<vmem>>, vector<1x1x14x14xf32>
    %77 = vector.shape_cast %76 : vector<1x1x14x14xf32> to vector<14x14xf32>
    %c5 = arith.constant 5 : index
    %78 = memref.load %arg1[%c5] : memref<81xf32, #tpu.memory_space<smem>>
    %79 = vector.broadcast %78 : f32 to vector<14x14xf32>
    %80 = arith.mulf %77, %79 : vector<14x14xf32>
    %81 = arith.addf %67, %80 : vector<14x14xf32>
    %c32 = arith.constant 32 : index
    %82 = memref.load %arg1[%c32] : memref<81xf32, #tpu.memory_space<smem>>
    %83 = vector.broadcast %82 : f32 to vector<14x14xf32>
    %84 = arith.mulf %77, %83 : vector<14x14xf32>
    %85 = arith.addf %71, %84 : vector<14x14xf32>
    %c59 = arith.constant 59 : index
    %86 = memref.load %arg1[%c59] : memref<81xf32, #tpu.memory_space<smem>>
    %87 = vector.broadcast %86 : f32 to vector<14x14xf32>
    %88 = arith.mulf %77, %87 : vector<14x14xf32>
    %89 = arith.addf %75, %88 : vector<14x14xf32>
    %c0_27 = arith.constant 0 : index
    %c0_28 = arith.constant 0 : index
    %c2_29 = arith.constant 2 : index
    %c0_30 = arith.constant 0 : index
    %90 = vector.load %arg0[%c0_27, %c0_28, %c2_29, %c0_30] : memref<2x3x16x16xf32, #tpu.memory_space<vmem>>, vector<1x1x14x14xf32>
    %91 = vector.shape_cast %90 : vector<1x1x14x14xf32> to vector<14x14xf32>
    %c6 = arith.constant 6 : index
    %92 = memref.load %arg1[%c6] : memref<81xf32, #tpu.memory_space<smem>>
    %93 = vector.broadcast %92 : f32 to vector<14x14xf32>
    %94 = arith.mulf %91, %93 : vector<14x14xf32>
    %95 = arith.addf %81, %94 : vector<14x14xf32>
    %c33 = arith.constant 33 : index
    %96 = memref.load %arg1[%c33] : memref<81xf32, #tpu.memory_space<smem>>
    %97 = vector.broadcast %96 : f32 to vector<14x14xf32>
    %98 = arith.mulf %91, %97 : vector<14x14xf32>
    %99 = arith.addf %85, %98 : vector<14x14xf32>
    %c60 = arith.constant 60 : index
    %100 = memref.load %arg1[%c60] : memref<81xf32, #tpu.memory_space<smem>>
    %101 = vector.broadcast %100 : f32 to vector<14x14xf32>
    %102 = arith.mulf %91, %101 : vector<14x14xf32>
    %103 = arith.addf %89, %102 : vector<14x14xf32>
    %c0_31 = arith.constant 0 : index
    %c0_32 = arith.constant 0 : index
    %c2_33 = arith.constant 2 : index
    %c1_34 = arith.constant 1 : index
    %104 = vector.load %arg0[%c0_31, %c0_32, %c2_33, %c1_34] : memref<2x3x16x16xf32, #tpu.memory_space<vmem>>, vector<1x1x14x14xf32>
    %105 = vector.shape_cast %104 : vector<1x1x14x14xf32> to vector<14x14xf32>
    %c7 = arith.constant 7 : index
    %106 = memref.load %arg1[%c7] : memref<81xf32, #tpu.memory_space<smem>>
    %107 = vector.broadcast %106 : f32 to vector<14x14xf32>
    %108 = arith.mulf %105, %107 : vector<14x14xf32>
    %109 = arith.addf %95, %108 : vector<14x14xf32>
    %c34 = arith.constant 34 : index
    %110 = memref.load %arg1[%c34] : memref<81xf32, #tpu.memory_space<smem>>
    %111 = vector.broadcast %110 : f32 to vector<14x14xf32>
    %112 = arith.mulf %105, %111 : vector<14x14xf32>
    %113 = arith.addf %99, %112 : vector<14x14xf32>
    %c61 = arith.constant 61 : index
    %114 = memref.load %arg1[%c61] : memref<81xf32, #tpu.memory_space<smem>>
    %115 = vector.broadcast %114 : f32 to vector<14x14xf32>
    %116 = arith.mulf %105, %115 : vector<14x14xf32>
    %117 = arith.addf %103, %116 : vector<14x14xf32>
    %c0_35 = arith.constant 0 : index
    %c0_36 = arith.constant 0 : index
    %c2_37 = arith.constant 2 : index
    %c2_38 = arith.constant 2 : index
    %118 = vector.load %arg0[%c0_35, %c0_36, %c2_37, %c2_38] : memref<2x3x16x16xf32, #tpu.memory_space<vmem>>, vector<1x1x14x14xf32>
    %119 = vector.shape_cast %118 : vector<1x1x14x14xf32> to vector<14x14xf32>
    %c8 = arith.constant 8 : index
    %120 = memref.load %arg1[%c8] : memref<81xf32, #tpu.memory_space<smem>>
    %121 = vector.broadcast %120 : f32 to vector<14x14xf32>
    %122 = arith.mulf %119, %121 : vector<14x14xf32>
    %123 = arith.addf %109, %122 : vector<14x14xf32>
    %c35 = arith.constant 35 : index
    %124 = memref.load %arg1[%c35] : memref<81xf32, #tpu.memory_space<smem>>
    %125 = vector.broadcast %124 : f32 to vector<14x14xf32>
    %126 = arith.mulf %119, %125 : vector<14x14xf32>
    %127 = arith.addf %113, %126 : vector<14x14xf32>
    %c62 = arith.constant 62 : index
    %128 = memref.load %arg1[%c62] : memref<81xf32, #tpu.memory_space<smem>>
    %129 = vector.broadcast %128 : f32 to vector<14x14xf32>
    %130 = arith.mulf %119, %129 : vector<14x14xf32>
    %131 = arith.addf %117, %130 : vector<14x14xf32>
    %c0_39 = arith.constant 0 : index
    %c1_40 = arith.constant 1 : index
    %c0_41 = arith.constant 0 : index
    %c0_42 = arith.constant 0 : index
    %132 = vector.load %arg0[%c0_39, %c1_40, %c0_41, %c0_42] : memref<2x3x16x16xf32, #tpu.memory_space<vmem>>, vector<1x1x14x14xf32>
    %133 = vector.shape_cast %132 : vector<1x1x14x14xf32> to vector<14x14xf32>
    %c9 = arith.constant 9 : index
    %134 = memref.load %arg1[%c9] : memref<81xf32, #tpu.memory_space<smem>>
    %135 = vector.broadcast %134 : f32 to vector<14x14xf32>
    %136 = arith.mulf %133, %135 : vector<14x14xf32>
    %137 = arith.addf %123, %136 : vector<14x14xf32>
    %c36 = arith.constant 36 : index
    %138 = memref.load %arg1[%c36] : memref<81xf32, #tpu.memory_space<smem>>
    %139 = vector.broadcast %138 : f32 to vector<14x14xf32>
    %140 = arith.mulf %133, %139 : vector<14x14xf32>
    %141 = arith.addf %127, %140 : vector<14x14xf32>
    %c63 = arith.constant 63 : index
    %142 = memref.load %arg1[%c63] : memref<81xf32, #tpu.memory_space<smem>>
    %143 = vector.broadcast %142 : f32 to vector<14x14xf32>
    %144 = arith.mulf %133, %143 : vector<14x14xf32>
    %145 = arith.addf %131, %144 : vector<14x14xf32>
    %c0_43 = arith.constant 0 : index
    %c1_44 = arith.constant 1 : index
    %c0_45 = arith.constant 0 : index
    %c1_46 = arith.constant 1 : index
    %146 = vector.load %arg0[%c0_43, %c1_44, %c0_45, %c1_46] : memref<2x3x16x16xf32, #tpu.memory_space<vmem>>, vector<1x1x14x14xf32>
    %147 = vector.shape_cast %146 : vector<1x1x14x14xf32> to vector<14x14xf32>
    %c10 = arith.constant 10 : index
    %148 = memref.load %arg1[%c10] : memref<81xf32, #tpu.memory_space<smem>>
    %149 = vector.broadcast %148 : f32 to vector<14x14xf32>
    %150 = arith.mulf %147, %149 : vector<14x14xf32>
    %151 = arith.addf %137, %150 : vector<14x14xf32>
    %c37 = arith.constant 37 : index
    %152 = memref.load %arg1[%c37] : memref<81xf32, #tpu.memory_space<smem>>
    %153 = vector.broadcast %152 : f32 to vector<14x14xf32>
    %154 = arith.mulf %147, %153 : vector<14x14xf32>
    %155 = arith.addf %141, %154 : vector<14x14xf32>
    %c64 = arith.constant 64 : index
    %156 = memref.load %arg1[%c64] : memref<81xf32, #tpu.memory_space<smem>>
    %157 = vector.broadcast %156 : f32 to vector<14x14xf32>
    %158 = arith.mulf %147, %157 : vector<14x14xf32>
    %159 = arith.addf %145, %158 : vector<14x14xf32>
    %c0_47 = arith.constant 0 : index
    %c1_48 = arith.constant 1 : index
    %c0_49 = arith.constant 0 : index
    %c2_50 = arith.constant 2 : index
    %160 = vector.load %arg0[%c0_47, %c1_48, %c0_49, %c2_50] : memref<2x3x16x16xf32, #tpu.memory_space<vmem>>, vector<1x1x14x14xf32>
    %161 = vector.shape_cast %160 : vector<1x1x14x14xf32> to vector<14x14xf32>
    %c11 = arith.constant 11 : index
    %162 = memref.load %arg1[%c11] : memref<81xf32, #tpu.memory_space<smem>>
    %163 = vector.broadcast %162 : f32 to vector<14x14xf32>
    %164 = arith.mulf %161, %163 : vector<14x14xf32>
    %165 = arith.addf %151, %164 : vector<14x14xf32>
    %c38 = arith.constant 38 : index
    %166 = memref.load %arg1[%c38] : memref<81xf32, #tpu.memory_space<smem>>
    %167 = vector.broadcast %166 : f32 to vector<14x14xf32>
    %168 = arith.mulf %161, %167 : vector<14x14xf32>
    %169 = arith.addf %155, %168 : vector<14x14xf32>
    %c65 = arith.constant 65 : index
    %170 = memref.load %arg1[%c65] : memref<81xf32, #tpu.memory_space<smem>>
    %171 = vector.broadcast %170 : f32 to vector<14x14xf32>
    %172 = arith.mulf %161, %171 : vector<14x14xf32>
    %173 = arith.addf %159, %172 : vector<14x14xf32>
    %c0_51 = arith.constant 0 : index
    %c1_52 = arith.constant 1 : index
    %c1_53 = arith.constant 1 : index
    %c0_54 = arith.constant 0 : index
    %174 = vector.load %arg0[%c0_51, %c1_52, %c1_53, %c0_54] : memref<2x3x16x16xf32, #tpu.memory_space<vmem>>, vector<1x1x14x14xf32>
    %175 = vector.shape_cast %174 : vector<1x1x14x14xf32> to vector<14x14xf32>
    %c12 = arith.constant 12 : index
    %176 = memref.load %arg1[%c12] : memref<81xf32, #tpu.memory_space<smem>>
    %177 = vector.broadcast %176 : f32 to vector<14x14xf32>
    %178 = arith.mulf %175, %177 : vector<14x14xf32>
    %179 = arith.addf %165, %178 : vector<14x14xf32>
    %c39 = arith.constant 39 : index
    %180 = memref.load %arg1[%c39] : memref<81xf32, #tpu.memory_space<smem>>
    %181 = vector.broadcast %180 : f32 to vector<14x14xf32>
    %182 = arith.mulf %175, %181 : vector<14x14xf32>
    %183 = arith.addf %169, %182 : vector<14x14xf32>
    %c66 = arith.constant 66 : index
    %184 = memref.load %arg1[%c66] : memref<81xf32, #tpu.memory_space<smem>>
    %185 = vector.broadcast %184 : f32 to vector<14x14xf32>
    %186 = arith.mulf %175, %185 : vector<14x14xf32>
    %187 = arith.addf %173, %186 : vector<14x14xf32>
    %c0_55 = arith.constant 0 : index
    %c1_56 = arith.constant 1 : index
    %c1_57 = arith.constant 1 : index
    %c1_58 = arith.constant 1 : index
    %188 = vector.load %arg0[%c0_55, %c1_56, %c1_57, %c1_58] : memref<2x3x16x16xf32, #tpu.memory_space<vmem>>, vector<1x1x14x14xf32>
    %189 = vector.shape_cast %188 : vector<1x1x14x14xf32> to vector<14x14xf32>
    %c13 = arith.constant 13 : index
    %190 = memref.load %arg1[%c13] : memref<81xf32, #tpu.memory_space<smem>>
    %191 = vector.broadcast %190 : f32 to vector<14x14xf32>
    %192 = arith.mulf %189, %191 : vector<14x14xf32>
    %193 = arith.addf %179, %192 : vector<14x14xf32>
    %c40 = arith.constant 40 : index
    %194 = memref.load %arg1[%c40] : memref<81xf32, #tpu.memory_space<smem>>
    %195 = vector.broadcast %194 : f32 to vector<14x14xf32>
    %196 = arith.mulf %189, %195 : vector<14x14xf32>
    %197 = arith.addf %183, %196 : vector<14x14xf32>
    %c67 = arith.constant 67 : index
    %198 = memref.load %arg1[%c67] : memref<81xf32, #tpu.memory_space<smem>>
    %199 = vector.broadcast %198 : f32 to vector<14x14xf32>
    %200 = arith.mulf %189, %199 : vector<14x14xf32>
    %201 = arith.addf %187, %200 : vector<14x14xf32>
    %c0_59 = arith.constant 0 : index
    %c1_60 = arith.constant 1 : index
    %c1_61 = arith.constant 1 : index
    %c2_62 = arith.constant 2 : index
    %202 = vector.load %arg0[%c0_59, %c1_60, %c1_61, %c2_62] : memref<2x3x16x16xf32, #tpu.memory_space<vmem>>, vector<1x1x14x14xf32>
    %203 = vector.shape_cast %202 : vector<1x1x14x14xf32> to vector<14x14xf32>
    %c14 = arith.constant 14 : index
    %204 = memref.load %arg1[%c14] : memref<81xf32, #tpu.memory_space<smem>>
    %205 = vector.broadcast %204 : f32 to vector<14x14xf32>
    %206 = arith.mulf %203, %205 : vector<14x14xf32>
    %207 = arith.addf %193, %206 : vector<14x14xf32>
    %c41 = arith.constant 41 : index
    %208 = memref.load %arg1[%c41] : memref<81xf32, #tpu.memory_space<smem>>
    %209 = vector.broadcast %208 : f32 to vector<14x14xf32>
    %210 = arith.mulf %203, %209 : vector<14x14xf32>
    %211 = arith.addf %197, %210 : vector<14x14xf32>
    %c68 = arith.constant 68 : index
    %212 = memref.load %arg1[%c68] : memref<81xf32, #tpu.memory_space<smem>>
    %213 = vector.broadcast %212 : f32 to vector<14x14xf32>
    %214 = arith.mulf %203, %213 : vector<14x14xf32>
    %215 = arith.addf %201, %214 : vector<14x14xf32>
    %c0_63 = arith.constant 0 : index
    %c1_64 = arith.constant 1 : index
    %c2_65 = arith.constant 2 : index
    %c0_66 = arith.constant 0 : index
    %216 = vector.load %arg0[%c0_63, %c1_64, %c2_65, %c0_66] : memref<2x3x16x16xf32, #tpu.memory_space<vmem>>, vector<1x1x14x14xf32>
    %217 = vector.shape_cast %216 : vector<1x1x14x14xf32> to vector<14x14xf32>
    %c15 = arith.constant 15 : index
    %218 = memref.load %arg1[%c15] : memref<81xf32, #tpu.memory_space<smem>>
    %219 = vector.broadcast %218 : f32 to vector<14x14xf32>
    %220 = arith.mulf %217, %219 : vector<14x14xf32>
    %221 = arith.addf %207, %220 : vector<14x14xf32>
    %c42 = arith.constant 42 : index
    %222 = memref.load %arg1[%c42] : memref<81xf32, #tpu.memory_space<smem>>
    %223 = vector.broadcast %222 : f32 to vector<14x14xf32>
    %224 = arith.mulf %217, %223 : vector<14x14xf32>
    %225 = arith.addf %211, %224 : vector<14x14xf32>
    %c69 = arith.constant 69 : index
    %226 = memref.load %arg1[%c69] : memref<81xf32, #tpu.memory_space<smem>>
    %227 = vector.broadcast %226 : f32 to vector<14x14xf32>
    %228 = arith.mulf %217, %227 : vector<14x14xf32>
    %229 = arith.addf %215, %228 : vector<14x14xf32>
    %c0_67 = arith.constant 0 : index
    %c1_68 = arith.constant 1 : index
    %c2_69 = arith.constant 2 : index
    %c1_70 = arith.constant 1 : index
    %230 = vector.load %arg0[%c0_67, %c1_68, %c2_69, %c1_70] : memref<2x3x16x16xf32, #tpu.memory_space<vmem>>, vector<1x1x14x14xf32>
    %231 = vector.shape_cast %230 : vector<1x1x14x14xf32> to vector<14x14xf32>
    %c16 = arith.constant 16 : index
    %232 = memref.load %arg1[%c16] : memref<81xf32, #tpu.memory_space<smem>>
    %233 = vector.broadcast %232 : f32 to vector<14x14xf32>
    %234 = arith.mulf %231, %233 : vector<14x14xf32>
    %235 = arith.addf %221, %234 : vector<14x14xf32>
    %c43 = arith.constant 43 : index
    %236 = memref.load %arg1[%c43] : memref<81xf32, #tpu.memory_space<smem>>
    %237 = vector.broadcast %236 : f32 to vector<14x14xf32>
    %238 = arith.mulf %231, %237 : vector<14x14xf32>
    %239 = arith.addf %225, %238 : vector<14x14xf32>
    %c70 = arith.constant 70 : index
    %240 = memref.load %arg1[%c70] : memref<81xf32, #tpu.memory_space<smem>>
    %241 = vector.broadcast %240 : f32 to vector<14x14xf32>
    %242 = arith.mulf %231, %241 : vector<14x14xf32>
    %243 = arith.addf %229, %242 : vector<14x14xf32>
    %c0_71 = arith.constant 0 : index
    %c1_72 = arith.constant 1 : index
    %c2_73 = arith.constant 2 : index
    %c2_74 = arith.constant 2 : index
    %244 = vector.load %arg0[%c0_71, %c1_72, %c2_73, %c2_74] : memref<2x3x16x16xf32, #tpu.memory_space<vmem>>, vector<1x1x14x14xf32>
    %245 = vector.shape_cast %244 : vector<1x1x14x14xf32> to vector<14x14xf32>
    %c17 = arith.constant 17 : index
    %246 = memref.load %arg1[%c17] : memref<81xf32, #tpu.memory_space<smem>>
    %247 = vector.broadcast %246 : f32 to vector<14x14xf32>
    %248 = arith.mulf %245, %247 : vector<14x14xf32>
    %249 = arith.addf %235, %248 : vector<14x14xf32>
    %c44 = arith.constant 44 : index
    %250 = memref.load %arg1[%c44] : memref<81xf32, #tpu.memory_space<smem>>
    %251 = vector.broadcast %250 : f32 to vector<14x14xf32>
    %252 = arith.mulf %245, %251 : vector<14x14xf32>
    %253 = arith.addf %239, %252 : vector<14x14xf32>
    %c71 = arith.constant 71 : index
    %254 = memref.load %arg1[%c71] : memref<81xf32, #tpu.memory_space<smem>>
    %255 = vector.broadcast %254 : f32 to vector<14x14xf32>
    %256 = arith.mulf %245, %255 : vector<14x14xf32>
    %257 = arith.addf %243, %256 : vector<14x14xf32>
    %c0_75 = arith.constant 0 : index
    %c2_76 = arith.constant 2 : index
    %c0_77 = arith.constant 0 : index
    %c0_78 = arith.constant 0 : index
    %258 = vector.load %arg0[%c0_75, %c2_76, %c0_77, %c0_78] : memref<2x3x16x16xf32, #tpu.memory_space<vmem>>, vector<1x1x14x14xf32>
    %259 = vector.shape_cast %258 : vector<1x1x14x14xf32> to vector<14x14xf32>
    %c18 = arith.constant 18 : index
    %260 = memref.load %arg1[%c18] : memref<81xf32, #tpu.memory_space<smem>>
    %261 = vector.broadcast %260 : f32 to vector<14x14xf32>
    %262 = arith.mulf %259, %261 : vector<14x14xf32>
    %263 = arith.addf %249, %262 : vector<14x14xf32>
    %c45 = arith.constant 45 : index
    %264 = memref.load %arg1[%c45] : memref<81xf32, #tpu.memory_space<smem>>
    %265 = vector.broadcast %264 : f32 to vector<14x14xf32>
    %266 = arith.mulf %259, %265 : vector<14x14xf32>
    %267 = arith.addf %253, %266 : vector<14x14xf32>
    %c72 = arith.constant 72 : index
    %268 = memref.load %arg1[%c72] : memref<81xf32, #tpu.memory_space<smem>>
    %269 = vector.broadcast %268 : f32 to vector<14x14xf32>
    %270 = arith.mulf %259, %269 : vector<14x14xf32>
    %271 = arith.addf %257, %270 : vector<14x14xf32>
    %c0_79 = arith.constant 0 : index
    %c2_80 = arith.constant 2 : index
    %c0_81 = arith.constant 0 : index
    %c1_82 = arith.constant 1 : index
    %272 = vector.load %arg0[%c0_79, %c2_80, %c0_81, %c1_82] : memref<2x3x16x16xf32, #tpu.memory_space<vmem>>, vector<1x1x14x14xf32>
    %273 = vector.shape_cast %272 : vector<1x1x14x14xf32> to vector<14x14xf32>
    %c19 = arith.constant 19 : index
    %274 = memref.load %arg1[%c19] : memref<81xf32, #tpu.memory_space<smem>>
    %275 = vector.broadcast %274 : f32 to vector<14x14xf32>
    %276 = arith.mulf %273, %275 : vector<14x14xf32>
    %277 = arith.addf %263, %276 : vector<14x14xf32>
    %c46 = arith.constant 46 : index
    %278 = memref.load %arg1[%c46] : memref<81xf32, #tpu.memory_space<smem>>
    %279 = vector.broadcast %278 : f32 to vector<14x14xf32>
    %280 = arith.mulf %273, %279 : vector<14x14xf32>
    %281 = arith.addf %267, %280 : vector<14x14xf32>
    %c73 = arith.constant 73 : index
    %282 = memref.load %arg1[%c73] : memref<81xf32, #tpu.memory_space<smem>>
    %283 = vector.broadcast %282 : f32 to vector<14x14xf32>
    %284 = arith.mulf %273, %283 : vector<14x14xf32>
    %285 = arith.addf %271, %284 : vector<14x14xf32>
    %c0_83 = arith.constant 0 : index
    %c2_84 = arith.constant 2 : index
    %c0_85 = arith.constant 0 : index
    %c2_86 = arith.constant 2 : index
    %286 = vector.load %arg0[%c0_83, %c2_84, %c0_85, %c2_86] : memref<2x3x16x16xf32, #tpu.memory_space<vmem>>, vector<1x1x14x14xf32>
    %287 = vector.shape_cast %286 : vector<1x1x14x14xf32> to vector<14x14xf32>
    %c20 = arith.constant 20 : index
    %288 = memref.load %arg1[%c20] : memref<81xf32, #tpu.memory_space<smem>>
    %289 = vector.broadcast %288 : f32 to vector<14x14xf32>
    %290 = arith.mulf %287, %289 : vector<14x14xf32>
    %291 = arith.addf %277, %290 : vector<14x14xf32>
    %c47 = arith.constant 47 : index
    %292 = memref.load %arg1[%c47] : memref<81xf32, #tpu.memory_space<smem>>
    %293 = vector.broadcast %292 : f32 to vector<14x14xf32>
    %294 = arith.mulf %287, %293 : vector<14x14xf32>
    %295 = arith.addf %281, %294 : vector<14x14xf32>
    %c74 = arith.constant 74 : index
    %296 = memref.load %arg1[%c74] : memref<81xf32, #tpu.memory_space<smem>>
    %297 = vector.broadcast %296 : f32 to vector<14x14xf32>
    %298 = arith.mulf %287, %297 : vector<14x14xf32>
    %299 = arith.addf %285, %298 : vector<14x14xf32>
    %c0_87 = arith.constant 0 : index
    %c2_88 = arith.constant 2 : index
    %c1_89 = arith.constant 1 : index
    %c0_90 = arith.constant 0 : index
    %300 = vector.load %arg0[%c0_87, %c2_88, %c1_89, %c0_90] : memref<2x3x16x16xf32, #tpu.memory_space<vmem>>, vector<1x1x14x14xf32>
    %301 = vector.shape_cast %300 : vector<1x1x14x14xf32> to vector<14x14xf32>
    %c21 = arith.constant 21 : index
    %302 = memref.load %arg1[%c21] : memref<81xf32, #tpu.memory_space<smem>>
    %303 = vector.broadcast %302 : f32 to vector<14x14xf32>
    %304 = arith.mulf %301, %303 : vector<14x14xf32>
    %305 = arith.addf %291, %304 : vector<14x14xf32>
    %c48 = arith.constant 48 : index
    %306 = memref.load %arg1[%c48] : memref<81xf32, #tpu.memory_space<smem>>
    %307 = vector.broadcast %306 : f32 to vector<14x14xf32>
    %308 = arith.mulf %301, %307 : vector<14x14xf32>
    %309 = arith.addf %295, %308 : vector<14x14xf32>
    %c75 = arith.constant 75 : index
    %310 = memref.load %arg1[%c75] : memref<81xf32, #tpu.memory_space<smem>>
    %311 = vector.broadcast %310 : f32 to vector<14x14xf32>
    %312 = arith.mulf %301, %311 : vector<14x14xf32>
    %313 = arith.addf %299, %312 : vector<14x14xf32>
    %c0_91 = arith.constant 0 : index
    %c2_92 = arith.constant 2 : index
    %c1_93 = arith.constant 1 : index
    %c1_94 = arith.constant 1 : index
    %314 = vector.load %arg0[%c0_91, %c2_92, %c1_93, %c1_94] : memref<2x3x16x16xf32, #tpu.memory_space<vmem>>, vector<1x1x14x14xf32>
    %315 = vector.shape_cast %314 : vector<1x1x14x14xf32> to vector<14x14xf32>
    %c22 = arith.constant 22 : index
    %316 = memref.load %arg1[%c22] : memref<81xf32, #tpu.memory_space<smem>>
    %317 = vector.broadcast %316 : f32 to vector<14x14xf32>
    %318 = arith.mulf %315, %317 : vector<14x14xf32>
    %319 = arith.addf %305, %318 : vector<14x14xf32>
    %c49 = arith.constant 49 : index
    %320 = memref.load %arg1[%c49] : memref<81xf32, #tpu.memory_space<smem>>
    %321 = vector.broadcast %320 : f32 to vector<14x14xf32>
    %322 = arith.mulf %315, %321 : vector<14x14xf32>
    %323 = arith.addf %309, %322 : vector<14x14xf32>
    %c76 = arith.constant 76 : index
    %324 = memref.load %arg1[%c76] : memref<81xf32, #tpu.memory_space<smem>>
    %325 = vector.broadcast %324 : f32 to vector<14x14xf32>
    %326 = arith.mulf %315, %325 : vector<14x14xf32>
    %327 = arith.addf %313, %326 : vector<14x14xf32>
    %c0_95 = arith.constant 0 : index
    %c2_96 = arith.constant 2 : index
    %c1_97 = arith.constant 1 : index
    %c2_98 = arith.constant 2 : index
    %328 = vector.load %arg0[%c0_95, %c2_96, %c1_97, %c2_98] : memref<2x3x16x16xf32, #tpu.memory_space<vmem>>, vector<1x1x14x14xf32>
    %329 = vector.shape_cast %328 : vector<1x1x14x14xf32> to vector<14x14xf32>
    %c23 = arith.constant 23 : index
    %330 = memref.load %arg1[%c23] : memref<81xf32, #tpu.memory_space<smem>>
    %331 = vector.broadcast %330 : f32 to vector<14x14xf32>
    %332 = arith.mulf %329, %331 : vector<14x14xf32>
    %333 = arith.addf %319, %332 : vector<14x14xf32>
    %c50 = arith.constant 50 : index
    %334 = memref.load %arg1[%c50] : memref<81xf32, #tpu.memory_space<smem>>
    %335 = vector.broadcast %334 : f32 to vector<14x14xf32>
    %336 = arith.mulf %329, %335 : vector<14x14xf32>
    %337 = arith.addf %323, %336 : vector<14x14xf32>
    %c77 = arith.constant 77 : index
    %338 = memref.load %arg1[%c77] : memref<81xf32, #tpu.memory_space<smem>>
    %339 = vector.broadcast %338 : f32 to vector<14x14xf32>
    %340 = arith.mulf %329, %339 : vector<14x14xf32>
    %341 = arith.addf %327, %340 : vector<14x14xf32>
    %c0_99 = arith.constant 0 : index
    %c2_100 = arith.constant 2 : index
    %c2_101 = arith.constant 2 : index
    %c0_102 = arith.constant 0 : index
    %342 = vector.load %arg0[%c0_99, %c2_100, %c2_101, %c0_102] : memref<2x3x16x16xf32, #tpu.memory_space<vmem>>, vector<1x1x14x14xf32>
    %343 = vector.shape_cast %342 : vector<1x1x14x14xf32> to vector<14x14xf32>
    %c24 = arith.constant 24 : index
    %344 = memref.load %arg1[%c24] : memref<81xf32, #tpu.memory_space<smem>>
    %345 = vector.broadcast %344 : f32 to vector<14x14xf32>
    %346 = arith.mulf %343, %345 : vector<14x14xf32>
    %347 = arith.addf %333, %346 : vector<14x14xf32>
    %c51 = arith.constant 51 : index
    %348 = memref.load %arg1[%c51] : memref<81xf32, #tpu.memory_space<smem>>
    %349 = vector.broadcast %348 : f32 to vector<14x14xf32>
    %350 = arith.mulf %343, %349 : vector<14x14xf32>
    %351 = arith.addf %337, %350 : vector<14x14xf32>
    %c78 = arith.constant 78 : index
    %352 = memref.load %arg1[%c78] : memref<81xf32, #tpu.memory_space<smem>>
    %353 = vector.broadcast %352 : f32 to vector<14x14xf32>
    %354 = arith.mulf %343, %353 : vector<14x14xf32>
    %355 = arith.addf %341, %354 : vector<14x14xf32>
    %c0_103 = arith.constant 0 : index
    %c2_104 = arith.constant 2 : index
    %c2_105 = arith.constant 2 : index
    %c1_106 = arith.constant 1 : index
    %356 = vector.load %arg0[%c0_103, %c2_104, %c2_105, %c1_106] : memref<2x3x16x16xf32, #tpu.memory_space<vmem>>, vector<1x1x14x14xf32>
    %357 = vector.shape_cast %356 : vector<1x1x14x14xf32> to vector<14x14xf32>
    %c25 = arith.constant 25 : index
    %358 = memref.load %arg1[%c25] : memref<81xf32, #tpu.memory_space<smem>>
    %359 = vector.broadcast %358 : f32 to vector<14x14xf32>
    %360 = arith.mulf %357, %359 : vector<14x14xf32>
    %361 = arith.addf %347, %360 : vector<14x14xf32>
    %c52 = arith.constant 52 : index
    %362 = memref.load %arg1[%c52] : memref<81xf32, #tpu.memory_space<smem>>
    %363 = vector.broadcast %362 : f32 to vector<14x14xf32>
    %364 = arith.mulf %357, %363 : vector<14x14xf32>
    %365 = arith.addf %351, %364 : vector<14x14xf32>
    %c79 = arith.constant 79 : index
    %366 = memref.load %arg1[%c79] : memref<81xf32, #tpu.memory_space<smem>>
    %367 = vector.broadcast %366 : f32 to vector<14x14xf32>
    %368 = arith.mulf %357, %367 : vector<14x14xf32>
    %369 = arith.addf %355, %368 : vector<14x14xf32>
    %c0_107 = arith.constant 0 : index
    %c2_108 = arith.constant 2 : index
    %c2_109 = arith.constant 2 : index
    %c2_110 = arith.constant 2 : index
    %370 = vector.load %arg0[%c0_107, %c2_108, %c2_109, %c2_110] : memref<2x3x16x16xf32, #tpu.memory_space<vmem>>, vector<1x1x14x14xf32>
    %371 = vector.shape_cast %370 : vector<1x1x14x14xf32> to vector<14x14xf32>
    %c26 = arith.constant 26 : index
    %372 = memref.load %arg1[%c26] : memref<81xf32, #tpu.memory_space<smem>>
    %373 = vector.broadcast %372 : f32 to vector<14x14xf32>
    %374 = arith.mulf %371, %373 : vector<14x14xf32>
    %375 = arith.addf %361, %374 : vector<14x14xf32>
    %c53 = arith.constant 53 : index
    %376 = memref.load %arg1[%c53] : memref<81xf32, #tpu.memory_space<smem>>
    %377 = vector.broadcast %376 : f32 to vector<14x14xf32>
    %378 = arith.mulf %371, %377 : vector<14x14xf32>
    %379 = arith.addf %365, %378 : vector<14x14xf32>
    %c80 = arith.constant 80 : index
    %380 = memref.load %arg1[%c80] : memref<81xf32, #tpu.memory_space<smem>>
    %381 = vector.broadcast %380 : f32 to vector<14x14xf32>
    %382 = arith.mulf %371, %381 : vector<14x14xf32>
    %383 = arith.addf %369, %382 : vector<14x14xf32>
    %c0_111 = arith.constant 0 : index
    %c0_112 = arith.constant 0 : index
    %c0_113 = arith.constant 0 : index
    %c0_114 = arith.constant 0 : index
    %384 = vector.load %arg6[%c0_111, %c0_112, %c0_113, %c0_114] : memref<2x3x14x14xf32, #tpu.memory_space<vmem>>, vector<1x1x14x14xf32>
    %385 = vector.shape_cast %384 : vector<1x1x14x14xf32> to vector<14x14xf32>
    %386 = vector.shape_cast %375 : vector<14x14xf32> to vector<1x1x14x14xf32>
    tpu.vector_store %arg6[%c0_111, %c0_112, %c0_113, %c0_114], %386 {strides = array<i32>} : memref<2x3x14x14xf32, #tpu.memory_space<vmem>>, vector<1x1x14x14xf32>,
    %c0_115 = arith.constant 0 : index
    %c1_116 = arith.constant 1 : index
    %c0_117 = arith.constant 0 : index
    %c0_118 = arith.constant 0 : index
    %387 = vector.load %arg6[%c0_115, %c1_116, %c0_117, %c0_118] : memref<2x3x14x14xf32, #tpu.memory_space<vmem>>, vector<1x1x14x14xf32>
    %388 = vector.shape_cast %387 : vector<1x1x14x14xf32> to vector<14x14xf32>
    %389 = vector.shape_cast %379 : vector<14x14xf32> to vector<1x1x14x14xf32>
    tpu.vector_store %arg6[%c0_115, %c1_116, %c0_117, %c0_118], %389 {strides = array<i32>} : memref<2x3x14x14xf32, #tpu.memory_space<vmem>>, vector<1x1x14x14xf32>,
    %c0_119 = arith.constant 0 : index
    %c2_120 = arith.constant 2 : index
    %c0_121 = arith.constant 0 : index
    %c0_122 = arith.constant 0 : index
    %390 = vector.load %arg6[%c0_119, %c2_120, %c0_121, %c0_122] : memref<2x3x14x14xf32, #tpu.memory_space<vmem>>, vector<1x1x14x14xf32>
    %391 = vector.shape_cast %390 : vector<1x1x14x14xf32> to vector<14x14xf32>
    %392 = vector.shape_cast %383 : vector<14x14xf32> to vector<1x1x14x14xf32>
    tpu.vector_store %arg6[%c0_119, %c2_120, %c0_121, %c0_122], %392 {strides = array<i32>} : memref<2x3x14x14xf32, #tpu.memory_space<vmem>>, vector<1x1x14x14xf32>,
    %c0_123 = arith.constant 0 : index
    %393 = memref.load %arg4[%c0_123] : memref<3xf32, #tpu.memory_space<smem>>
    %394 = vector.broadcast %393 : f32 to vector<12x12xf32>
    %c1_124 = arith.constant 1 : index
    %395 = memref.load %arg4[%c1_124] : memref<3xf32, #tpu.memory_space<smem>>
    %396 = vector.broadcast %395 : f32 to vector<12x12xf32>
    %c2_125 = arith.constant 2 : index
    %397 = memref.load %arg4[%c2_125] : memref<3xf32, #tpu.memory_space<smem>>
    %398 = vector.broadcast %397 : f32 to vector<12x12xf32>
    %c0_126 = arith.constant 0 : index
    %c0_127 = arith.constant 0 : index
    %c0_128 = arith.constant 0 : index
    %c0_129 = arith.constant 0 : index
    %399 = vector.load %arg6[%c0_126, %c0_127, %c0_128, %c0_129] : memref<2x3x14x14xf32, #tpu.memory_space<vmem>>, vector<1x1x12x12xf32>
    %400 = vector.shape_cast %399 : vector<1x1x12x12xf32> to vector<12x12xf32>
    %c0_130 = arith.constant 0 : index
    %401 = memref.load %arg3[%c0_130] : memref<81xf32, #tpu.memory_space<smem>>
    %402 = vector.broadcast %401 : f32 to vector<12x12xf32>
    %403 = arith.mulf %400, %402 : vector<12x12xf32>
    %404 = arith.addf %394, %403 : vector<12x12xf32>
    %c27_131 = arith.constant 27 : index
    %405 = memref.load %arg3[%c27_131] : memref<81xf32, #tpu.memory_space<smem>>
    %406 = vector.broadcast %405 : f32 to vector<12x12xf32>
    %407 = arith.mulf %400, %406 : vector<12x12xf32>
    %408 = arith.addf %396, %407 : vector<12x12xf32>
    %c54_132 = arith.constant 54 : index
    %409 = memref.load %arg3[%c54_132] : memref<81xf32, #tpu.memory_space<smem>>
    %410 = vector.broadcast %409 : f32 to vector<12x12xf32>
    %411 = arith.mulf %400, %410 : vector<12x12xf32>
    %412 = arith.addf %398, %411 : vector<12x12xf32>
    %c0_133 = arith.constant 0 : index
    %c0_134 = arith.constant 0 : index
    %c0_135 = arith.constant 0 : index
    %c1_136 = arith.constant 1 : index
    %413 = vector.load %arg6[%c0_133, %c0_134, %c0_135, %c1_136] : memref<2x3x14x14xf32, #tpu.memory_space<vmem>>, vector<1x1x12x12xf32>
    %414 = vector.shape_cast %413 : vector<1x1x12x12xf32> to vector<12x12xf32>
    %c1_137 = arith.constant 1 : index
    %415 = memref.load %arg3[%c1_137] : memref<81xf32, #tpu.memory_space<smem>>
    %416 = vector.broadcast %415 : f32 to vector<12x12xf32>
    %417 = arith.mulf %414, %416 : vector<12x12xf32>
    %418 = arith.addf %404, %417 : vector<12x12xf32>
    %c28_138 = arith.constant 28 : index
    %419 = memref.load %arg3[%c28_138] : memref<81xf32, #tpu.memory_space<smem>>
    %420 = vector.broadcast %419 : f32 to vector<12x12xf32>
    %421 = arith.mulf %414, %420 : vector<12x12xf32>
    %422 = arith.addf %408, %421 : vector<12x12xf32>
    %c55_139 = arith.constant 55 : index
    %423 = memref.load %arg3[%c55_139] : memref<81xf32, #tpu.memory_space<smem>>
    %424 = vector.broadcast %423 : f32 to vector<12x12xf32>
    %425 = arith.mulf %414, %424 : vector<12x12xf32>
    %426 = arith.addf %412, %425 : vector<12x12xf32>
    %c0_140 = arith.constant 0 : index
    %c0_141 = arith.constant 0 : index
    %c0_142 = arith.constant 0 : index
    %c2_143 = arith.constant 2 : index
    %427 = vector.load %arg6[%c0_140, %c0_141, %c0_142, %c2_143] : memref<2x3x14x14xf32, #tpu.memory_space<vmem>>, vector<1x1x12x12xf32>
    %428 = vector.shape_cast %427 : vector<1x1x12x12xf32> to vector<12x12xf32>
    %c2_144 = arith.constant 2 : index
    %429 = memref.load %arg3[%c2_144] : memref<81xf32, #tpu.memory_space<smem>>
    %430 = vector.broadcast %429 : f32 to vector<12x12xf32>
    %431 = arith.mulf %428, %430 : vector<12x12xf32>
    %432 = arith.addf %418, %431 : vector<12x12xf32>
    %c29_145 = arith.constant 29 : index
    %433 = memref.load %arg3[%c29_145] : memref<81xf32, #tpu.memory_space<smem>>
    %434 = vector.broadcast %433 : f32 to vector<12x12xf32>
    %435 = arith.mulf %428, %434 : vector<12x12xf32>
    %436 = arith.addf %422, %435 : vector<12x12xf32>
    %c56_146 = arith.constant 56 : index
    %437 = memref.load %arg3[%c56_146] : memref<81xf32, #tpu.memory_space<smem>>
    %438 = vector.broadcast %437 : f32 to vector<12x12xf32>
    %439 = arith.mulf %428, %438 : vector<12x12xf32>
    %440 = arith.addf %426, %439 : vector<12x12xf32>
    %c0_147 = arith.constant 0 : index
    %c0_148 = arith.constant 0 : index
    %c1_149 = arith.constant 1 : index
    %c0_150 = arith.constant 0 : index
    %441 = vector.load %arg6[%c0_147, %c0_148, %c1_149, %c0_150] : memref<2x3x14x14xf32, #tpu.memory_space<vmem>>, vector<1x1x12x12xf32>
    %442 = vector.shape_cast %441 : vector<1x1x12x12xf32> to vector<12x12xf32>
    %c3_151 = arith.constant 3 : index
    %443 = memref.load %arg3[%c3_151] : memref<81xf32, #tpu.memory_space<smem>>
    %444 = vector.broadcast %443 : f32 to vector<12x12xf32>
    %445 = arith.mulf %442, %444 : vector<12x12xf32>
    %446 = arith.addf %432, %445 : vector<12x12xf32>
    %c30_152 = arith.constant 30 : index
    %447 = memref.load %arg3[%c30_152] : memref<81xf32, #tpu.memory_space<smem>>
    %448 = vector.broadcast %447 : f32 to vector<12x12xf32>
    %449 = arith.mulf %442, %448 : vector<12x12xf32>
    %450 = arith.addf %436, %449 : vector<12x12xf32>
    %c57_153 = arith.constant 57 : index
    %451 = memref.load %arg3[%c57_153] : memref<81xf32, #tpu.memory_space<smem>>
    %452 = vector.broadcast %451 : f32 to vector<12x12xf32>
    %453 = arith.mulf %442, %452 : vector<12x12xf32>
    %454 = arith.addf %440, %453 : vector<12x12xf32>
    %c0_154 = arith.constant 0 : index
    %c0_155 = arith.constant 0 : index
    %c1_156 = arith.constant 1 : index
    %c1_157 = arith.constant 1 : index
    %455 = vector.load %arg6[%c0_154, %c0_155, %c1_156, %c1_157] : memref<2x3x14x14xf32, #tpu.memory_space<vmem>>, vector<1x1x12x12xf32>
    %456 = vector.shape_cast %455 : vector<1x1x12x12xf32> to vector<12x12xf32>
    %c4_158 = arith.constant 4 : index
    %457 = memref.load %arg3[%c4_158] : memref<81xf32, #tpu.memory_space<smem>>
    %458 = vector.broadcast %457 : f32 to vector<12x12xf32>
    %459 = arith.mulf %456, %458 : vector<12x12xf32>
    %460 = arith.addf %446, %459 : vector<12x12xf32>
    %c31_159 = arith.constant 31 : index
    %461 = memref.load %arg3[%c31_159] : memref<81xf32, #tpu.memory_space<smem>>
    %462 = vector.broadcast %461 : f32 to vector<12x12xf32>
    %463 = arith.mulf %456, %462 : vector<12x12xf32>
    %464 = arith.addf %450, %463 : vector<12x12xf32>
    %c58_160 = arith.constant 58 : index
    %465 = memref.load %arg3[%c58_160] : memref<81xf32, #tpu.memory_space<smem>>
    %466 = vector.broadcast %465 : f32 to vector<12x12xf32>
    %467 = arith.mulf %456, %466 : vector<12x12xf32>
    %468 = arith.addf %454, %467 : vector<12x12xf32>
    %c0_161 = arith.constant 0 : index
    %c0_162 = arith.constant 0 : index
    %c1_163 = arith.constant 1 : index
    %c2_164 = arith.constant 2 : index
    %469 = vector.load %arg6[%c0_161, %c0_162, %c1_163, %c2_164] : memref<2x3x14x14xf32, #tpu.memory_space<vmem>>, vector<1x1x12x12xf32>
    %470 = vector.shape_cast %469 : vector<1x1x12x12xf32> to vector<12x12xf32>
    %c5_165 = arith.constant 5 : index
    %471 = memref.load %arg3[%c5_165] : memref<81xf32, #tpu.memory_space<smem>>
    %472 = vector.broadcast %471 : f32 to vector<12x12xf32>
    %473 = arith.mulf %470, %472 : vector<12x12xf32>
    %474 = arith.addf %460, %473 : vector<12x12xf32>
    %c32_166 = arith.constant 32 : index
    %475 = memref.load %arg3[%c32_166] : memref<81xf32, #tpu.memory_space<smem>>
    %476 = vector.broadcast %475 : f32 to vector<12x12xf32>
    %477 = arith.mulf %470, %476 : vector<12x12xf32>
    %478 = arith.addf %464, %477 : vector<12x12xf32>
    %c59_167 = arith.constant 59 : index
    %479 = memref.load %arg3[%c59_167] : memref<81xf32, #tpu.memory_space<smem>>
    %480 = vector.broadcast %479 : f32 to vector<12x12xf32>
    %481 = arith.mulf %470, %480 : vector<12x12xf32>
    %482 = arith.addf %468, %481 : vector<12x12xf32>
    %c0_168 = arith.constant 0 : index
    %c0_169 = arith.constant 0 : index
    %c2_170 = arith.constant 2 : index
    %c0_171 = arith.constant 0 : index
    %483 = vector.load %arg6[%c0_168, %c0_169, %c2_170, %c0_171] : memref<2x3x14x14xf32, #tpu.memory_space<vmem>>, vector<1x1x12x12xf32>
    %484 = vector.shape_cast %483 : vector<1x1x12x12xf32> to vector<12x12xf32>
    %c6_172 = arith.constant 6 : index
    %485 = memref.load %arg3[%c6_172] : memref<81xf32, #tpu.memory_space<smem>>
    %486 = vector.broadcast %485 : f32 to vector<12x12xf32>
    %487 = arith.mulf %484, %486 : vector<12x12xf32>
    %488 = arith.addf %474, %487 : vector<12x12xf32>
    %c33_173 = arith.constant 33 : index
    %489 = memref.load %arg3[%c33_173] : memref<81xf32, #tpu.memory_space<smem>>
    %490 = vector.broadcast %489 : f32 to vector<12x12xf32>
    %491 = arith.mulf %484, %490 : vector<12x12xf32>
    %492 = arith.addf %478, %491 : vector<12x12xf32>
    %c60_174 = arith.constant 60 : index
    %493 = memref.load %arg3[%c60_174] : memref<81xf32, #tpu.memory_space<smem>>
    %494 = vector.broadcast %493 : f32 to vector<12x12xf32>
    %495 = arith.mulf %484, %494 : vector<12x12xf32>
    %496 = arith.addf %482, %495 : vector<12x12xf32>
    %c0_175 = arith.constant 0 : index
    %c0_176 = arith.constant 0 : index
    %c2_177 = arith.constant 2 : index
    %c1_178 = arith.constant 1 : index
    %497 = vector.load %arg6[%c0_175, %c0_176, %c2_177, %c1_178] : memref<2x3x14x14xf32, #tpu.memory_space<vmem>>, vector<1x1x12x12xf32>
    %498 = vector.shape_cast %497 : vector<1x1x12x12xf32> to vector<12x12xf32>
    %c7_179 = arith.constant 7 : index
    %499 = memref.load %arg3[%c7_179] : memref<81xf32, #tpu.memory_space<smem>>
    %500 = vector.broadcast %499 : f32 to vector<12x12xf32>
    %501 = arith.mulf %498, %500 : vector<12x12xf32>
    %502 = arith.addf %488, %501 : vector<12x12xf32>
    %c34_180 = arith.constant 34 : index
    %503 = memref.load %arg3[%c34_180] : memref<81xf32, #tpu.memory_space<smem>>
    %504 = vector.broadcast %503 : f32 to vector<12x12xf32>
    %505 = arith.mulf %498, %504 : vector<12x12xf32>
    %506 = arith.addf %492, %505 : vector<12x12xf32>
    %c61_181 = arith.constant 61 : index
    %507 = memref.load %arg3[%c61_181] : memref<81xf32, #tpu.memory_space<smem>>
    %508 = vector.broadcast %507 : f32 to vector<12x12xf32>
    %509 = arith.mulf %498, %508 : vector<12x12xf32>
    %510 = arith.addf %496, %509 : vector<12x12xf32>
    %c0_182 = arith.constant 0 : index
    %c0_183 = arith.constant 0 : index
    %c2_184 = arith.constant 2 : index
    %c2_185 = arith.constant 2 : index
    %511 = vector.load %arg6[%c0_182, %c0_183, %c2_184, %c2_185] : memref<2x3x14x14xf32, #tpu.memory_space<vmem>>, vector<1x1x12x12xf32>
    %512 = vector.shape_cast %511 : vector<1x1x12x12xf32> to vector<12x12xf32>
    %c8_186 = arith.constant 8 : index
    %513 = memref.load %arg3[%c8_186] : memref<81xf32, #tpu.memory_space<smem>>
    %514 = vector.broadcast %513 : f32 to vector<12x12xf32>
    %515 = arith.mulf %512, %514 : vector<12x12xf32>
    %516 = arith.addf %502, %515 : vector<12x12xf32>
    %c35_187 = arith.constant 35 : index
    %517 = memref.load %arg3[%c35_187] : memref<81xf32, #tpu.memory_space<smem>>
    %518 = vector.broadcast %517 : f32 to vector<12x12xf32>
    %519 = arith.mulf %512, %518 : vector<12x12xf32>
    %520 = arith.addf %506, %519 : vector<12x12xf32>
    %c62_188 = arith.constant 62 : index
    %521 = memref.load %arg3[%c62_188] : memref<81xf32, #tpu.memory_space<smem>>
    %522 = vector.broadcast %521 : f32 to vector<12x12xf32>
    %523 = arith.mulf %512, %522 : vector<12x12xf32>
    %524 = arith.addf %510, %523 : vector<12x12xf32>
    %c0_189 = arith.constant 0 : index
    %c1_190 = arith.constant 1 : index
    %c0_191 = arith.constant 0 : index
    %c0_192 = arith.constant 0 : index
    %525 = vector.load %arg6[%c0_189, %c1_190, %c0_191, %c0_192] : memref<2x3x14x14xf32, #tpu.memory_space<vmem>>, vector<1x1x12x12xf32>
    %526 = vector.shape_cast %525 : vector<1x1x12x12xf32> to vector<12x12xf32>
    %c9_193 = arith.constant 9 : index
    %527 = memref.load %arg3[%c9_193] : memref<81xf32, #tpu.memory_space<smem>>
    %528 = vector.broadcast %527 : f32 to vector<12x12xf32>
    %529 = arith.mulf %526, %528 : vector<12x12xf32>
    %530 = arith.addf %516, %529 : vector<12x12xf32>
    %c36_194 = arith.constant 36 : index
    %531 = memref.load %arg3[%c36_194] : memref<81xf32, #tpu.memory_space<smem>>
    %532 = vector.broadcast %531 : f32 to vector<12x12xf32>
    %533 = arith.mulf %526, %532 : vector<12x12xf32>
    %534 = arith.addf %520, %533 : vector<12x12xf32>
    %c63_195 = arith.constant 63 : index
    %535 = memref.load %arg3[%c63_195] : memref<81xf32, #tpu.memory_space<smem>>
    %536 = vector.broadcast %535 : f32 to vector<12x12xf32>
    %537 = arith.mulf %526, %536 : vector<12x12xf32>
    %538 = arith.addf %524, %537 : vector<12x12xf32>
    %c0_196 = arith.constant 0 : index
    %c1_197 = arith.constant 1 : index
    %c0_198 = arith.constant 0 : index
    %c1_199 = arith.constant 1 : index
    %539 = vector.load %arg6[%c0_196, %c1_197, %c0_198, %c1_199] : memref<2x3x14x14xf32, #tpu.memory_space<vmem>>, vector<1x1x12x12xf32>
    %540 = vector.shape_cast %539 : vector<1x1x12x12xf32> to vector<12x12xf32>
    %c10_200 = arith.constant 10 : index
    %541 = memref.load %arg3[%c10_200] : memref<81xf32, #tpu.memory_space<smem>>
    %542 = vector.broadcast %541 : f32 to vector<12x12xf32>
    %543 = arith.mulf %540, %542 : vector<12x12xf32>
    %544 = arith.addf %530, %543 : vector<12x12xf32>
    %c37_201 = arith.constant 37 : index
    %545 = memref.load %arg3[%c37_201] : memref<81xf32, #tpu.memory_space<smem>>
    %546 = vector.broadcast %545 : f32 to vector<12x12xf32>
    %547 = arith.mulf %540, %546 : vector<12x12xf32>
    %548 = arith.addf %534, %547 : vector<12x12xf32>
    %c64_202 = arith.constant 64 : index
    %549 = memref.load %arg3[%c64_202] : memref<81xf32, #tpu.memory_space<smem>>
    %550 = vector.broadcast %549 : f32 to vector<12x12xf32>
    %551 = arith.mulf %540, %550 : vector<12x12xf32>
    %552 = arith.addf %538, %551 : vector<12x12xf32>
    %c0_203 = arith.constant 0 : index
    %c1_204 = arith.constant 1 : index
    %c0_205 = arith.constant 0 : index
    %c2_206 = arith.constant 2 : index
    %553 = vector.load %arg6[%c0_203, %c1_204, %c0_205, %c2_206] : memref<2x3x14x14xf32, #tpu.memory_space<vmem>>, vector<1x1x12x12xf32>
    %554 = vector.shape_cast %553 : vector<1x1x12x12xf32> to vector<12x12xf32>
    %c11_207 = arith.constant 11 : index
    %555 = memref.load %arg3[%c11_207] : memref<81xf32, #tpu.memory_space<smem>>
    %556 = vector.broadcast %555 : f32 to vector<12x12xf32>
    %557 = arith.mulf %554, %556 : vector<12x12xf32>
    %558 = arith.addf %544, %557 : vector<12x12xf32>
    %c38_208 = arith.constant 38 : index
    %559 = memref.load %arg3[%c38_208] : memref<81xf32, #tpu.memory_space<smem>>
    %560 = vector.broadcast %559 : f32 to vector<12x12xf32>
    %561 = arith.mulf %554, %560 : vector<12x12xf32>
    %562 = arith.addf %548, %561 : vector<12x12xf32>
    %c65_209 = arith.constant 65 : index
    %563 = memref.load %arg3[%c65_209] : memref<81xf32, #tpu.memory_space<smem>>
    %564 = vector.broadcast %563 : f32 to vector<12x12xf32>
    %565 = arith.mulf %554, %564 : vector<12x12xf32>
    %566 = arith.addf %552, %565 : vector<12x12xf32>
    %c0_210 = arith.constant 0 : index
    %c1_211 = arith.constant 1 : index
    %c1_212 = arith.constant 1 : index
    %c0_213 = arith.constant 0 : index
    %567 = vector.load %arg6[%c0_210, %c1_211, %c1_212, %c0_213] : memref<2x3x14x14xf32, #tpu.memory_space<vmem>>, vector<1x1x12x12xf32>
    %568 = vector.shape_cast %567 : vector<1x1x12x12xf32> to vector<12x12xf32>
    %c12_214 = arith.constant 12 : index
    %569 = memref.load %arg3[%c12_214] : memref<81xf32, #tpu.memory_space<smem>>
    %570 = vector.broadcast %569 : f32 to vector<12x12xf32>
    %571 = arith.mulf %568, %570 : vector<12x12xf32>
    %572 = arith.addf %558, %571 : vector<12x12xf32>
    %c39_215 = arith.constant 39 : index
    %573 = memref.load %arg3[%c39_215] : memref<81xf32, #tpu.memory_space<smem>>
    %574 = vector.broadcast %573 : f32 to vector<12x12xf32>
    %575 = arith.mulf %568, %574 : vector<12x12xf32>
    %576 = arith.addf %562, %575 : vector<12x12xf32>
    %c66_216 = arith.constant 66 : index
    %577 = memref.load %arg3[%c66_216] : memref<81xf32, #tpu.memory_space<smem>>
    %578 = vector.broadcast %577 : f32 to vector<12x12xf32>
    %579 = arith.mulf %568, %578 : vector<12x12xf32>
    %580 = arith.addf %566, %579 : vector<12x12xf32>
    %c0_217 = arith.constant 0 : index
    %c1_218 = arith.constant 1 : index
    %c1_219 = arith.constant 1 : index
    %c1_220 = arith.constant 1 : index
    %581 = vector.load %arg6[%c0_217, %c1_218, %c1_219, %c1_220] : memref<2x3x14x14xf32, #tpu.memory_space<vmem>>, vector<1x1x12x12xf32>
    %582 = vector.shape_cast %581 : vector<1x1x12x12xf32> to vector<12x12xf32>
    %c13_221 = arith.constant 13 : index
    %583 = memref.load %arg3[%c13_221] : memref<81xf32, #tpu.memory_space<smem>>
    %584 = vector.broadcast %583 : f32 to vector<12x12xf32>
    %585 = arith.mulf %582, %584 : vector<12x12xf32>
    %586 = arith.addf %572, %585 : vector<12x12xf32>
    %c40_222 = arith.constant 40 : index
    %587 = memref.load %arg3[%c40_222] : memref<81xf32, #tpu.memory_space<smem>>
    %588 = vector.broadcast %587 : f32 to vector<12x12xf32>
    %589 = arith.mulf %582, %588 : vector<12x12xf32>
    %590 = arith.addf %576, %589 : vector<12x12xf32>
    %c67_223 = arith.constant 67 : index
    %591 = memref.load %arg3[%c67_223] : memref<81xf32, #tpu.memory_space<smem>>
    %592 = vector.broadcast %591 : f32 to vector<12x12xf32>
    %593 = arith.mulf %582, %592 : vector<12x12xf32>
    %594 = arith.addf %580, %593 : vector<12x12xf32>
    %c0_224 = arith.constant 0 : index
    %c1_225 = arith.constant 1 : index
    %c1_226 = arith.constant 1 : index
    %c2_227 = arith.constant 2 : index
    %595 = vector.load %arg6[%c0_224, %c1_225, %c1_226, %c2_227] : memref<2x3x14x14xf32, #tpu.memory_space<vmem>>, vector<1x1x12x12xf32>
    %596 = vector.shape_cast %595 : vector<1x1x12x12xf32> to vector<12x12xf32>
    %c14_228 = arith.constant 14 : index
    %597 = memref.load %arg3[%c14_228] : memref<81xf32, #tpu.memory_space<smem>>
    %598 = vector.broadcast %597 : f32 to vector<12x12xf32>
    %599 = arith.mulf %596, %598 : vector<12x12xf32>
    %600 = arith.addf %586, %599 : vector<12x12xf32>
    %c41_229 = arith.constant 41 : index
    %601 = memref.load %arg3[%c41_229] : memref<81xf32, #tpu.memory_space<smem>>
    %602 = vector.broadcast %601 : f32 to vector<12x12xf32>
    %603 = arith.mulf %596, %602 : vector<12x12xf32>
    %604 = arith.addf %590, %603 : vector<12x12xf32>
    %c68_230 = arith.constant 68 : index
    %605 = memref.load %arg3[%c68_230] : memref<81xf32, #tpu.memory_space<smem>>
    %606 = vector.broadcast %605 : f32 to vector<12x12xf32>
    %607 = arith.mulf %596, %606 : vector<12x12xf32>
    %608 = arith.addf %594, %607 : vector<12x12xf32>
    %c0_231 = arith.constant 0 : index
    %c1_232 = arith.constant 1 : index
    %c2_233 = arith.constant 2 : index
    %c0_234 = arith.constant 0 : index
    %609 = vector.load %arg6[%c0_231, %c1_232, %c2_233, %c0_234] : memref<2x3x14x14xf32, #tpu.memory_space<vmem>>, vector<1x1x12x12xf32>
    %610 = vector.shape_cast %609 : vector<1x1x12x12xf32> to vector<12x12xf32>
    %c15_235 = arith.constant 15 : index
    %611 = memref.load %arg3[%c15_235] : memref<81xf32, #tpu.memory_space<smem>>
    %612 = vector.broadcast %611 : f32 to vector<12x12xf32>
    %613 = arith.mulf %610, %612 : vector<12x12xf32>
    %614 = arith.addf %600, %613 : vector<12x12xf32>
    %c42_236 = arith.constant 42 : index
    %615 = memref.load %arg3[%c42_236] : memref<81xf32, #tpu.memory_space<smem>>
    %616 = vector.broadcast %615 : f32 to vector<12x12xf32>
    %617 = arith.mulf %610, %616 : vector<12x12xf32>
    %618 = arith.addf %604, %617 : vector<12x12xf32>
    %c69_237 = arith.constant 69 : index
    %619 = memref.load %arg3[%c69_237] : memref<81xf32, #tpu.memory_space<smem>>
    %620 = vector.broadcast %619 : f32 to vector<12x12xf32>
    %621 = arith.mulf %610, %620 : vector<12x12xf32>
    %622 = arith.addf %608, %621 : vector<12x12xf32>
    %c0_238 = arith.constant 0 : index
    %c1_239 = arith.constant 1 : index
    %c2_240 = arith.constant 2 : index
    %c1_241 = arith.constant 1 : index
    %623 = vector.load %arg6[%c0_238, %c1_239, %c2_240, %c1_241] : memref<2x3x14x14xf32, #tpu.memory_space<vmem>>, vector<1x1x12x12xf32>
    %624 = vector.shape_cast %623 : vector<1x1x12x12xf32> to vector<12x12xf32>
    %c16_242 = arith.constant 16 : index
    %625 = memref.load %arg3[%c16_242] : memref<81xf32, #tpu.memory_space<smem>>
    %626 = vector.broadcast %625 : f32 to vector<12x12xf32>
    %627 = arith.mulf %624, %626 : vector<12x12xf32>
    %628 = arith.addf %614, %627 : vector<12x12xf32>
    %c43_243 = arith.constant 43 : index
    %629 = memref.load %arg3[%c43_243] : memref<81xf32, #tpu.memory_space<smem>>
    %630 = vector.broadcast %629 : f32 to vector<12x12xf32>
    %631 = arith.mulf %624, %630 : vector<12x12xf32>
    %632 = arith.addf %618, %631 : vector<12x12xf32>
    %c70_244 = arith.constant 70 : index
    %633 = memref.load %arg3[%c70_244] : memref<81xf32, #tpu.memory_space<smem>>
    %634 = vector.broadcast %633 : f32 to vector<12x12xf32>
    %635 = arith.mulf %624, %634 : vector<12x12xf32>
    %636 = arith.addf %622, %635 : vector<12x12xf32>
    %c0_245 = arith.constant 0 : index
    %c1_246 = arith.constant 1 : index
    %c2_247 = arith.constant 2 : index
    %c2_248 = arith.constant 2 : index
    %637 = vector.load %arg6[%c0_245, %c1_246, %c2_247, %c2_248] : memref<2x3x14x14xf32, #tpu.memory_space<vmem>>, vector<1x1x12x12xf32>
    %638 = vector.shape_cast %637 : vector<1x1x12x12xf32> to vector<12x12xf32>
    %c17_249 = arith.constant 17 : index
    %639 = memref.load %arg3[%c17_249] : memref<81xf32, #tpu.memory_space<smem>>
    %640 = vector.broadcast %639 : f32 to vector<12x12xf32>
    %641 = arith.mulf %638, %640 : vector<12x12xf32>
    %642 = arith.addf %628, %641 : vector<12x12xf32>
    %c44_250 = arith.constant 44 : index
    %643 = memref.load %arg3[%c44_250] : memref<81xf32, #tpu.memory_space<smem>>
    %644 = vector.broadcast %643 : f32 to vector<12x12xf32>
    %645 = arith.mulf %638, %644 : vector<12x12xf32>
    %646 = arith.addf %632, %645 : vector<12x12xf32>
    %c71_251 = arith.constant 71 : index
    %647 = memref.load %arg3[%c71_251] : memref<81xf32, #tpu.memory_space<smem>>
    %648 = vector.broadcast %647 : f32 to vector<12x12xf32>
    %649 = arith.mulf %638, %648 : vector<12x12xf32>
    %650 = arith.addf %636, %649 : vector<12x12xf32>
    %c0_252 = arith.constant 0 : index
    %c2_253 = arith.constant 2 : index
    %c0_254 = arith.constant 0 : index
    %c0_255 = arith.constant 0 : index
    %651 = vector.load %arg6[%c0_252, %c2_253, %c0_254, %c0_255] : memref<2x3x14x14xf32, #tpu.memory_space<vmem>>, vector<1x1x12x12xf32>
    %652 = vector.shape_cast %651 : vector<1x1x12x12xf32> to vector<12x12xf32>
    %c18_256 = arith.constant 18 : index
    %653 = memref.load %arg3[%c18_256] : memref<81xf32, #tpu.memory_space<smem>>
    %654 = vector.broadcast %653 : f32 to vector<12x12xf32>
    %655 = arith.mulf %652, %654 : vector<12x12xf32>
    %656 = arith.addf %642, %655 : vector<12x12xf32>
    %c45_257 = arith.constant 45 : index
    %657 = memref.load %arg3[%c45_257] : memref<81xf32, #tpu.memory_space<smem>>
    %658 = vector.broadcast %657 : f32 to vector<12x12xf32>
    %659 = arith.mulf %652, %658 : vector<12x12xf32>
    %660 = arith.addf %646, %659 : vector<12x12xf32>
    %c72_258 = arith.constant 72 : index
    %661 = memref.load %arg3[%c72_258] : memref<81xf32, #tpu.memory_space<smem>>
    %662 = vector.broadcast %661 : f32 to vector<12x12xf32>
    %663 = arith.mulf %652, %662 : vector<12x12xf32>
    %664 = arith.addf %650, %663 : vector<12x12xf32>
    %c0_259 = arith.constant 0 : index
    %c2_260 = arith.constant 2 : index
    %c0_261 = arith.constant 0 : index
    %c1_262 = arith.constant 1 : index
    %665 = vector.load %arg6[%c0_259, %c2_260, %c0_261, %c1_262] : memref<2x3x14x14xf32, #tpu.memory_space<vmem>>, vector<1x1x12x12xf32>
    %666 = vector.shape_cast %665 : vector<1x1x12x12xf32> to vector<12x12xf32>
    %c19_263 = arith.constant 19 : index
    %667 = memref.load %arg3[%c19_263] : memref<81xf32, #tpu.memory_space<smem>>
    %668 = vector.broadcast %667 : f32 to vector<12x12xf32>
    %669 = arith.mulf %666, %668 : vector<12x12xf32>
    %670 = arith.addf %656, %669 : vector<12x12xf32>
    %c46_264 = arith.constant 46 : index
    %671 = memref.load %arg3[%c46_264] : memref<81xf32, #tpu.memory_space<smem>>
    %672 = vector.broadcast %671 : f32 to vector<12x12xf32>
    %673 = arith.mulf %666, %672 : vector<12x12xf32>
    %674 = arith.addf %660, %673 : vector<12x12xf32>
    %c73_265 = arith.constant 73 : index
    %675 = memref.load %arg3[%c73_265] : memref<81xf32, #tpu.memory_space<smem>>
    %676 = vector.broadcast %675 : f32 to vector<12x12xf32>
    %677 = arith.mulf %666, %676 : vector<12x12xf32>
    %678 = arith.addf %664, %677 : vector<12x12xf32>
    %c0_266 = arith.constant 0 : index
    %c2_267 = arith.constant 2 : index
    %c0_268 = arith.constant 0 : index
    %c2_269 = arith.constant 2 : index
    %679 = vector.load %arg6[%c0_266, %c2_267, %c0_268, %c2_269] : memref<2x3x14x14xf32, #tpu.memory_space<vmem>>, vector<1x1x12x12xf32>
    %680 = vector.shape_cast %679 : vector<1x1x12x12xf32> to vector<12x12xf32>
    %c20_270 = arith.constant 20 : index
    %681 = memref.load %arg3[%c20_270] : memref<81xf32, #tpu.memory_space<smem>>
    %682 = vector.broadcast %681 : f32 to vector<12x12xf32>
    %683 = arith.mulf %680, %682 : vector<12x12xf32>
    %684 = arith.addf %670, %683 : vector<12x12xf32>
    %c47_271 = arith.constant 47 : index
    %685 = memref.load %arg3[%c47_271] : memref<81xf32, #tpu.memory_space<smem>>
    %686 = vector.broadcast %685 : f32 to vector<12x12xf32>
    %687 = arith.mulf %680, %686 : vector<12x12xf32>
    %688 = arith.addf %674, %687 : vector<12x12xf32>
    %c74_272 = arith.constant 74 : index
    %689 = memref.load %arg3[%c74_272] : memref<81xf32, #tpu.memory_space<smem>>
    %690 = vector.broadcast %689 : f32 to vector<12x12xf32>
    %691 = arith.mulf %680, %690 : vector<12x12xf32>
    %692 = arith.addf %678, %691 : vector<12x12xf32>
    %c0_273 = arith.constant 0 : index
    %c2_274 = arith.constant 2 : index
    %c1_275 = arith.constant 1 : index
    %c0_276 = arith.constant 0 : index
    %693 = vector.load %arg6[%c0_273, %c2_274, %c1_275, %c0_276] : memref<2x3x14x14xf32, #tpu.memory_space<vmem>>, vector<1x1x12x12xf32>
    %694 = vector.shape_cast %693 : vector<1x1x12x12xf32> to vector<12x12xf32>
    %c21_277 = arith.constant 21 : index
    %695 = memref.load %arg3[%c21_277] : memref<81xf32, #tpu.memory_space<smem>>
    %696 = vector.broadcast %695 : f32 to vector<12x12xf32>
    %697 = arith.mulf %694, %696 : vector<12x12xf32>
    %698 = arith.addf %684, %697 : vector<12x12xf32>
    %c48_278 = arith.constant 48 : index
    %699 = memref.load %arg3[%c48_278] : memref<81xf32, #tpu.memory_space<smem>>
    %700 = vector.broadcast %699 : f32 to vector<12x12xf32>
    %701 = arith.mulf %694, %700 : vector<12x12xf32>
    %702 = arith.addf %688, %701 : vector<12x12xf32>
    %c75_279 = arith.constant 75 : index
    %703 = memref.load %arg3[%c75_279] : memref<81xf32, #tpu.memory_space<smem>>
    %704 = vector.broadcast %703 : f32 to vector<12x12xf32>
    %705 = arith.mulf %694, %704 : vector<12x12xf32>
    %706 = arith.addf %692, %705 : vector<12x12xf32>
    %c0_280 = arith.constant 0 : index
    %c2_281 = arith.constant 2 : index
    %c1_282 = arith.constant 1 : index
    %c1_283 = arith.constant 1 : index
    %707 = vector.load %arg6[%c0_280, %c2_281, %c1_282, %c1_283] : memref<2x3x14x14xf32, #tpu.memory_space<vmem>>, vector<1x1x12x12xf32>
    %708 = vector.shape_cast %707 : vector<1x1x12x12xf32> to vector<12x12xf32>
    %c22_284 = arith.constant 22 : index
    %709 = memref.load %arg3[%c22_284] : memref<81xf32, #tpu.memory_space<smem>>
    %710 = vector.broadcast %709 : f32 to vector<12x12xf32>
    %711 = arith.mulf %708, %710 : vector<12x12xf32>
    %712 = arith.addf %698, %711 : vector<12x12xf32>
    %c49_285 = arith.constant 49 : index
    %713 = memref.load %arg3[%c49_285] : memref<81xf32, #tpu.memory_space<smem>>
    %714 = vector.broadcast %713 : f32 to vector<12x12xf32>
    %715 = arith.mulf %708, %714 : vector<12x12xf32>
    %716 = arith.addf %702, %715 : vector<12x12xf32>
    %c76_286 = arith.constant 76 : index
    %717 = memref.load %arg3[%c76_286] : memref<81xf32, #tpu.memory_space<smem>>
    %718 = vector.broadcast %717 : f32 to vector<12x12xf32>
    %719 = arith.mulf %708, %718 : vector<12x12xf32>
    %720 = arith.addf %706, %719 : vector<12x12xf32>
    %c0_287 = arith.constant 0 : index
    %c2_288 = arith.constant 2 : index
    %c1_289 = arith.constant 1 : index
    %c2_290 = arith.constant 2 : index
    %721 = vector.load %arg6[%c0_287, %c2_288, %c1_289, %c2_290] : memref<2x3x14x14xf32, #tpu.memory_space<vmem>>, vector<1x1x12x12xf32>
    %722 = vector.shape_cast %721 : vector<1x1x12x12xf32> to vector<12x12xf32>
    %c23_291 = arith.constant 23 : index
    %723 = memref.load %arg3[%c23_291] : memref<81xf32, #tpu.memory_space<smem>>
    %724 = vector.broadcast %723 : f32 to vector<12x12xf32>
    %725 = arith.mulf %722, %724 : vector<12x12xf32>
    %726 = arith.addf %712, %725 : vector<12x12xf32>
    %c50_292 = arith.constant 50 : index
    %727 = memref.load %arg3[%c50_292] : memref<81xf32, #tpu.memory_space<smem>>
    %728 = vector.broadcast %727 : f32 to vector<12x12xf32>
    %729 = arith.mulf %722, %728 : vector<12x12xf32>
    %730 = arith.addf %716, %729 : vector<12x12xf32>
    %c77_293 = arith.constant 77 : index
    %731 = memref.load %arg3[%c77_293] : memref<81xf32, #tpu.memory_space<smem>>
    %732 = vector.broadcast %731 : f32 to vector<12x12xf32>
    %733 = arith.mulf %722, %732 : vector<12x12xf32>
    %734 = arith.addf %720, %733 : vector<12x12xf32>
    %c0_294 = arith.constant 0 : index
    %c2_295 = arith.constant 2 : index
    %c2_296 = arith.constant 2 : index
    %c0_297 = arith.constant 0 : index
    %735 = vector.load %arg6[%c0_294, %c2_295, %c2_296, %c0_297] : memref<2x3x14x14xf32, #tpu.memory_space<vmem>>, vector<1x1x12x12xf32>
    %736 = vector.shape_cast %735 : vector<1x1x12x12xf32> to vector<12x12xf32>
    %c24_298 = arith.constant 24 : index
    %737 = memref.load %arg3[%c24_298] : memref<81xf32, #tpu.memory_space<smem>>
    %738 = vector.broadcast %737 : f32 to vector<12x12xf32>
    %739 = arith.mulf %736, %738 : vector<12x12xf32>
    %740 = arith.addf %726, %739 : vector<12x12xf32>
    %c51_299 = arith.constant 51 : index
    %741 = memref.load %arg3[%c51_299] : memref<81xf32, #tpu.memory_space<smem>>
    %742 = vector.broadcast %741 : f32 to vector<12x12xf32>
    %743 = arith.mulf %736, %742 : vector<12x12xf32>
    %744 = arith.addf %730, %743 : vector<12x12xf32>
    %c78_300 = arith.constant 78 : index
    %745 = memref.load %arg3[%c78_300] : memref<81xf32, #tpu.memory_space<smem>>
    %746 = vector.broadcast %745 : f32 to vector<12x12xf32>
    %747 = arith.mulf %736, %746 : vector<12x12xf32>
    %748 = arith.addf %734, %747 : vector<12x12xf32>
    %c0_301 = arith.constant 0 : index
    %c2_302 = arith.constant 2 : index
    %c2_303 = arith.constant 2 : index
    %c1_304 = arith.constant 1 : index
    %749 = vector.load %arg6[%c0_301, %c2_302, %c2_303, %c1_304] : memref<2x3x14x14xf32, #tpu.memory_space<vmem>>, vector<1x1x12x12xf32>
    %750 = vector.shape_cast %749 : vector<1x1x12x12xf32> to vector<12x12xf32>
    %c25_305 = arith.constant 25 : index
    %751 = memref.load %arg3[%c25_305] : memref<81xf32, #tpu.memory_space<smem>>
    %752 = vector.broadcast %751 : f32 to vector<12x12xf32>
    %753 = arith.mulf %750, %752 : vector<12x12xf32>
    %754 = arith.addf %740, %753 : vector<12x12xf32>
    %c52_306 = arith.constant 52 : index
    %755 = memref.load %arg3[%c52_306] : memref<81xf32, #tpu.memory_space<smem>>
    %756 = vector.broadcast %755 : f32 to vector<12x12xf32>
    %757 = arith.mulf %750, %756 : vector<12x12xf32>
    %758 = arith.addf %744, %757 : vector<12x12xf32>
    %c79_307 = arith.constant 79 : index
    %759 = memref.load %arg3[%c79_307] : memref<81xf32, #tpu.memory_space<smem>>
    %760 = vector.broadcast %759 : f32 to vector<12x12xf32>
    %761 = arith.mulf %750, %760 : vector<12x12xf32>
    %762 = arith.addf %748, %761 : vector<12x12xf32>
    %c0_308 = arith.constant 0 : index
    %c2_309 = arith.constant 2 : index
    %c2_310 = arith.constant 2 : index
    %c2_311 = arith.constant 2 : index
    %763 = vector.load %arg6[%c0_308, %c2_309, %c2_310, %c2_311] : memref<2x3x14x14xf32, #tpu.memory_space<vmem>>, vector<1x1x12x12xf32>
    %764 = vector.shape_cast %763 : vector<1x1x12x12xf32> to vector<12x12xf32>
    %c26_312 = arith.constant 26 : index
    %765 = memref.load %arg3[%c26_312] : memref<81xf32, #tpu.memory_space<smem>>
    %766 = vector.broadcast %765 : f32 to vector<12x12xf32>
    %767 = arith.mulf %764, %766 : vector<12x12xf32>
    %768 = arith.addf %754, %767 : vector<12x12xf32>
    %c53_313 = arith.constant 53 : index
    %769 = memref.load %arg3[%c53_313] : memref<81xf32, #tpu.memory_space<smem>>
    %770 = vector.broadcast %769 : f32 to vector<12x12xf32>
    %771 = arith.mulf %764, %770 : vector<12x12xf32>
    %772 = arith.addf %758, %771 : vector<12x12xf32>
    %c80_314 = arith.constant 80 : index
    %773 = memref.load %arg3[%c80_314] : memref<81xf32, #tpu.memory_space<smem>>
    %774 = vector.broadcast %773 : f32 to vector<12x12xf32>
    %775 = arith.mulf %764, %774 : vector<12x12xf32>
    %776 = arith.addf %762, %775 : vector<12x12xf32>
    %c0_315 = arith.constant 0 : index
    %c0_316 = arith.constant 0 : index
    %c1_317 = arith.constant 1 : index
    %c1_318 = arith.constant 1 : index
    %777 = vector.load %arg6[%c0_315, %c0_316, %c1_317, %c1_318] : memref<2x3x14x14xf32, #tpu.memory_space<vmem>>, vector<1x1x12x12xf32>
    %778 = vector.shape_cast %777 : vector<1x1x12x12xf32> to vector<12x12xf32>
    %779 = arith.addf %768, %778 : vector<12x12xf32>
    %c0_319 = arith.constant 0 : index
    %c0_320 = arith.constant 0 : index
    %c0_321 = arith.constant 0 : index
    %c0_322 = arith.constant 0 : index
    %780 = vector.load %arg5[%c0_319, %c0_320, %c0_321, %c0_322] : memref<2x3x12x12xf32, #tpu.memory_space<vmem>>, vector<1x1x12x12xf32>
    %781 = vector.shape_cast %780 : vector<1x1x12x12xf32> to vector<12x12xf32>
    %782 = vector.shape_cast %779 : vector<12x12xf32> to vector<1x1x12x12xf32>
    tpu.vector_store %arg5[%c0_319, %c0_320, %c0_321, %c0_322], %782 {strides = array<i32>} : memref<2x3x12x12xf32, #tpu.memory_space<vmem>>, vector<1x1x12x12xf32>,
    %c0_323 = arith.constant 0 : index
    %c1_324 = arith.constant 1 : index
    %c1_325 = arith.constant 1 : index
    %c1_326 = arith.constant 1 : index
    %783 = vector.load %arg6[%c0_323, %c1_324, %c1_325, %c1_326] : memref<2x3x14x14xf32, #tpu.memory_space<vmem>>, vector<1x1x12x12xf32>
    %784 = vector.shape_cast %783 : vector<1x1x12x12xf32> to vector<12x12xf32>
    %785 = arith.addf %772, %784 : vector<12x12xf32>
    %c0_327 = arith.constant 0 : index
    %c1_328 = arith.constant 1 : index
    %c0_329 = arith.constant 0 : index
    %c0_330 = arith.constant 0 : index
    %786 = vector.load %arg5[%c0_327, %c1_328, %c0_329, %c0_330] : memref<2x3x12x12xf32, #tpu.memory_space<vmem>>, vector<1x1x12x12xf32>
    %787 = vector.shape_cast %786 : vector<1x1x12x12xf32> to vector<12x12xf32>
    %788 = vector.shape_cast %785 : vector<12x12xf32> to vector<1x1x12x12xf32>
    tpu.vector_store %arg5[%c0_327, %c1_328, %c0_329, %c0_330], %788 {strides = array<i32>} : memref<2x3x12x12xf32, #tpu.memory_space<vmem>>, vector<1x1x12x12xf32>,
    %c0_331 = arith.constant 0 : index
    %c2_332 = arith.constant 2 : index
    %c1_333 = arith.constant 1 : index
    %c1_334 = arith.constant 1 : index
    %789 = vector.load %arg6[%c0_331, %c2_332, %c1_333, %c1_334] : memref<2x3x14x14xf32, #tpu.memory_space<vmem>>, vector<1x1x12x12xf32>
    %790 = vector.shape_cast %789 : vector<1x1x12x12xf32> to vector<12x12xf32>
    %791 = arith.addf %776, %790 : vector<12x12xf32>
    %c0_335 = arith.constant 0 : index
    %c2_336 = arith.constant 2 : index
    %c0_337 = arith.constant 0 : index
    %c0_338 = arith.constant 0 : index
    %792 = vector.load %arg5[%c0_335, %c2_336, %c0_337, %c0_338] : memref<2x3x12x12xf32, #tpu.memory_space<vmem>>, vector<1x1x12x12xf32>
    %793 = vector.shape_cast %792 : vector<1x1x12x12xf32> to vector<12x12xf32>
    %794 = vector.shape_cast %791 : vector<12x12xf32> to vector<1x1x12x12xf32>
    tpu.vector_store %arg5[%c0_335, %c2_336, %c0_337, %c0_338], %794 {strides = array<i32>} : memref<2x3x12x12xf32, #tpu.memory_space<vmem>>, vector<1x1x12x12xf32>,
    %c0_339 = arith.constant 0 : index
    %795 = memref.load %arg2[%c0_339] : memref<3xf32, #tpu.memory_space<smem>>
    %796 = vector.broadcast %795 : f32 to vector<14x14xf32>
    %c1_340 = arith.constant 1 : index
    %797 = memref.load %arg2[%c1_340] : memref<3xf32, #tpu.memory_space<smem>>
    %798 = vector.broadcast %797 : f32 to vector<14x14xf32>
    %c2_341 = arith.constant 2 : index
    %799 = memref.load %arg2[%c2_341] : memref<3xf32, #tpu.memory_space<smem>>
    %800 = vector.broadcast %799 : f32 to vector<14x14xf32>
    %c1_342 = arith.constant 1 : index
    %c0_343 = arith.constant 0 : index
    %c0_344 = arith.constant 0 : index
    %c0_345 = arith.constant 0 : index
    %801 = vector.load %arg0[%c1_342, %c0_343, %c0_344, %c0_345] : memref<2x3x16x16xf32, #tpu.memory_space<vmem>>, vector<1x1x14x14xf32>
    %802 = vector.shape_cast %801 : vector<1x1x14x14xf32> to vector<14x14xf32>
    %c0_346 = arith.constant 0 : index
    %803 = memref.load %arg1[%c0_346] : memref<81xf32, #tpu.memory_space<smem>>
    %804 = vector.broadcast %803 : f32 to vector<14x14xf32>
    %805 = arith.mulf %802, %804 : vector<14x14xf32>
    %806 = arith.addf %796, %805 : vector<14x14xf32>
    %c27_347 = arith.constant 27 : index
    %807 = memref.load %arg1[%c27_347] : memref<81xf32, #tpu.memory_space<smem>>
    %808 = vector.broadcast %807 : f32 to vector<14x14xf32>
    %809 = arith.mulf %802, %808 : vector<14x14xf32>
    %810 = arith.addf %798, %809 : vector<14x14xf32>
    %c54_348 = arith.constant 54 : index
    %811 = memref.load %arg1[%c54_348] : memref<81xf32, #tpu.memory_space<smem>>
    %812 = vector.broadcast %811 : f32 to vector<14x14xf32>
    %813 = arith.mulf %802, %812 : vector<14x14xf32>
    %814 = arith.addf %800, %813 : vector<14x14xf32>
    %c1_349 = arith.constant 1 : index
    %c0_350 = arith.constant 0 : index
    %c0_351 = arith.constant 0 : index
    %c1_352 = arith.constant 1 : index
    %815 = vector.load %arg0[%c1_349, %c0_350, %c0_351, %c1_352] : memref<2x3x16x16xf32, #tpu.memory_space<vmem>>, vector<1x1x14x14xf32>
    %816 = vector.shape_cast %815 : vector<1x1x14x14xf32> to vector<14x14xf32>
    %c1_353 = arith.constant 1 : index
    %817 = memref.load %arg1[%c1_353] : memref<81xf32, #tpu.memory_space<smem>>
    %818 = vector.broadcast %817 : f32 to vector<14x14xf32>
    %819 = arith.mulf %816, %818 : vector<14x14xf32>
    %820 = arith.addf %806, %819 : vector<14x14xf32>
    %c28_354 = arith.constant 28 : index
    %821 = memref.load %arg1[%c28_354] : memref<81xf32, #tpu.memory_space<smem>>
    %822 = vector.broadcast %821 : f32 to vector<14x14xf32>
    %823 = arith.mulf %816, %822 : vector<14x14xf32>
    %824 = arith.addf %810, %823 : vector<14x14xf32>
    %c55_355 = arith.constant 55 : index
    %825 = memref.load %arg1[%c55_355] : memref<81xf32, #tpu.memory_space<smem>>
    %826 = vector.broadcast %825 : f32 to vector<14x14xf32>
    %827 = arith.mulf %816, %826 : vector<14x14xf32>
    %828 = arith.addf %814, %827 : vector<14x14xf32>
    %c1_356 = arith.constant 1 : index
    %c0_357 = arith.constant 0 : index
    %c0_358 = arith.constant 0 : index
    %c2_359 = arith.constant 2 : index
    %829 = vector.load %arg0[%c1_356, %c0_357, %c0_358, %c2_359] : memref<2x3x16x16xf32, #tpu.memory_space<vmem>>, vector<1x1x14x14xf32>
    %830 = vector.shape_cast %829 : vector<1x1x14x14xf32> to vector<14x14xf32>
    %c2_360 = arith.constant 2 : index
    %831 = memref.load %arg1[%c2_360] : memref<81xf32, #tpu.memory_space<smem>>
    %832 = vector.broadcast %831 : f32 to vector<14x14xf32>
    %833 = arith.mulf %830, %832 : vector<14x14xf32>
    %834 = arith.addf %820, %833 : vector<14x14xf32>
    %c29_361 = arith.constant 29 : index
    %835 = memref.load %arg1[%c29_361] : memref<81xf32, #tpu.memory_space<smem>>
    %836 = vector.broadcast %835 : f32 to vector<14x14xf32>
    %837 = arith.mulf %830, %836 : vector<14x14xf32>
    %838 = arith.addf %824, %837 : vector<14x14xf32>
    %c56_362 = arith.constant 56 : index
    %839 = memref.load %arg1[%c56_362] : memref<81xf32, #tpu.memory_space<smem>>
    %840 = vector.broadcast %839 : f32 to vector<14x14xf32>
    %841 = arith.mulf %830, %840 : vector<14x14xf32>
    %842 = arith.addf %828, %841 : vector<14x14xf32>
    %c1_363 = arith.constant 1 : index
    %c0_364 = arith.constant 0 : index
    %c1_365 = arith.constant 1 : index
    %c0_366 = arith.constant 0 : index
    %843 = vector.load %arg0[%c1_363, %c0_364, %c1_365, %c0_366] : memref<2x3x16x16xf32, #tpu.memory_space<vmem>>, vector<1x1x14x14xf32>
    %844 = vector.shape_cast %843 : vector<1x1x14x14xf32> to vector<14x14xf32>
    %c3_367 = arith.constant 3 : index
    %845 = memref.load %arg1[%c3_367] : memref<81xf32, #tpu.memory_space<smem>>
    %846 = vector.broadcast %845 : f32 to vector<14x14xf32>
    %847 = arith.mulf %844, %846 : vector<14x14xf32>
    %848 = arith.addf %834, %847 : vector<14x14xf32>
    %c30_368 = arith.constant 30 : index
    %849 = memref.load %arg1[%c30_368] : memref<81xf32, #tpu.memory_space<smem>>
    %850 = vector.broadcast %849 : f32 to vector<14x14xf32>
    %851 = arith.mulf %844, %850 : vector<14x14xf32>
    %852 = arith.addf %838, %851 : vector<14x14xf32>
    %c57_369 = arith.constant 57 : index
    %853 = memref.load %arg1[%c57_369] : memref<81xf32, #tpu.memory_space<smem>>
    %854 = vector.broadcast %853 : f32 to vector<14x14xf32>
    %855 = arith.mulf %844, %854 : vector<14x14xf32>
    %856 = arith.addf %842, %855 : vector<14x14xf32>
    %c1_370 = arith.constant 1 : index
    %c0_371 = arith.constant 0 : index
    %c1_372 = arith.constant 1 : index
    %c1_373 = arith.constant 1 : index
    %857 = vector.load %arg0[%c1_370, %c0_371, %c1_372, %c1_373] : memref<2x3x16x16xf32, #tpu.memory_space<vmem>>, vector<1x1x14x14xf32>
    %858 = vector.shape_cast %857 : vector<1x1x14x14xf32> to vector<14x14xf32>
    %c4_374 = arith.constant 4 : index
    %859 = memref.load %arg1[%c4_374] : memref<81xf32, #tpu.memory_space<smem>>
    %860 = vector.broadcast %859 : f32 to vector<14x14xf32>
    %861 = arith.mulf %858, %860 : vector<14x14xf32>
    %862 = arith.addf %848, %861 : vector<14x14xf32>
    %c31_375 = arith.constant 31 : index
    %863 = memref.load %arg1[%c31_375] : memref<81xf32, #tpu.memory_space<smem>>
    %864 = vector.broadcast %863 : f32 to vector<14x14xf32>
    %865 = arith.mulf %858, %864 : vector<14x14xf32>
    %866 = arith.addf %852, %865 : vector<14x14xf32>
    %c58_376 = arith.constant 58 : index
    %867 = memref.load %arg1[%c58_376] : memref<81xf32, #tpu.memory_space<smem>>
    %868 = vector.broadcast %867 : f32 to vector<14x14xf32>
    %869 = arith.mulf %858, %868 : vector<14x14xf32>
    %870 = arith.addf %856, %869 : vector<14x14xf32>
    %c1_377 = arith.constant 1 : index
    %c0_378 = arith.constant 0 : index
    %c1_379 = arith.constant 1 : index
    %c2_380 = arith.constant 2 : index
    %871 = vector.load %arg0[%c1_377, %c0_378, %c1_379, %c2_380] : memref<2x3x16x16xf32, #tpu.memory_space<vmem>>, vector<1x1x14x14xf32>
    %872 = vector.shape_cast %871 : vector<1x1x14x14xf32> to vector<14x14xf32>
    %c5_381 = arith.constant 5 : index
    %873 = memref.load %arg1[%c5_381] : memref<81xf32, #tpu.memory_space<smem>>
    %874 = vector.broadcast %873 : f32 to vector<14x14xf32>
    %875 = arith.mulf %872, %874 : vector<14x14xf32>
    %876 = arith.addf %862, %875 : vector<14x14xf32>
    %c32_382 = arith.constant 32 : index
    %877 = memref.load %arg1[%c32_382] : memref<81xf32, #tpu.memory_space<smem>>
    %878 = vector.broadcast %877 : f32 to vector<14x14xf32>
    %879 = arith.mulf %872, %878 : vector<14x14xf32>
    %880 = arith.addf %866, %879 : vector<14x14xf32>
    %c59_383 = arith.constant 59 : index
    %881 = memref.load %arg1[%c59_383] : memref<81xf32, #tpu.memory_space<smem>>
    %882 = vector.broadcast %881 : f32 to vector<14x14xf32>
    %883 = arith.mulf %872, %882 : vector<14x14xf32>
    %884 = arith.addf %870, %883 : vector<14x14xf32>
    %c1_384 = arith.constant 1 : index
    %c0_385 = arith.constant 0 : index
    %c2_386 = arith.constant 2 : index
    %c0_387 = arith.constant 0 : index
    %885 = vector.load %arg0[%c1_384, %c0_385, %c2_386, %c0_387] : memref<2x3x16x16xf32, #tpu.memory_space<vmem>>, vector<1x1x14x14xf32>
    %886 = vector.shape_cast %885 : vector<1x1x14x14xf32> to vector<14x14xf32>
    %c6_388 = arith.constant 6 : index
    %887 = memref.load %arg1[%c6_388] : memref<81xf32, #tpu.memory_space<smem>>
    %888 = vector.broadcast %887 : f32 to vector<14x14xf32>
    %889 = arith.mulf %886, %888 : vector<14x14xf32>
    %890 = arith.addf %876, %889 : vector<14x14xf32>
    %c33_389 = arith.constant 33 : index
    %891 = memref.load %arg1[%c33_389] : memref<81xf32, #tpu.memory_space<smem>>
    %892 = vector.broadcast %891 : f32 to vector<14x14xf32>
    %893 = arith.mulf %886, %892 : vector<14x14xf32>
    %894 = arith.addf %880, %893 : vector<14x14xf32>
    %c60_390 = arith.constant 60 : index
    %895 = memref.load %arg1[%c60_390] : memref<81xf32, #tpu.memory_space<smem>>
    %896 = vector.broadcast %895 : f32 to vector<14x14xf32>
    %897 = arith.mulf %886, %896 : vector<14x14xf32>
    %898 = arith.addf %884, %897 : vector<14x14xf32>
    %c1_391 = arith.constant 1 : index
    %c0_392 = arith.constant 0 : index
    %c2_393 = arith.constant 2 : index
    %c1_394 = arith.constant 1 : index
    %899 = vector.load %arg0[%c1_391, %c0_392, %c2_393, %c1_394] : memref<2x3x16x16xf32, #tpu.memory_space<vmem>>, vector<1x1x14x14xf32>
    %900 = vector.shape_cast %899 : vector<1x1x14x14xf32> to vector<14x14xf32>
    %c7_395 = arith.constant 7 : index
    %901 = memref.load %arg1[%c7_395] : memref<81xf32, #tpu.memory_space<smem>>
    %902 = vector.broadcast %901 : f32 to vector<14x14xf32>
    %903 = arith.mulf %900, %902 : vector<14x14xf32>
    %904 = arith.addf %890, %903 : vector<14x14xf32>
    %c34_396 = arith.constant 34 : index
    %905 = memref.load %arg1[%c34_396] : memref<81xf32, #tpu.memory_space<smem>>
    %906 = vector.broadcast %905 : f32 to vector<14x14xf32>
    %907 = arith.mulf %900, %906 : vector<14x14xf32>
    %908 = arith.addf %894, %907 : vector<14x14xf32>
    %c61_397 = arith.constant 61 : index
    %909 = memref.load %arg1[%c61_397] : memref<81xf32, #tpu.memory_space<smem>>
    %910 = vector.broadcast %909 : f32 to vector<14x14xf32>
    %911 = arith.mulf %900, %910 : vector<14x14xf32>
    %912 = arith.addf %898, %911 : vector<14x14xf32>
    %c1_398 = arith.constant 1 : index
    %c0_399 = arith.constant 0 : index
    %c2_400 = arith.constant 2 : index
    %c2_401 = arith.constant 2 : index
    %913 = vector.load %arg0[%c1_398, %c0_399, %c2_400, %c2_401] : memref<2x3x16x16xf32, #tpu.memory_space<vmem>>, vector<1x1x14x14xf32>
    %914 = vector.shape_cast %913 : vector<1x1x14x14xf32> to vector<14x14xf32>
    %c8_402 = arith.constant 8 : index
    %915 = memref.load %arg1[%c8_402] : memref<81xf32, #tpu.memory_space<smem>>
    %916 = vector.broadcast %915 : f32 to vector<14x14xf32>
    %917 = arith.mulf %914, %916 : vector<14x14xf32>
    %918 = arith.addf %904, %917 : vector<14x14xf32>
    %c35_403 = arith.constant 35 : index
    %919 = memref.load %arg1[%c35_403] : memref<81xf32, #tpu.memory_space<smem>>
    %920 = vector.broadcast %919 : f32 to vector<14x14xf32>
    %921 = arith.mulf %914, %920 : vector<14x14xf32>
    %922 = arith.addf %908, %921 : vector<14x14xf32>
    %c62_404 = arith.constant 62 : index
    %923 = memref.load %arg1[%c62_404] : memref<81xf32, #tpu.memory_space<smem>>
    %924 = vector.broadcast %923 : f32 to vector<14x14xf32>
    %925 = arith.mulf %914, %924 : vector<14x14xf32>
    %926 = arith.addf %912, %925 : vector<14x14xf32>
    %c1_405 = arith.constant 1 : index
    %c1_406 = arith.constant 1 : index
    %c0_407 = arith.constant 0 : index
    %c0_408 = arith.constant 0 : index
    %927 = vector.load %arg0[%c1_405, %c1_406, %c0_407, %c0_408] : memref<2x3x16x16xf32, #tpu.memory_space<vmem>>, vector<1x1x14x14xf32>
    %928 = vector.shape_cast %927 : vector<1x1x14x14xf32> to vector<14x14xf32>
    %c9_409 = arith.constant 9 : index
    %929 = memref.load %arg1[%c9_409] : memref<81xf32, #tpu.memory_space<smem>>
    %930 = vector.broadcast %929 : f32 to vector<14x14xf32>
    %931 = arith.mulf %928, %930 : vector<14x14xf32>
    %932 = arith.addf %918, %931 : vector<14x14xf32>
    %c36_410 = arith.constant 36 : index
    %933 = memref.load %arg1[%c36_410] : memref<81xf32, #tpu.memory_space<smem>>
    %934 = vector.broadcast %933 : f32 to vector<14x14xf32>
    %935 = arith.mulf %928, %934 : vector<14x14xf32>
    %936 = arith.addf %922, %935 : vector<14x14xf32>
    %c63_411 = arith.constant 63 : index
    %937 = memref.load %arg1[%c63_411] : memref<81xf32, #tpu.memory_space<smem>>
    %938 = vector.broadcast %937 : f32 to vector<14x14xf32>
    %939 = arith.mulf %928, %938 : vector<14x14xf32>
    %940 = arith.addf %926, %939 : vector<14x14xf32>
    %c1_412 = arith.constant 1 : index
    %c1_413 = arith.constant 1 : index
    %c0_414 = arith.constant 0 : index
    %c1_415 = arith.constant 1 : index
    %941 = vector.load %arg0[%c1_412, %c1_413, %c0_414, %c1_415] : memref<2x3x16x16xf32, #tpu.memory_space<vmem>>, vector<1x1x14x14xf32>
    %942 = vector.shape_cast %941 : vector<1x1x14x14xf32> to vector<14x14xf32>
    %c10_416 = arith.constant 10 : index
    %943 = memref.load %arg1[%c10_416] : memref<81xf32, #tpu.memory_space<smem>>
    %944 = vector.broadcast %943 : f32 to vector<14x14xf32>
    %945 = arith.mulf %942, %944 : vector<14x14xf32>
    %946 = arith.addf %932, %945 : vector<14x14xf32>
    %c37_417 = arith.constant 37 : index
    %947 = memref.load %arg1[%c37_417] : memref<81xf32, #tpu.memory_space<smem>>
    %948 = vector.broadcast %947 : f32 to vector<14x14xf32>
    %949 = arith.mulf %942, %948 : vector<14x14xf32>
    %950 = arith.addf %936, %949 : vector<14x14xf32>
    %c64_418 = arith.constant 64 : index
    %951 = memref.load %arg1[%c64_418] : memref<81xf32, #tpu.memory_space<smem>>
    %952 = vector.broadcast %951 : f32 to vector<14x14xf32>
    %953 = arith.mulf %942, %952 : vector<14x14xf32>
    %954 = arith.addf %940, %953 : vector<14x14xf32>
    %c1_419 = arith.constant 1 : index
    %c1_420 = arith.constant 1 : index
    %c0_421 = arith.constant 0 : index
    %c2_422 = arith.constant 2 : index
    %955 = vector.load %arg0[%c1_419, %c1_420, %c0_421, %c2_422] : memref<2x3x16x16xf32, #tpu.memory_space<vmem>>, vector<1x1x14x14xf32>
    %956 = vector.shape_cast %955 : vector<1x1x14x14xf32> to vector<14x14xf32>
    %c11_423 = arith.constant 11 : index
    %957 = memref.load %arg1[%c11_423] : memref<81xf32, #tpu.memory_space<smem>>
    %958 = vector.broadcast %957 : f32 to vector<14x14xf32>
    %959 = arith.mulf %956, %958 : vector<14x14xf32>
    %960 = arith.addf %946, %959 : vector<14x14xf32>
    %c38_424 = arith.constant 38 : index
    %961 = memref.load %arg1[%c38_424] : memref<81xf32, #tpu.memory_space<smem>>
    %962 = vector.broadcast %961 : f32 to vector<14x14xf32>
    %963 = arith.mulf %956, %962 : vector<14x14xf32>
    %964 = arith.addf %950, %963 : vector<14x14xf32>
    %c65_425 = arith.constant 65 : index
    %965 = memref.load %arg1[%c65_425] : memref<81xf32, #tpu.memory_space<smem>>
    %966 = vector.broadcast %965 : f32 to vector<14x14xf32>
    %967 = arith.mulf %956, %966 : vector<14x14xf32>
    %968 = arith.addf %954, %967 : vector<14x14xf32>
    %c1_426 = arith.constant 1 : index
    %c1_427 = arith.constant 1 : index
    %c1_428 = arith.constant 1 : index
    %c0_429 = arith.constant 0 : index
    %969 = vector.load %arg0[%c1_426, %c1_427, %c1_428, %c0_429] : memref<2x3x16x16xf32, #tpu.memory_space<vmem>>, vector<1x1x14x14xf32>
    %970 = vector.shape_cast %969 : vector<1x1x14x14xf32> to vector<14x14xf32>
    %c12_430 = arith.constant 12 : index
    %971 = memref.load %arg1[%c12_430] : memref<81xf32, #tpu.memory_space<smem>>
    %972 = vector.broadcast %971 : f32 to vector<14x14xf32>
    %973 = arith.mulf %970, %972 : vector<14x14xf32>
    %974 = arith.addf %960, %973 : vector<14x14xf32>
    %c39_431 = arith.constant 39 : index
    %975 = memref.load %arg1[%c39_431] : memref<81xf32, #tpu.memory_space<smem>>
    %976 = vector.broadcast %975 : f32 to vector<14x14xf32>
    %977 = arith.mulf %970, %976 : vector<14x14xf32>
    %978 = arith.addf %964, %977 : vector<14x14xf32>
    %c66_432 = arith.constant 66 : index
    %979 = memref.load %arg1[%c66_432] : memref<81xf32, #tpu.memory_space<smem>>
    %980 = vector.broadcast %979 : f32 to vector<14x14xf32>
    %981 = arith.mulf %970, %980 : vector<14x14xf32>
    %982 = arith.addf %968, %981 : vector<14x14xf32>
    %c1_433 = arith.constant 1 : index
    %c1_434 = arith.constant 1 : index
    %c1_435 = arith.constant 1 : index
    %c1_436 = arith.constant 1 : index
    %983 = vector.load %arg0[%c1_433, %c1_434, %c1_435, %c1_436] : memref<2x3x16x16xf32, #tpu.memory_space<vmem>>, vector<1x1x14x14xf32>
    %984 = vector.shape_cast %983 : vector<1x1x14x14xf32> to vector<14x14xf32>
    %c13_437 = arith.constant 13 : index
    %985 = memref.load %arg1[%c13_437] : memref<81xf32, #tpu.memory_space<smem>>
    %986 = vector.broadcast %985 : f32 to vector<14x14xf32>
    %987 = arith.mulf %984, %986 : vector<14x14xf32>
    %988 = arith.addf %974, %987 : vector<14x14xf32>
    %c40_438 = arith.constant 40 : index
    %989 = memref.load %arg1[%c40_438] : memref<81xf32, #tpu.memory_space<smem>>
    %990 = vector.broadcast %989 : f32 to vector<14x14xf32>
    %991 = arith.mulf %984, %990 : vector<14x14xf32>
    %992 = arith.addf %978, %991 : vector<14x14xf32>
    %c67_439 = arith.constant 67 : index
    %993 = memref.load %arg1[%c67_439] : memref<81xf32, #tpu.memory_space<smem>>
    %994 = vector.broadcast %993 : f32 to vector<14x14xf32>
    %995 = arith.mulf %984, %994 : vector<14x14xf32>
    %996 = arith.addf %982, %995 : vector<14x14xf32>
    %c1_440 = arith.constant 1 : index
    %c1_441 = arith.constant 1 : index
    %c1_442 = arith.constant 1 : index
    %c2_443 = arith.constant 2 : index
    %997 = vector.load %arg0[%c1_440, %c1_441, %c1_442, %c2_443] : memref<2x3x16x16xf32, #tpu.memory_space<vmem>>, vector<1x1x14x14xf32>
    %998 = vector.shape_cast %997 : vector<1x1x14x14xf32> to vector<14x14xf32>
    %c14_444 = arith.constant 14 : index
    %999 = memref.load %arg1[%c14_444] : memref<81xf32, #tpu.memory_space<smem>>
    %1000 = vector.broadcast %999 : f32 to vector<14x14xf32>
    %1001 = arith.mulf %998, %1000 : vector<14x14xf32>
    %1002 = arith.addf %988, %1001 : vector<14x14xf32>
    %c41_445 = arith.constant 41 : index
    %1003 = memref.load %arg1[%c41_445] : memref<81xf32, #tpu.memory_space<smem>>
    %1004 = vector.broadcast %1003 : f32 to vector<14x14xf32>
    %1005 = arith.mulf %998, %1004 : vector<14x14xf32>
    %1006 = arith.addf %992, %1005 : vector<14x14xf32>
    %c68_446 = arith.constant 68 : index
    %1007 = memref.load %arg1[%c68_446] : memref<81xf32, #tpu.memory_space<smem>>
    %1008 = vector.broadcast %1007 : f32 to vector<14x14xf32>
    %1009 = arith.mulf %998, %1008 : vector<14x14xf32>
    %1010 = arith.addf %996, %1009 : vector<14x14xf32>
    %c1_447 = arith.constant 1 : index
    %c1_448 = arith.constant 1 : index
    %c2_449 = arith.constant 2 : index
    %c0_450 = arith.constant 0 : index
    %1011 = vector.load %arg0[%c1_447, %c1_448, %c2_449, %c0_450] : memref<2x3x16x16xf32, #tpu.memory_space<vmem>>, vector<1x1x14x14xf32>
    %1012 = vector.shape_cast %1011 : vector<1x1x14x14xf32> to vector<14x14xf32>
    %c15_451 = arith.constant 15 : index
    %1013 = memref.load %arg1[%c15_451] : memref<81xf32, #tpu.memory_space<smem>>
    %1014 = vector.broadcast %1013 : f32 to vector<14x14xf32>
    %1015 = arith.mulf %1012, %1014 : vector<14x14xf32>
    %1016 = arith.addf %1002, %1015 : vector<14x14xf32>
    %c42_452 = arith.constant 42 : index
    %1017 = memref.load %arg1[%c42_452] : memref<81xf32, #tpu.memory_space<smem>>
    %1018 = vector.broadcast %1017 : f32 to vector<14x14xf32>
    %1019 = arith.mulf %1012, %1018 : vector<14x14xf32>
    %1020 = arith.addf %1006, %1019 : vector<14x14xf32>
    %c69_453 = arith.constant 69 : index
    %1021 = memref.load %arg1[%c69_453] : memref<81xf32, #tpu.memory_space<smem>>
    %1022 = vector.broadcast %1021 : f32 to vector<14x14xf32>
    %1023 = arith.mulf %1012, %1022 : vector<14x14xf32>
    %1024 = arith.addf %1010, %1023 : vector<14x14xf32>
    %c1_454 = arith.constant 1 : index
    %c1_455 = arith.constant 1 : index
    %c2_456 = arith.constant 2 : index
    %c1_457 = arith.constant 1 : index
    %1025 = vector.load %arg0[%c1_454, %c1_455, %c2_456, %c1_457] : memref<2x3x16x16xf32, #tpu.memory_space<vmem>>, vector<1x1x14x14xf32>
    %1026 = vector.shape_cast %1025 : vector<1x1x14x14xf32> to vector<14x14xf32>
    %c16_458 = arith.constant 16 : index
    %1027 = memref.load %arg1[%c16_458] : memref<81xf32, #tpu.memory_space<smem>>
    %1028 = vector.broadcast %1027 : f32 to vector<14x14xf32>
    %1029 = arith.mulf %1026, %1028 : vector<14x14xf32>
    %1030 = arith.addf %1016, %1029 : vector<14x14xf32>
    %c43_459 = arith.constant 43 : index
    %1031 = memref.load %arg1[%c43_459] : memref<81xf32, #tpu.memory_space<smem>>
    %1032 = vector.broadcast %1031 : f32 to vector<14x14xf32>
    %1033 = arith.mulf %1026, %1032 : vector<14x14xf32>
    %1034 = arith.addf %1020, %1033 : vector<14x14xf32>
    %c70_460 = arith.constant 70 : index
    %1035 = memref.load %arg1[%c70_460] : memref<81xf32, #tpu.memory_space<smem>>
    %1036 = vector.broadcast %1035 : f32 to vector<14x14xf32>
    %1037 = arith.mulf %1026, %1036 : vector<14x14xf32>
    %1038 = arith.addf %1024, %1037 : vector<14x14xf32>
    %c1_461 = arith.constant 1 : index
    %c1_462 = arith.constant 1 : index
    %c2_463 = arith.constant 2 : index
    %c2_464 = arith.constant 2 : index
    %1039 = vector.load %arg0[%c1_461, %c1_462, %c2_463, %c2_464] : memref<2x3x16x16xf32, #tpu.memory_space<vmem>>, vector<1x1x14x14xf32>
    %1040 = vector.shape_cast %1039 : vector<1x1x14x14xf32> to vector<14x14xf32>
    %c17_465 = arith.constant 17 : index
    %1041 = memref.load %arg1[%c17_465] : memref<81xf32, #tpu.memory_space<smem>>
    %1042 = vector.broadcast %1041 : f32 to vector<14x14xf32>
    %1043 = arith.mulf %1040, %1042 : vector<14x14xf32>
    %1044 = arith.addf %1030, %1043 : vector<14x14xf32>
    %c44_466 = arith.constant 44 : index
    %1045 = memref.load %arg1[%c44_466] : memref<81xf32, #tpu.memory_space<smem>>
    %1046 = vector.broadcast %1045 : f32 to vector<14x14xf32>
    %1047 = arith.mulf %1040, %1046 : vector<14x14xf32>
    %1048 = arith.addf %1034, %1047 : vector<14x14xf32>
    %c71_467 = arith.constant 71 : index
    %1049 = memref.load %arg1[%c71_467] : memref<81xf32, #tpu.memory_space<smem>>
    %1050 = vector.broadcast %1049 : f32 to vector<14x14xf32>
    %1051 = arith.mulf %1040, %1050 : vector<14x14xf32>
    %1052 = arith.addf %1038, %1051 : vector<14x14xf32>
    %c1_468 = arith.constant 1 : index
    %c2_469 = arith.constant 2 : index
    %c0_470 = arith.constant 0 : index
    %c0_471 = arith.constant 0 : index
    %1053 = vector.load %arg0[%c1_468, %c2_469, %c0_470, %c0_471] : memref<2x3x16x16xf32, #tpu.memory_space<vmem>>, vector<1x1x14x14xf32>
    %1054 = vector.shape_cast %1053 : vector<1x1x14x14xf32> to vector<14x14xf32>
    %c18_472 = arith.constant 18 : index
    %1055 = memref.load %arg1[%c18_472] : memref<81xf32, #tpu.memory_space<smem>>
    %1056 = vector.broadcast %1055 : f32 to vector<14x14xf32>
    %1057 = arith.mulf %1054, %1056 : vector<14x14xf32>
    %1058 = arith.addf %1044, %1057 : vector<14x14xf32>
    %c45_473 = arith.constant 45 : index
    %1059 = memref.load %arg1[%c45_473] : memref<81xf32, #tpu.memory_space<smem>>
    %1060 = vector.broadcast %1059 : f32 to vector<14x14xf32>
    %1061 = arith.mulf %1054, %1060 : vector<14x14xf32>
    %1062 = arith.addf %1048, %1061 : vector<14x14xf32>
    %c72_474 = arith.constant 72 : index
    %1063 = memref.load %arg1[%c72_474] : memref<81xf32, #tpu.memory_space<smem>>
    %1064 = vector.broadcast %1063 : f32 to vector<14x14xf32>
    %1065 = arith.mulf %1054, %1064 : vector<14x14xf32>
    %1066 = arith.addf %1052, %1065 : vector<14x14xf32>
    %c1_475 = arith.constant 1 : index
    %c2_476 = arith.constant 2 : index
    %c0_477 = arith.constant 0 : index
    %c1_478 = arith.constant 1 : index
    %1067 = vector.load %arg0[%c1_475, %c2_476, %c0_477, %c1_478] : memref<2x3x16x16xf32, #tpu.memory_space<vmem>>, vector<1x1x14x14xf32>
    %1068 = vector.shape_cast %1067 : vector<1x1x14x14xf32> to vector<14x14xf32>
    %c19_479 = arith.constant 19 : index
    %1069 = memref.load %arg1[%c19_479] : memref<81xf32, #tpu.memory_space<smem>>
    %1070 = vector.broadcast %1069 : f32 to vector<14x14xf32>
    %1071 = arith.mulf %1068, %1070 : vector<14x14xf32>
    %1072 = arith.addf %1058, %1071 : vector<14x14xf32>
    %c46_480 = arith.constant 46 : index
    %1073 = memref.load %arg1[%c46_480] : memref<81xf32, #tpu.memory_space<smem>>
    %1074 = vector.broadcast %1073 : f32 to vector<14x14xf32>
    %1075 = arith.mulf %1068, %1074 : vector<14x14xf32>
    %1076 = arith.addf %1062, %1075 : vector<14x14xf32>
    %c73_481 = arith.constant 73 : index
    %1077 = memref.load %arg1[%c73_481] : memref<81xf32, #tpu.memory_space<smem>>
    %1078 = vector.broadcast %1077 : f32 to vector<14x14xf32>
    %1079 = arith.mulf %1068, %1078 : vector<14x14xf32>
    %1080 = arith.addf %1066, %1079 : vector<14x14xf32>
    %c1_482 = arith.constant 1 : index
    %c2_483 = arith.constant 2 : index
    %c0_484 = arith.constant 0 : index
    %c2_485 = arith.constant 2 : index
    %1081 = vector.load %arg0[%c1_482, %c2_483, %c0_484, %c2_485] : memref<2x3x16x16xf32, #tpu.memory_space<vmem>>, vector<1x1x14x14xf32>
    %1082 = vector.shape_cast %1081 : vector<1x1x14x14xf32> to vector<14x14xf32>
    %c20_486 = arith.constant 20 : index
    %1083 = memref.load %arg1[%c20_486] : memref<81xf32, #tpu.memory_space<smem>>
    %1084 = vector.broadcast %1083 : f32 to vector<14x14xf32>
    %1085 = arith.mulf %1082, %1084 : vector<14x14xf32>
    %1086 = arith.addf %1072, %1085 : vector<14x14xf32>
    %c47_487 = arith.constant 47 : index
    %1087 = memref.load %arg1[%c47_487] : memref<81xf32, #tpu.memory_space<smem>>
    %1088 = vector.broadcast %1087 : f32 to vector<14x14xf32>
    %1089 = arith.mulf %1082, %1088 : vector<14x14xf32>
    %1090 = arith.addf %1076, %1089 : vector<14x14xf32>
    %c74_488 = arith.constant 74 : index
    %1091 = memref.load %arg1[%c74_488] : memref<81xf32, #tpu.memory_space<smem>>
    %1092 = vector.broadcast %1091 : f32 to vector<14x14xf32>
    %1093 = arith.mulf %1082, %1092 : vector<14x14xf32>
    %1094 = arith.addf %1080, %1093 : vector<14x14xf32>
    %c1_489 = arith.constant 1 : index
    %c2_490 = arith.constant 2 : index
    %c1_491 = arith.constant 1 : index
    %c0_492 = arith.constant 0 : index
    %1095 = vector.load %arg0[%c1_489, %c2_490, %c1_491, %c0_492] : memref<2x3x16x16xf32, #tpu.memory_space<vmem>>, vector<1x1x14x14xf32>
    %1096 = vector.shape_cast %1095 : vector<1x1x14x14xf32> to vector<14x14xf32>
    %c21_493 = arith.constant 21 : index
    %1097 = memref.load %arg1[%c21_493] : memref<81xf32, #tpu.memory_space<smem>>
    %1098 = vector.broadcast %1097 : f32 to vector<14x14xf32>
    %1099 = arith.mulf %1096, %1098 : vector<14x14xf32>
    %1100 = arith.addf %1086, %1099 : vector<14x14xf32>
    %c48_494 = arith.constant 48 : index
    %1101 = memref.load %arg1[%c48_494] : memref<81xf32, #tpu.memory_space<smem>>
    %1102 = vector.broadcast %1101 : f32 to vector<14x14xf32>
    %1103 = arith.mulf %1096, %1102 : vector<14x14xf32>
    %1104 = arith.addf %1090, %1103 : vector<14x14xf32>
    %c75_495 = arith.constant 75 : index
    %1105 = memref.load %arg1[%c75_495] : memref<81xf32, #tpu.memory_space<smem>>
    %1106 = vector.broadcast %1105 : f32 to vector<14x14xf32>
    %1107 = arith.mulf %1096, %1106 : vector<14x14xf32>
    %1108 = arith.addf %1094, %1107 : vector<14x14xf32>
    %c1_496 = arith.constant 1 : index
    %c2_497 = arith.constant 2 : index
    %c1_498 = arith.constant 1 : index
    %c1_499 = arith.constant 1 : index
    %1109 = vector.load %arg0[%c1_496, %c2_497, %c1_498, %c1_499] : memref<2x3x16x16xf32, #tpu.memory_space<vmem>>, vector<1x1x14x14xf32>
    %1110 = vector.shape_cast %1109 : vector<1x1x14x14xf32> to vector<14x14xf32>
    %c22_500 = arith.constant 22 : index
    %1111 = memref.load %arg1[%c22_500] : memref<81xf32, #tpu.memory_space<smem>>
    %1112 = vector.broadcast %1111 : f32 to vector<14x14xf32>
    %1113 = arith.mulf %1110, %1112 : vector<14x14xf32>
    %1114 = arith.addf %1100, %1113 : vector<14x14xf32>
    %c49_501 = arith.constant 49 : index
    %1115 = memref.load %arg1[%c49_501] : memref<81xf32, #tpu.memory_space<smem>>
    %1116 = vector.broadcast %1115 : f32 to vector<14x14xf32>
    %1117 = arith.mulf %1110, %1116 : vector<14x14xf32>
    %1118 = arith.addf %1104, %1117 : vector<14x14xf32>
    %c76_502 = arith.constant 76 : index
    %1119 = memref.load %arg1[%c76_502] : memref<81xf32, #tpu.memory_space<smem>>
    %1120 = vector.broadcast %1119 : f32 to vector<14x14xf32>
    %1121 = arith.mulf %1110, %1120 : vector<14x14xf32>
    %1122 = arith.addf %1108, %1121 : vector<14x14xf32>
    %c1_503 = arith.constant 1 : index
    %c2_504 = arith.constant 2 : index
    %c1_505 = arith.constant 1 : index
    %c2_506 = arith.constant 2 : index
    %1123 = vector.load %arg0[%c1_503, %c2_504, %c1_505, %c2_506] : memref<2x3x16x16xf32, #tpu.memory_space<vmem>>, vector<1x1x14x14xf32>
    %1124 = vector.shape_cast %1123 : vector<1x1x14x14xf32> to vector<14x14xf32>
    %c23_507 = arith.constant 23 : index
    %1125 = memref.load %arg1[%c23_507] : memref<81xf32, #tpu.memory_space<smem>>
    %1126 = vector.broadcast %1125 : f32 to vector<14x14xf32>
    %1127 = arith.mulf %1124, %1126 : vector<14x14xf32>
    %1128 = arith.addf %1114, %1127 : vector<14x14xf32>
    %c50_508 = arith.constant 50 : index
    %1129 = memref.load %arg1[%c50_508] : memref<81xf32, #tpu.memory_space<smem>>
    %1130 = vector.broadcast %1129 : f32 to vector<14x14xf32>
    %1131 = arith.mulf %1124, %1130 : vector<14x14xf32>
    %1132 = arith.addf %1118, %1131 : vector<14x14xf32>
    %c77_509 = arith.constant 77 : index
    %1133 = memref.load %arg1[%c77_509] : memref<81xf32, #tpu.memory_space<smem>>
    %1134 = vector.broadcast %1133 : f32 to vector<14x14xf32>
    %1135 = arith.mulf %1124, %1134 : vector<14x14xf32>
    %1136 = arith.addf %1122, %1135 : vector<14x14xf32>
    %c1_510 = arith.constant 1 : index
    %c2_511 = arith.constant 2 : index
    %c2_512 = arith.constant 2 : index
    %c0_513 = arith.constant 0 : index
    %1137 = vector.load %arg0[%c1_510, %c2_511, %c2_512, %c0_513] : memref<2x3x16x16xf32, #tpu.memory_space<vmem>>, vector<1x1x14x14xf32>
    %1138 = vector.shape_cast %1137 : vector<1x1x14x14xf32> to vector<14x14xf32>
    %c24_514 = arith.constant 24 : index
    %1139 = memref.load %arg1[%c24_514] : memref<81xf32, #tpu.memory_space<smem>>
    %1140 = vector.broadcast %1139 : f32 to vector<14x14xf32>
    %1141 = arith.mulf %1138, %1140 : vector<14x14xf32>
    %1142 = arith.addf %1128, %1141 : vector<14x14xf32>
    %c51_515 = arith.constant 51 : index
    %1143 = memref.load %arg1[%c51_515] : memref<81xf32, #tpu.memory_space<smem>>
    %1144 = vector.broadcast %1143 : f32 to vector<14x14xf32>
    %1145 = arith.mulf %1138, %1144 : vector<14x14xf32>
    %1146 = arith.addf %1132, %1145 : vector<14x14xf32>
    %c78_516 = arith.constant 78 : index
    %1147 = memref.load %arg1[%c78_516] : memref<81xf32, #tpu.memory_space<smem>>
    %1148 = vector.broadcast %1147 : f32 to vector<14x14xf32>
    %1149 = arith.mulf %1138, %1148 : vector<14x14xf32>
    %1150 = arith.addf %1136, %1149 : vector<14x14xf32>
    %c1_517 = arith.constant 1 : index
    %c2_518 = arith.constant 2 : index
    %c2_519 = arith.constant 2 : index
    %c1_520 = arith.constant 1 : index
    %1151 = vector.load %arg0[%c1_517, %c2_518, %c2_519, %c1_520] : memref<2x3x16x16xf32, #tpu.memory_space<vmem>>, vector<1x1x14x14xf32>
    %1152 = vector.shape_cast %1151 : vector<1x1x14x14xf32> to vector<14x14xf32>
    %c25_521 = arith.constant 25 : index
    %1153 = memref.load %arg1[%c25_521] : memref<81xf32, #tpu.memory_space<smem>>
    %1154 = vector.broadcast %1153 : f32 to vector<14x14xf32>
    %1155 = arith.mulf %1152, %1154 : vector<14x14xf32>
    %1156 = arith.addf %1142, %1155 : vector<14x14xf32>
    %c52_522 = arith.constant 52 : index
    %1157 = memref.load %arg1[%c52_522] : memref<81xf32, #tpu.memory_space<smem>>
    %1158 = vector.broadcast %1157 : f32 to vector<14x14xf32>
    %1159 = arith.mulf %1152, %1158 : vector<14x14xf32>
    %1160 = arith.addf %1146, %1159 : vector<14x14xf32>
    %c79_523 = arith.constant 79 : index
    %1161 = memref.load %arg1[%c79_523] : memref<81xf32, #tpu.memory_space<smem>>
    %1162 = vector.broadcast %1161 : f32 to vector<14x14xf32>
    %1163 = arith.mulf %1152, %1162 : vector<14x14xf32>
    %1164 = arith.addf %1150, %1163 : vector<14x14xf32>
    %c1_524 = arith.constant 1 : index
    %c2_525 = arith.constant 2 : index
    %c2_526 = arith.constant 2 : index
    %c2_527 = arith.constant 2 : index
    %1165 = vector.load %arg0[%c1_524, %c2_525, %c2_526, %c2_527] : memref<2x3x16x16xf32, #tpu.memory_space<vmem>>, vector<1x1x14x14xf32>
    %1166 = vector.shape_cast %1165 : vector<1x1x14x14xf32> to vector<14x14xf32>
    %c26_528 = arith.constant 26 : index
    %1167 = memref.load %arg1[%c26_528] : memref<81xf32, #tpu.memory_space<smem>>
    %1168 = vector.broadcast %1167 : f32 to vector<14x14xf32>
    %1169 = arith.mulf %1166, %1168 : vector<14x14xf32>
    %1170 = arith.addf %1156, %1169 : vector<14x14xf32>
    %c53_529 = arith.constant 53 : index
    %1171 = memref.load %arg1[%c53_529] : memref<81xf32, #tpu.memory_space<smem>>
    %1172 = vector.broadcast %1171 : f32 to vector<14x14xf32>
    %1173 = arith.mulf %1166, %1172 : vector<14x14xf32>
    %1174 = arith.addf %1160, %1173 : vector<14x14xf32>
    %c80_530 = arith.constant 80 : index
    %1175 = memref.load %arg1[%c80_530] : memref<81xf32, #tpu.memory_space<smem>>
    %1176 = vector.broadcast %1175 : f32 to vector<14x14xf32>
    %1177 = arith.mulf %1166, %1176 : vector<14x14xf32>
    %1178 = arith.addf %1164, %1177 : vector<14x14xf32>
    %c1_531 = arith.constant 1 : index
    %c0_532 = arith.constant 0 : index
    %c0_533 = arith.constant 0 : index
    %c0_534 = arith.constant 0 : index
    %1179 = vector.load %arg6[%c1_531, %c0_532, %c0_533, %c0_534] : memref<2x3x14x14xf32, #tpu.memory_space<vmem>>, vector<1x1x14x14xf32>
    %1180 = vector.shape_cast %1179 : vector<1x1x14x14xf32> to vector<14x14xf32>
    %1181 = vector.shape_cast %1170 : vector<14x14xf32> to vector<1x1x14x14xf32>
    tpu.vector_store %arg6[%c1_531, %c0_532, %c0_533, %c0_534], %1181 {strides = array<i32>} : memref<2x3x14x14xf32, #tpu.memory_space<vmem>>, vector<1x1x14x14xf32>,
    %c1_535 = arith.constant 1 : index
    %c1_536 = arith.constant 1 : index
    %c0_537 = arith.constant 0 : index
    %c0_538 = arith.constant 0 : index
    %1182 = vector.load %arg6[%c1_535, %c1_536, %c0_537, %c0_538] : memref<2x3x14x14xf32, #tpu.memory_space<vmem>>, vector<1x1x14x14xf32>
    %1183 = vector.shape_cast %1182 : vector<1x1x14x14xf32> to vector<14x14xf32>
    %1184 = vector.shape_cast %1174 : vector<14x14xf32> to vector<1x1x14x14xf32>
    tpu.vector_store %arg6[%c1_535, %c1_536, %c0_537, %c0_538], %1184 {strides = array<i32>} : memref<2x3x14x14xf32, #tpu.memory_space<vmem>>, vector<1x1x14x14xf32>,
    %c1_539 = arith.constant 1 : index
    %c2_540 = arith.constant 2 : index
    %c0_541 = arith.constant 0 : index
    %c0_542 = arith.constant 0 : index
    %1185 = vector.load %arg6[%c1_539, %c2_540, %c0_541, %c0_542] : memref<2x3x14x14xf32, #tpu.memory_space<vmem>>, vector<1x1x14x14xf32>
    %1186 = vector.shape_cast %1185 : vector<1x1x14x14xf32> to vector<14x14xf32>
    %1187 = vector.shape_cast %1178 : vector<14x14xf32> to vector<1x1x14x14xf32>
    tpu.vector_store %arg6[%c1_539, %c2_540, %c0_541, %c0_542], %1187 {strides = array<i32>} : memref<2x3x14x14xf32, #tpu.memory_space<vmem>>, vector<1x1x14x14xf32>,
    %c0_543 = arith.constant 0 : index
    %1188 = memref.load %arg4[%c0_543] : memref<3xf32, #tpu.memory_space<smem>>
    %1189 = vector.broadcast %1188 : f32 to vector<12x12xf32>
    %c1_544 = arith.constant 1 : index
    %1190 = memref.load %arg4[%c1_544] : memref<3xf32, #tpu.memory_space<smem>>
    %1191 = vector.broadcast %1190 : f32 to vector<12x12xf32>
    %c2_545 = arith.constant 2 : index
    %1192 = memref.load %arg4[%c2_545] : memref<3xf32, #tpu.memory_space<smem>>
    %1193 = vector.broadcast %1192 : f32 to vector<12x12xf32>
    %c1_546 = arith.constant 1 : index
    %c0_547 = arith.constant 0 : index
    %c0_548 = arith.constant 0 : index
    %c0_549 = arith.constant 0 : index
    %1194 = vector.load %arg6[%c1_546, %c0_547, %c0_548, %c0_549] : memref<2x3x14x14xf32, #tpu.memory_space<vmem>>, vector<1x1x12x12xf32>
    %1195 = vector.shape_cast %1194 : vector<1x1x12x12xf32> to vector<12x12xf32>
    %c0_550 = arith.constant 0 : index
    %1196 = memref.load %arg3[%c0_550] : memref<81xf32, #tpu.memory_space<smem>>
    %1197 = vector.broadcast %1196 : f32 to vector<12x12xf32>
    %1198 = arith.mulf %1195, %1197 : vector<12x12xf32>
    %1199 = arith.addf %1189, %1198 : vector<12x12xf32>
    %c27_551 = arith.constant 27 : index
    %1200 = memref.load %arg3[%c27_551] : memref<81xf32, #tpu.memory_space<smem>>
    %1201 = vector.broadcast %1200 : f32 to vector<12x12xf32>
    %1202 = arith.mulf %1195, %1201 : vector<12x12xf32>
    %1203 = arith.addf %1191, %1202 : vector<12x12xf32>
    %c54_552 = arith.constant 54 : index
    %1204 = memref.load %arg3[%c54_552] : memref<81xf32, #tpu.memory_space<smem>>
    %1205 = vector.broadcast %1204 : f32 to vector<12x12xf32>
    %1206 = arith.mulf %1195, %1205 : vector<12x12xf32>
    %1207 = arith.addf %1193, %1206 : vector<12x12xf32>
    %c1_553 = arith.constant 1 : index
    %c0_554 = arith.constant 0 : index
    %c0_555 = arith.constant 0 : index
    %c1_556 = arith.constant 1 : index
    %1208 = vector.load %arg6[%c1_553, %c0_554, %c0_555, %c1_556] : memref<2x3x14x14xf32, #tpu.memory_space<vmem>>, vector<1x1x12x12xf32>
    %1209 = vector.shape_cast %1208 : vector<1x1x12x12xf32> to vector<12x12xf32>
    %c1_557 = arith.constant 1 : index
    %1210 = memref.load %arg3[%c1_557] : memref<81xf32, #tpu.memory_space<smem>>
    %1211 = vector.broadcast %1210 : f32 to vector<12x12xf32>
    %1212 = arith.mulf %1209, %1211 : vector<12x12xf32>
    %1213 = arith.addf %1199, %1212 : vector<12x12xf32>
    %c28_558 = arith.constant 28 : index
    %1214 = memref.load %arg3[%c28_558] : memref<81xf32, #tpu.memory_space<smem>>
    %1215 = vector.broadcast %1214 : f32 to vector<12x12xf32>
    %1216 = arith.mulf %1209, %1215 : vector<12x12xf32>
    %1217 = arith.addf %1203, %1216 : vector<12x12xf32>
    %c55_559 = arith.constant 55 : index
    %1218 = memref.load %arg3[%c55_559] : memref<81xf32, #tpu.memory_space<smem>>
    %1219 = vector.broadcast %1218 : f32 to vector<12x12xf32>
    %1220 = arith.mulf %1209, %1219 : vector<12x12xf32>
    %1221 = arith.addf %1207, %1220 : vector<12x12xf32>
    %c1_560 = arith.constant 1 : index
    %c0_561 = arith.constant 0 : index
    %c0_562 = arith.constant 0 : index
    %c2_563 = arith.constant 2 : index
    %1222 = vector.load %arg6[%c1_560, %c0_561, %c0_562, %c2_563] : memref<2x3x14x14xf32, #tpu.memory_space<vmem>>, vector<1x1x12x12xf32>
    %1223 = vector.shape_cast %1222 : vector<1x1x12x12xf32> to vector<12x12xf32>
    %c2_564 = arith.constant 2 : index
    %1224 = memref.load %arg3[%c2_564] : memref<81xf32, #tpu.memory_space<smem>>
    %1225 = vector.broadcast %1224 : f32 to vector<12x12xf32>
    %1226 = arith.mulf %1223, %1225 : vector<12x12xf32>
    %1227 = arith.addf %1213, %1226 : vector<12x12xf32>
    %c29_565 = arith.constant 29 : index
    %1228 = memref.load %arg3[%c29_565] : memref<81xf32, #tpu.memory_space<smem>>
    %1229 = vector.broadcast %1228 : f32 to vector<12x12xf32>
    %1230 = arith.mulf %1223, %1229 : vector<12x12xf32>
    %1231 = arith.addf %1217, %1230 : vector<12x12xf32>
    %c56_566 = arith.constant 56 : index
    %1232 = memref.load %arg3[%c56_566] : memref<81xf32, #tpu.memory_space<smem>>
    %1233 = vector.broadcast %1232 : f32 to vector<12x12xf32>
    %1234 = arith.mulf %1223, %1233 : vector<12x12xf32>
    %1235 = arith.addf %1221, %1234 : vector<12x12xf32>
    %c1_567 = arith.constant 1 : index
    %c0_568 = arith.constant 0 : index
    %c1_569 = arith.constant 1 : index
    %c0_570 = arith.constant 0 : index
    %1236 = vector.load %arg6[%c1_567, %c0_568, %c1_569, %c0_570] : memref<2x3x14x14xf32, #tpu.memory_space<vmem>>, vector<1x1x12x12xf32>
    %1237 = vector.shape_cast %1236 : vector<1x1x12x12xf32> to vector<12x12xf32>
    %c3_571 = arith.constant 3 : index
    %1238 = memref.load %arg3[%c3_571] : memref<81xf32, #tpu.memory_space<smem>>
    %1239 = vector.broadcast %1238 : f32 to vector<12x12xf32>
    %1240 = arith.mulf %1237, %1239 : vector<12x12xf32>
    %1241 = arith.addf %1227, %1240 : vector<12x12xf32>
    %c30_572 = arith.constant 30 : index
    %1242 = memref.load %arg3[%c30_572] : memref<81xf32, #tpu.memory_space<smem>>
    %1243 = vector.broadcast %1242 : f32 to vector<12x12xf32>
    %1244 = arith.mulf %1237, %1243 : vector<12x12xf32>
    %1245 = arith.addf %1231, %1244 : vector<12x12xf32>
    %c57_573 = arith.constant 57 : index
    %1246 = memref.load %arg3[%c57_573] : memref<81xf32, #tpu.memory_space<smem>>
    %1247 = vector.broadcast %1246 : f32 to vector<12x12xf32>
    %1248 = arith.mulf %1237, %1247 : vector<12x12xf32>
    %1249 = arith.addf %1235, %1248 : vector<12x12xf32>
    %c1_574 = arith.constant 1 : index
    %c0_575 = arith.constant 0 : index
    %c1_576 = arith.constant 1 : index
    %c1_577 = arith.constant 1 : index
    %1250 = vector.load %arg6[%c1_574, %c0_575, %c1_576, %c1_577] : memref<2x3x14x14xf32, #tpu.memory_space<vmem>>, vector<1x1x12x12xf32>
    %1251 = vector.shape_cast %1250 : vector<1x1x12x12xf32> to vector<12x12xf32>
    %c4_578 = arith.constant 4 : index
    %1252 = memref.load %arg3[%c4_578] : memref<81xf32, #tpu.memory_space<smem>>
    %1253 = vector.broadcast %1252 : f32 to vector<12x12xf32>
    %1254 = arith.mulf %1251, %1253 : vector<12x12xf32>
    %1255 = arith.addf %1241, %1254 : vector<12x12xf32>
    %c31_579 = arith.constant 31 : index
    %1256 = memref.load %arg3[%c31_579] : memref<81xf32, #tpu.memory_space<smem>>
    %1257 = vector.broadcast %1256 : f32 to vector<12x12xf32>
    %1258 = arith.mulf %1251, %1257 : vector<12x12xf32>
    %1259 = arith.addf %1245, %1258 : vector<12x12xf32>
    %c58_580 = arith.constant 58 : index
    %1260 = memref.load %arg3[%c58_580] : memref<81xf32, #tpu.memory_space<smem>>
    %1261 = vector.broadcast %1260 : f32 to vector<12x12xf32>
    %1262 = arith.mulf %1251, %1261 : vector<12x12xf32>
    %1263 = arith.addf %1249, %1262 : vector<12x12xf32>
    %c1_581 = arith.constant 1 : index
    %c0_582 = arith.constant 0 : index
    %c1_583 = arith.constant 1 : index
    %c2_584 = arith.constant 2 : index
    %1264 = vector.load %arg6[%c1_581, %c0_582, %c1_583, %c2_584] : memref<2x3x14x14xf32, #tpu.memory_space<vmem>>, vector<1x1x12x12xf32>
    %1265 = vector.shape_cast %1264 : vector<1x1x12x12xf32> to vector<12x12xf32>
    %c5_585 = arith.constant 5 : index
    %1266 = memref.load %arg3[%c5_585] : memref<81xf32, #tpu.memory_space<smem>>
    %1267 = vector.broadcast %1266 : f32 to vector<12x12xf32>
    %1268 = arith.mulf %1265, %1267 : vector<12x12xf32>
    %1269 = arith.addf %1255, %1268 : vector<12x12xf32>
    %c32_586 = arith.constant 32 : index
    %1270 = memref.load %arg3[%c32_586] : memref<81xf32, #tpu.memory_space<smem>>
    %1271 = vector.broadcast %1270 : f32 to vector<12x12xf32>
    %1272 = arith.mulf %1265, %1271 : vector<12x12xf32>
    %1273 = arith.addf %1259, %1272 : vector<12x12xf32>
    %c59_587 = arith.constant 59 : index
    %1274 = memref.load %arg3[%c59_587] : memref<81xf32, #tpu.memory_space<smem>>
    %1275 = vector.broadcast %1274 : f32 to vector<12x12xf32>
    %1276 = arith.mulf %1265, %1275 : vector<12x12xf32>
    %1277 = arith.addf %1263, %1276 : vector<12x12xf32>
    %c1_588 = arith.constant 1 : index
    %c0_589 = arith.constant 0 : index
    %c2_590 = arith.constant 2 : index
    %c0_591 = arith.constant 0 : index
    %1278 = vector.load %arg6[%c1_588, %c0_589, %c2_590, %c0_591] : memref<2x3x14x14xf32, #tpu.memory_space<vmem>>, vector<1x1x12x12xf32>
    %1279 = vector.shape_cast %1278 : vector<1x1x12x12xf32> to vector<12x12xf32>
    %c6_592 = arith.constant 6 : index
    %1280 = memref.load %arg3[%c6_592] : memref<81xf32, #tpu.memory_space<smem>>
    %1281 = vector.broadcast %1280 : f32 to vector<12x12xf32>
    %1282 = arith.mulf %1279, %1281 : vector<12x12xf32>
    %1283 = arith.addf %1269, %1282 : vector<12x12xf32>
    %c33_593 = arith.constant 33 : index
    %1284 = memref.load %arg3[%c33_593] : memref<81xf32, #tpu.memory_space<smem>>
    %1285 = vector.broadcast %1284 : f32 to vector<12x12xf32>
    %1286 = arith.mulf %1279, %1285 : vector<12x12xf32>
    %1287 = arith.addf %1273, %1286 : vector<12x12xf32>
    %c60_594 = arith.constant 60 : index
    %1288 = memref.load %arg3[%c60_594] : memref<81xf32, #tpu.memory_space<smem>>
    %1289 = vector.broadcast %1288 : f32 to vector<12x12xf32>
    %1290 = arith.mulf %1279, %1289 : vector<12x12xf32>
    %1291 = arith.addf %1277, %1290 : vector<12x12xf32>
    %c1_595 = arith.constant 1 : index
    %c0_596 = arith.constant 0 : index
    %c2_597 = arith.constant 2 : index
    %c1_598 = arith.constant 1 : index
    %1292 = vector.load %arg6[%c1_595, %c0_596, %c2_597, %c1_598] : memref<2x3x14x14xf32, #tpu.memory_space<vmem>>, vector<1x1x12x12xf32>
    %1293 = vector.shape_cast %1292 : vector<1x1x12x12xf32> to vector<12x12xf32>
    %c7_599 = arith.constant 7 : index
    %1294 = memref.load %arg3[%c7_599] : memref<81xf32, #tpu.memory_space<smem>>
    %1295 = vector.broadcast %1294 : f32 to vector<12x12xf32>
    %1296 = arith.mulf %1293, %1295 : vector<12x12xf32>
    %1297 = arith.addf %1283, %1296 : vector<12x12xf32>
    %c34_600 = arith.constant 34 : index
    %1298 = memref.load %arg3[%c34_600] : memref<81xf32, #tpu.memory_space<smem>>
    %1299 = vector.broadcast %1298 : f32 to vector<12x12xf32>
    %1300 = arith.mulf %1293, %1299 : vector<12x12xf32>
    %1301 = arith.addf %1287, %1300 : vector<12x12xf32>
    %c61_601 = arith.constant 61 : index
    %1302 = memref.load %arg3[%c61_601] : memref<81xf32, #tpu.memory_space<smem>>
    %1303 = vector.broadcast %1302 : f32 to vector<12x12xf32>
    %1304 = arith.mulf %1293, %1303 : vector<12x12xf32>
    %1305 = arith.addf %1291, %1304 : vector<12x12xf32>
    %c1_602 = arith.constant 1 : index
    %c0_603 = arith.constant 0 : index
    %c2_604 = arith.constant 2 : index
    %c2_605 = arith.constant 2 : index
    %1306 = vector.load %arg6[%c1_602, %c0_603, %c2_604, %c2_605] : memref<2x3x14x14xf32, #tpu.memory_space<vmem>>, vector<1x1x12x12xf32>
    %1307 = vector.shape_cast %1306 : vector<1x1x12x12xf32> to vector<12x12xf32>
    %c8_606 = arith.constant 8 : index
    %1308 = memref.load %arg3[%c8_606] : memref<81xf32, #tpu.memory_space<smem>>
    %1309 = vector.broadcast %1308 : f32 to vector<12x12xf32>
    %1310 = arith.mulf %1307, %1309 : vector<12x12xf32>
    %1311 = arith.addf %1297, %1310 : vector<12x12xf32>
    %c35_607 = arith.constant 35 : index
    %1312 = memref.load %arg3[%c35_607] : memref<81xf32, #tpu.memory_space<smem>>
    %1313 = vector.broadcast %1312 : f32 to vector<12x12xf32>
    %1314 = arith.mulf %1307, %1313 : vector<12x12xf32>
    %1315 = arith.addf %1301, %1314 : vector<12x12xf32>
    %c62_608 = arith.constant 62 : index
    %1316 = memref.load %arg3[%c62_608] : memref<81xf32, #tpu.memory_space<smem>>
    %1317 = vector.broadcast %1316 : f32 to vector<12x12xf32>
    %1318 = arith.mulf %1307, %1317 : vector<12x12xf32>
    %1319 = arith.addf %1305, %1318 : vector<12x12xf32>
    %c1_609 = arith.constant 1 : index
    %c1_610 = arith.constant 1 : index
    %c0_611 = arith.constant 0 : index
    %c0_612 = arith.constant 0 : index
    %1320 = vector.load %arg6[%c1_609, %c1_610, %c0_611, %c0_612] : memref<2x3x14x14xf32, #tpu.memory_space<vmem>>, vector<1x1x12x12xf32>
    %1321 = vector.shape_cast %1320 : vector<1x1x12x12xf32> to vector<12x12xf32>
    %c9_613 = arith.constant 9 : index
    %1322 = memref.load %arg3[%c9_613] : memref<81xf32, #tpu.memory_space<smem>>
    %1323 = vector.broadcast %1322 : f32 to vector<12x12xf32>
    %1324 = arith.mulf %1321, %1323 : vector<12x12xf32>
    %1325 = arith.addf %1311, %1324 : vector<12x12xf32>
    %c36_614 = arith.constant 36 : index
    %1326 = memref.load %arg3[%c36_614] : memref<81xf32, #tpu.memory_space<smem>>
    %1327 = vector.broadcast %1326 : f32 to vector<12x12xf32>
    %1328 = arith.mulf %1321, %1327 : vector<12x12xf32>
    %1329 = arith.addf %1315, %1328 : vector<12x12xf32>
    %c63_615 = arith.constant 63 : index
    %1330 = memref.load %arg3[%c63_615] : memref<81xf32, #tpu.memory_space<smem>>
    %1331 = vector.broadcast %1330 : f32 to vector<12x12xf32>
    %1332 = arith.mulf %1321, %1331 : vector<12x12xf32>
    %1333 = arith.addf %1319, %1332 : vector<12x12xf32>
    %c1_616 = arith.constant 1 : index
    %c1_617 = arith.constant 1 : index
    %c0_618 = arith.constant 0 : index
    %c1_619 = arith.constant 1 : index
    %1334 = vector.load %arg6[%c1_616, %c1_617, %c0_618, %c1_619] : memref<2x3x14x14xf32, #tpu.memory_space<vmem>>, vector<1x1x12x12xf32>
    %1335 = vector.shape_cast %1334 : vector<1x1x12x12xf32> to vector<12x12xf32>
    %c10_620 = arith.constant 10 : index
    %1336 = memref.load %arg3[%c10_620] : memref<81xf32, #tpu.memory_space<smem>>
    %1337 = vector.broadcast %1336 : f32 to vector<12x12xf32>
    %1338 = arith.mulf %1335, %1337 : vector<12x12xf32>
    %1339 = arith.addf %1325, %1338 : vector<12x12xf32>
    %c37_621 = arith.constant 37 : index
    %1340 = memref.load %arg3[%c37_621] : memref<81xf32, #tpu.memory_space<smem>>
    %1341 = vector.broadcast %1340 : f32 to vector<12x12xf32>
    %1342 = arith.mulf %1335, %1341 : vector<12x12xf32>
    %1343 = arith.addf %1329, %1342 : vector<12x12xf32>
    %c64_622 = arith.constant 64 : index
    %1344 = memref.load %arg3[%c64_622] : memref<81xf32, #tpu.memory_space<smem>>
    %1345 = vector.broadcast %1344 : f32 to vector<12x12xf32>
    %1346 = arith.mulf %1335, %1345 : vector<12x12xf32>
    %1347 = arith.addf %1333, %1346 : vector<12x12xf32>
    %c1_623 = arith.constant 1 : index
    %c1_624 = arith.constant 1 : index
    %c0_625 = arith.constant 0 : index
    %c2_626 = arith.constant 2 : index
    %1348 = vector.load %arg6[%c1_623, %c1_624, %c0_625, %c2_626] : memref<2x3x14x14xf32, #tpu.memory_space<vmem>>, vector<1x1x12x12xf32>
    %1349 = vector.shape_cast %1348 : vector<1x1x12x12xf32> to vector<12x12xf32>
    %c11_627 = arith.constant 11 : index
    %1350 = memref.load %arg3[%c11_627] : memref<81xf32, #tpu.memory_space<smem>>
    %1351 = vector.broadcast %1350 : f32 to vector<12x12xf32>
    %1352 = arith.mulf %1349, %1351 : vector<12x12xf32>
    %1353 = arith.addf %1339, %1352 : vector<12x12xf32>
    %c38_628 = arith.constant 38 : index
    %1354 = memref.load %arg3[%c38_628] : memref<81xf32, #tpu.memory_space<smem>>
    %1355 = vector.broadcast %1354 : f32 to vector<12x12xf32>
    %1356 = arith.mulf %1349, %1355 : vector<12x12xf32>
    %1357 = arith.addf %1343, %1356 : vector<12x12xf32>
    %c65_629 = arith.constant 65 : index
    %1358 = memref.load %arg3[%c65_629] : memref<81xf32, #tpu.memory_space<smem>>
    %1359 = vector.broadcast %1358 : f32 to vector<12x12xf32>
    %1360 = arith.mulf %1349, %1359 : vector<12x12xf32>
    %1361 = arith.addf %1347, %1360 : vector<12x12xf32>
    %c1_630 = arith.constant 1 : index
    %c1_631 = arith.constant 1 : index
    %c1_632 = arith.constant 1 : index
    %c0_633 = arith.constant 0 : index
    %1362 = vector.load %arg6[%c1_630, %c1_631, %c1_632, %c0_633] : memref<2x3x14x14xf32, #tpu.memory_space<vmem>>, vector<1x1x12x12xf32>
    %1363 = vector.shape_cast %1362 : vector<1x1x12x12xf32> to vector<12x12xf32>
    %c12_634 = arith.constant 12 : index
    %1364 = memref.load %arg3[%c12_634] : memref<81xf32, #tpu.memory_space<smem>>
    %1365 = vector.broadcast %1364 : f32 to vector<12x12xf32>
    %1366 = arith.mulf %1363, %1365 : vector<12x12xf32>
    %1367 = arith.addf %1353, %1366 : vector<12x12xf32>
    %c39_635 = arith.constant 39 : index
    %1368 = memref.load %arg3[%c39_635] : memref<81xf32, #tpu.memory_space<smem>>
    %1369 = vector.broadcast %1368 : f32 to vector<12x12xf32>
    %1370 = arith.mulf %1363, %1369 : vector<12x12xf32>
    %1371 = arith.addf %1357, %1370 : vector<12x12xf32>
    %c66_636 = arith.constant 66 : index
    %1372 = memref.load %arg3[%c66_636] : memref<81xf32, #tpu.memory_space<smem>>
    %1373 = vector.broadcast %1372 : f32 to vector<12x12xf32>
    %1374 = arith.mulf %1363, %1373 : vector<12x12xf32>
    %1375 = arith.addf %1361, %1374 : vector<12x12xf32>
    %c1_637 = arith.constant 1 : index
    %c1_638 = arith.constant 1 : index
    %c1_639 = arith.constant 1 : index
    %c1_640 = arith.constant 1 : index
    %1376 = vector.load %arg6[%c1_637, %c1_638, %c1_639, %c1_640] : memref<2x3x14x14xf32, #tpu.memory_space<vmem>>, vector<1x1x12x12xf32>
    %1377 = vector.shape_cast %1376 : vector<1x1x12x12xf32> to vector<12x12xf32>
    %c13_641 = arith.constant 13 : index
    %1378 = memref.load %arg3[%c13_641] : memref<81xf32, #tpu.memory_space<smem>>
    %1379 = vector.broadcast %1378 : f32 to vector<12x12xf32>
    %1380 = arith.mulf %1377, %1379 : vector<12x12xf32>
    %1381 = arith.addf %1367, %1380 : vector<12x12xf32>
    %c40_642 = arith.constant 40 : index
    %1382 = memref.load %arg3[%c40_642] : memref<81xf32, #tpu.memory_space<smem>>
    %1383 = vector.broadcast %1382 : f32 to vector<12x12xf32>
    %1384 = arith.mulf %1377, %1383 : vector<12x12xf32>
    %1385 = arith.addf %1371, %1384 : vector<12x12xf32>
    %c67_643 = arith.constant 67 : index
    %1386 = memref.load %arg3[%c67_643] : memref<81xf32, #tpu.memory_space<smem>>
    %1387 = vector.broadcast %1386 : f32 to vector<12x12xf32>
    %1388 = arith.mulf %1377, %1387 : vector<12x12xf32>
    %1389 = arith.addf %1375, %1388 : vector<12x12xf32>
    %c1_644 = arith.constant 1 : index
    %c1_645 = arith.constant 1 : index
    %c1_646 = arith.constant 1 : index
    %c2_647 = arith.constant 2 : index
    %1390 = vector.load %arg6[%c1_644, %c1_645, %c1_646, %c2_647] : memref<2x3x14x14xf32, #tpu.memory_space<vmem>>, vector<1x1x12x12xf32>
    %1391 = vector.shape_cast %1390 : vector<1x1x12x12xf32> to vector<12x12xf32>
    %c14_648 = arith.constant 14 : index
    %1392 = memref.load %arg3[%c14_648] : memref<81xf32, #tpu.memory_space<smem>>
    %1393 = vector.broadcast %1392 : f32 to vector<12x12xf32>
    %1394 = arith.mulf %1391, %1393 : vector<12x12xf32>
    %1395 = arith.addf %1381, %1394 : vector<12x12xf32>
    %c41_649 = arith.constant 41 : index
    %1396 = memref.load %arg3[%c41_649] : memref<81xf32, #tpu.memory_space<smem>>
    %1397 = vector.broadcast %1396 : f32 to vector<12x12xf32>
    %1398 = arith.mulf %1391, %1397 : vector<12x12xf32>
    %1399 = arith.addf %1385, %1398 : vector<12x12xf32>
    %c68_650 = arith.constant 68 : index
    %1400 = memref.load %arg3[%c68_650] : memref<81xf32, #tpu.memory_space<smem>>
    %1401 = vector.broadcast %1400 : f32 to vector<12x12xf32>
    %1402 = arith.mulf %1391, %1401 : vector<12x12xf32>
    %1403 = arith.addf %1389, %1402 : vector<12x12xf32>
    %c1_651 = arith.constant 1 : index
    %c1_652 = arith.constant 1 : index
    %c2_653 = arith.constant 2 : index
    %c0_654 = arith.constant 0 : index
    %1404 = vector.load %arg6[%c1_651, %c1_652, %c2_653, %c0_654] : memref<2x3x14x14xf32, #tpu.memory_space<vmem>>, vector<1x1x12x12xf32>
    %1405 = vector.shape_cast %1404 : vector<1x1x12x12xf32> to vector<12x12xf32>
    %c15_655 = arith.constant 15 : index
    %1406 = memref.load %arg3[%c15_655] : memref<81xf32, #tpu.memory_space<smem>>
    %1407 = vector.broadcast %1406 : f32 to vector<12x12xf32>
    %1408 = arith.mulf %1405, %1407 : vector<12x12xf32>
    %1409 = arith.addf %1395, %1408 : vector<12x12xf32>
    %c42_656 = arith.constant 42 : index
    %1410 = memref.load %arg3[%c42_656] : memref<81xf32, #tpu.memory_space<smem>>
    %1411 = vector.broadcast %1410 : f32 to vector<12x12xf32>
    %1412 = arith.mulf %1405, %1411 : vector<12x12xf32>
    %1413 = arith.addf %1399, %1412 : vector<12x12xf32>
    %c69_657 = arith.constant 69 : index
    %1414 = memref.load %arg3[%c69_657] : memref<81xf32, #tpu.memory_space<smem>>
    %1415 = vector.broadcast %1414 : f32 to vector<12x12xf32>
    %1416 = arith.mulf %1405, %1415 : vector<12x12xf32>
    %1417 = arith.addf %1403, %1416 : vector<12x12xf32>
    %c1_658 = arith.constant 1 : index
    %c1_659 = arith.constant 1 : index
    %c2_660 = arith.constant 2 : index
    %c1_661 = arith.constant 1 : index
    %1418 = vector.load %arg6[%c1_658, %c1_659, %c2_660, %c1_661] : memref<2x3x14x14xf32, #tpu.memory_space<vmem>>, vector<1x1x12x12xf32>
    %1419 = vector.shape_cast %1418 : vector<1x1x12x12xf32> to vector<12x12xf32>
    %c16_662 = arith.constant 16 : index
    %1420 = memref.load %arg3[%c16_662] : memref<81xf32, #tpu.memory_space<smem>>
    %1421 = vector.broadcast %1420 : f32 to vector<12x12xf32>
    %1422 = arith.mulf %1419, %1421 : vector<12x12xf32>
    %1423 = arith.addf %1409, %1422 : vector<12x12xf32>
    %c43_663 = arith.constant 43 : index
    %1424 = memref.load %arg3[%c43_663] : memref<81xf32, #tpu.memory_space<smem>>
    %1425 = vector.broadcast %1424 : f32 to vector<12x12xf32>
    %1426 = arith.mulf %1419, %1425 : vector<12x12xf32>
    %1427 = arith.addf %1413, %1426 : vector<12x12xf32>
    %c70_664 = arith.constant 70 : index
    %1428 = memref.load %arg3[%c70_664] : memref<81xf32, #tpu.memory_space<smem>>
    %1429 = vector.broadcast %1428 : f32 to vector<12x12xf32>
    %1430 = arith.mulf %1419, %1429 : vector<12x12xf32>
    %1431 = arith.addf %1417, %1430 : vector<12x12xf32>
    %c1_665 = arith.constant 1 : index
    %c1_666 = arith.constant 1 : index
    %c2_667 = arith.constant 2 : index
    %c2_668 = arith.constant 2 : index
    %1432 = vector.load %arg6[%c1_665, %c1_666, %c2_667, %c2_668] : memref<2x3x14x14xf32, #tpu.memory_space<vmem>>, vector<1x1x12x12xf32>
    %1433 = vector.shape_cast %1432 : vector<1x1x12x12xf32> to vector<12x12xf32>
    %c17_669 = arith.constant 17 : index
    %1434 = memref.load %arg3[%c17_669] : memref<81xf32, #tpu.memory_space<smem>>
    %1435 = vector.broadcast %1434 : f32 to vector<12x12xf32>
    %1436 = arith.mulf %1433, %1435 : vector<12x12xf32>
    %1437 = arith.addf %1423, %1436 : vector<12x12xf32>
    %c44_670 = arith.constant 44 : index
    %1438 = memref.load %arg3[%c44_670] : memref<81xf32, #tpu.memory_space<smem>>
    %1439 = vector.broadcast %1438 : f32 to vector<12x12xf32>
    %1440 = arith.mulf %1433, %1439 : vector<12x12xf32>
    %1441 = arith.addf %1427, %1440 : vector<12x12xf32>
    %c71_671 = arith.constant 71 : index
    %1442 = memref.load %arg3[%c71_671] : memref<81xf32, #tpu.memory_space<smem>>
    %1443 = vector.broadcast %1442 : f32 to vector<12x12xf32>
    %1444 = arith.mulf %1433, %1443 : vector<12x12xf32>
    %1445 = arith.addf %1431, %1444 : vector<12x12xf32>
    %c1_672 = arith.constant 1 : index
    %c2_673 = arith.constant 2 : index
    %c0_674 = arith.constant 0 : index
    %c0_675 = arith.constant 0 : index
    %1446 = vector.load %arg6[%c1_672, %c2_673, %c0_674, %c0_675] : memref<2x3x14x14xf32, #tpu.memory_space<vmem>>, vector<1x1x12x12xf32>
    %1447 = vector.shape_cast %1446 : vector<1x1x12x12xf32> to vector<12x12xf32>
    %c18_676 = arith.constant 18 : index
    %1448 = memref.load %arg3[%c18_676] : memref<81xf32, #tpu.memory_space<smem>>
    %1449 = vector.broadcast %1448 : f32 to vector<12x12xf32>
    %1450 = arith.mulf %1447, %1449 : vector<12x12xf32>
    %1451 = arith.addf %1437, %1450 : vector<12x12xf32>
    %c45_677 = arith.constant 45 : index
    %1452 = memref.load %arg3[%c45_677] : memref<81xf32, #tpu.memory_space<smem>>
    %1453 = vector.broadcast %1452 : f32 to vector<12x12xf32>
    %1454 = arith.mulf %1447, %1453 : vector<12x12xf32>
    %1455 = arith.addf %1441, %1454 : vector<12x12xf32>
    %c72_678 = arith.constant 72 : index
    %1456 = memref.load %arg3[%c72_678] : memref<81xf32, #tpu.memory_space<smem>>
    %1457 = vector.broadcast %1456 : f32 to vector<12x12xf32>
    %1458 = arith.mulf %1447, %1457 : vector<12x12xf32>
    %1459 = arith.addf %1445, %1458 : vector<12x12xf32>
    %c1_679 = arith.constant 1 : index
    %c2_680 = arith.constant 2 : index
    %c0_681 = arith.constant 0 : index
    %c1_682 = arith.constant 1 : index
    %1460 = vector.load %arg6[%c1_679, %c2_680, %c0_681, %c1_682] : memref<2x3x14x14xf32, #tpu.memory_space<vmem>>, vector<1x1x12x12xf32>
    %1461 = vector.shape_cast %1460 : vector<1x1x12x12xf32> to vector<12x12xf32>
    %c19_683 = arith.constant 19 : index
    %1462 = memref.load %arg3[%c19_683] : memref<81xf32, #tpu.memory_space<smem>>
    %1463 = vector.broadcast %1462 : f32 to vector<12x12xf32>
    %1464 = arith.mulf %1461, %1463 : vector<12x12xf32>
    %1465 = arith.addf %1451, %1464 : vector<12x12xf32>
    %c46_684 = arith.constant 46 : index
    %1466 = memref.load %arg3[%c46_684] : memref<81xf32, #tpu.memory_space<smem>>
    %1467 = vector.broadcast %1466 : f32 to vector<12x12xf32>
    %1468 = arith.mulf %1461, %1467 : vector<12x12xf32>
    %1469 = arith.addf %1455, %1468 : vector<12x12xf32>
    %c73_685 = arith.constant 73 : index
    %1470 = memref.load %arg3[%c73_685] : memref<81xf32, #tpu.memory_space<smem>>
    %1471 = vector.broadcast %1470 : f32 to vector<12x12xf32>
    %1472 = arith.mulf %1461, %1471 : vector<12x12xf32>
    %1473 = arith.addf %1459, %1472 : vector<12x12xf32>
    %c1_686 = arith.constant 1 : index
    %c2_687 = arith.constant 2 : index
    %c0_688 = arith.constant 0 : index
    %c2_689 = arith.constant 2 : index
    %1474 = vector.load %arg6[%c1_686, %c2_687, %c0_688, %c2_689] : memref<2x3x14x14xf32, #tpu.memory_space<vmem>>, vector<1x1x12x12xf32>
    %1475 = vector.shape_cast %1474 : vector<1x1x12x12xf32> to vector<12x12xf32>
    %c20_690 = arith.constant 20 : index
    %1476 = memref.load %arg3[%c20_690] : memref<81xf32, #tpu.memory_space<smem>>
    %1477 = vector.broadcast %1476 : f32 to vector<12x12xf32>
    %1478 = arith.mulf %1475, %1477 : vector<12x12xf32>
    %1479 = arith.addf %1465, %1478 : vector<12x12xf32>
    %c47_691 = arith.constant 47 : index
    %1480 = memref.load %arg3[%c47_691] : memref<81xf32, #tpu.memory_space<smem>>
    %1481 = vector.broadcast %1480 : f32 to vector<12x12xf32>
    %1482 = arith.mulf %1475, %1481 : vector<12x12xf32>
    %1483 = arith.addf %1469, %1482 : vector<12x12xf32>
    %c74_692 = arith.constant 74 : index
    %1484 = memref.load %arg3[%c74_692] : memref<81xf32, #tpu.memory_space<smem>>
    %1485 = vector.broadcast %1484 : f32 to vector<12x12xf32>
    %1486 = arith.mulf %1475, %1485 : vector<12x12xf32>
    %1487 = arith.addf %1473, %1486 : vector<12x12xf32>
    %c1_693 = arith.constant 1 : index
    %c2_694 = arith.constant 2 : index
    %c1_695 = arith.constant 1 : index
    %c0_696 = arith.constant 0 : index
    %1488 = vector.load %arg6[%c1_693, %c2_694, %c1_695, %c0_696] : memref<2x3x14x14xf32, #tpu.memory_space<vmem>>, vector<1x1x12x12xf32>
    %1489 = vector.shape_cast %1488 : vector<1x1x12x12xf32> to vector<12x12xf32>
    %c21_697 = arith.constant 21 : index
    %1490 = memref.load %arg3[%c21_697] : memref<81xf32, #tpu.memory_space<smem>>
    %1491 = vector.broadcast %1490 : f32 to vector<12x12xf32>
    %1492 = arith.mulf %1489, %1491 : vector<12x12xf32>
    %1493 = arith.addf %1479, %1492 : vector<12x12xf32>
    %c48_698 = arith.constant 48 : index
    %1494 = memref.load %arg3[%c48_698] : memref<81xf32, #tpu.memory_space<smem>>
    %1495 = vector.broadcast %1494 : f32 to vector<12x12xf32>
    %1496 = arith.mulf %1489, %1495 : vector<12x12xf32>
    %1497 = arith.addf %1483, %1496 : vector<12x12xf32>
    %c75_699 = arith.constant 75 : index
    %1498 = memref.load %arg3[%c75_699] : memref<81xf32, #tpu.memory_space<smem>>
    %1499 = vector.broadcast %1498 : f32 to vector<12x12xf32>
    %1500 = arith.mulf %1489, %1499 : vector<12x12xf32>
    %1501 = arith.addf %1487, %1500 : vector<12x12xf32>
    %c1_700 = arith.constant 1 : index
    %c2_701 = arith.constant 2 : index
    %c1_702 = arith.constant 1 : index
    %c1_703 = arith.constant 1 : index
    %1502 = vector.load %arg6[%c1_700, %c2_701, %c1_702, %c1_703] : memref<2x3x14x14xf32, #tpu.memory_space<vmem>>, vector<1x1x12x12xf32>
    %1503 = vector.shape_cast %1502 : vector<1x1x12x12xf32> to vector<12x12xf32>
    %c22_704 = arith.constant 22 : index
    %1504 = memref.load %arg3[%c22_704] : memref<81xf32, #tpu.memory_space<smem>>
    %1505 = vector.broadcast %1504 : f32 to vector<12x12xf32>
    %1506 = arith.mulf %1503, %1505 : vector<12x12xf32>
    %1507 = arith.addf %1493, %1506 : vector<12x12xf32>
    %c49_705 = arith.constant 49 : index
    %1508 = memref.load %arg3[%c49_705] : memref<81xf32, #tpu.memory_space<smem>>
    %1509 = vector.broadcast %1508 : f32 to vector<12x12xf32>
    %1510 = arith.mulf %1503, %1509 : vector<12x12xf32>
    %1511 = arith.addf %1497, %1510 : vector<12x12xf32>
    %c76_706 = arith.constant 76 : index
    %1512 = memref.load %arg3[%c76_706] : memref<81xf32, #tpu.memory_space<smem>>
    %1513 = vector.broadcast %1512 : f32 to vector<12x12xf32>
    %1514 = arith.mulf %1503, %1513 : vector<12x12xf32>
    %1515 = arith.addf %1501, %1514 : vector<12x12xf32>
    %c1_707 = arith.constant 1 : index
    %c2_708 = arith.constant 2 : index
    %c1_709 = arith.constant 1 : index
    %c2_710 = arith.constant 2 : index
    %1516 = vector.load %arg6[%c1_707, %c2_708, %c1_709, %c2_710] : memref<2x3x14x14xf32, #tpu.memory_space<vmem>>, vector<1x1x12x12xf32>
    %1517 = vector.shape_cast %1516 : vector<1x1x12x12xf32> to vector<12x12xf32>
    %c23_711 = arith.constant 23 : index
    %1518 = memref.load %arg3[%c23_711] : memref<81xf32, #tpu.memory_space<smem>>
    %1519 = vector.broadcast %1518 : f32 to vector<12x12xf32>
    %1520 = arith.mulf %1517, %1519 : vector<12x12xf32>
    %1521 = arith.addf %1507, %1520 : vector<12x12xf32>
    %c50_712 = arith.constant 50 : index
    %1522 = memref.load %arg3[%c50_712] : memref<81xf32, #tpu.memory_space<smem>>
    %1523 = vector.broadcast %1522 : f32 to vector<12x12xf32>
    %1524 = arith.mulf %1517, %1523 : vector<12x12xf32>
    %1525 = arith.addf %1511, %1524 : vector<12x12xf32>
    %c77_713 = arith.constant 77 : index
    %1526 = memref.load %arg3[%c77_713] : memref<81xf32, #tpu.memory_space<smem>>
    %1527 = vector.broadcast %1526 : f32 to vector<12x12xf32>
    %1528 = arith.mulf %1517, %1527 : vector<12x12xf32>
    %1529 = arith.addf %1515, %1528 : vector<12x12xf32>
    %c1_714 = arith.constant 1 : index
    %c2_715 = arith.constant 2 : index
    %c2_716 = arith.constant 2 : index
    %c0_717 = arith.constant 0 : index
    %1530 = vector.load %arg6[%c1_714, %c2_715, %c2_716, %c0_717] : memref<2x3x14x14xf32, #tpu.memory_space<vmem>>, vector<1x1x12x12xf32>
    %1531 = vector.shape_cast %1530 : vector<1x1x12x12xf32> to vector<12x12xf32>
    %c24_718 = arith.constant 24 : index
    %1532 = memref.load %arg3[%c24_718] : memref<81xf32, #tpu.memory_space<smem>>
    %1533 = vector.broadcast %1532 : f32 to vector<12x12xf32>
    %1534 = arith.mulf %1531, %1533 : vector<12x12xf32>
    %1535 = arith.addf %1521, %1534 : vector<12x12xf32>
    %c51_719 = arith.constant 51 : index
    %1536 = memref.load %arg3[%c51_719] : memref<81xf32, #tpu.memory_space<smem>>
    %1537 = vector.broadcast %1536 : f32 to vector<12x12xf32>
    %1538 = arith.mulf %1531, %1537 : vector<12x12xf32>
    %1539 = arith.addf %1525, %1538 : vector<12x12xf32>
    %c78_720 = arith.constant 78 : index
    %1540 = memref.load %arg3[%c78_720] : memref<81xf32, #tpu.memory_space<smem>>
    %1541 = vector.broadcast %1540 : f32 to vector<12x12xf32>
    %1542 = arith.mulf %1531, %1541 : vector<12x12xf32>
    %1543 = arith.addf %1529, %1542 : vector<12x12xf32>
    %c1_721 = arith.constant 1 : index
    %c2_722 = arith.constant 2 : index
    %c2_723 = arith.constant 2 : index
    %c1_724 = arith.constant 1 : index
    %1544 = vector.load %arg6[%c1_721, %c2_722, %c2_723, %c1_724] : memref<2x3x14x14xf32, #tpu.memory_space<vmem>>, vector<1x1x12x12xf32>
    %1545 = vector.shape_cast %1544 : vector<1x1x12x12xf32> to vector<12x12xf32>
    %c25_725 = arith.constant 25 : index
    %1546 = memref.load %arg3[%c25_725] : memref<81xf32, #tpu.memory_space<smem>>
    %1547 = vector.broadcast %1546 : f32 to vector<12x12xf32>
    %1548 = arith.mulf %1545, %1547 : vector<12x12xf32>
    %1549 = arith.addf %1535, %1548 : vector<12x12xf32>
    %c52_726 = arith.constant 52 : index
    %1550 = memref.load %arg3[%c52_726] : memref<81xf32, #tpu.memory_space<smem>>
    %1551 = vector.broadcast %1550 : f32 to vector<12x12xf32>
    %1552 = arith.mulf %1545, %1551 : vector<12x12xf32>
    %1553 = arith.addf %1539, %1552 : vector<12x12xf32>
    %c79_727 = arith.constant 79 : index
    %1554 = memref.load %arg3[%c79_727] : memref<81xf32, #tpu.memory_space<smem>>
    %1555 = vector.broadcast %1554 : f32 to vector<12x12xf32>
    %1556 = arith.mulf %1545, %1555 : vector<12x12xf32>
    %1557 = arith.addf %1543, %1556 : vector<12x12xf32>
    %c1_728 = arith.constant 1 : index
    %c2_729 = arith.constant 2 : index
    %c2_730 = arith.constant 2 : index
    %c2_731 = arith.constant 2 : index
    %1558 = vector.load %arg6[%c1_728, %c2_729, %c2_730, %c2_731] : memref<2x3x14x14xf32, #tpu.memory_space<vmem>>, vector<1x1x12x12xf32>
    %1559 = vector.shape_cast %1558 : vector<1x1x12x12xf32> to vector<12x12xf32>
    %c26_732 = arith.constant 26 : index
    %1560 = memref.load %arg3[%c26_732] : memref<81xf32, #tpu.memory_space<smem>>
    %1561 = vector.broadcast %1560 : f32 to vector<12x12xf32>
    %1562 = arith.mulf %1559, %1561 : vector<12x12xf32>
    %1563 = arith.addf %1549, %1562 : vector<12x12xf32>
    %c53_733 = arith.constant 53 : index
    %1564 = memref.load %arg3[%c53_733] : memref<81xf32, #tpu.memory_space<smem>>
    %1565 = vector.broadcast %1564 : f32 to vector<12x12xf32>
    %1566 = arith.mulf %1559, %1565 : vector<12x12xf32>
    %1567 = arith.addf %1553, %1566 : vector<12x12xf32>
    %c80_734 = arith.constant 80 : index
    %1568 = memref.load %arg3[%c80_734] : memref<81xf32, #tpu.memory_space<smem>>
    %1569 = vector.broadcast %1568 : f32 to vector<12x12xf32>
    %1570 = arith.mulf %1559, %1569 : vector<12x12xf32>
    %1571 = arith.addf %1557, %1570 : vector<12x12xf32>
    %c1_735 = arith.constant 1 : index
    %c0_736 = arith.constant 0 : index
    %c1_737 = arith.constant 1 : index
    %c1_738 = arith.constant 1 : index
    %1572 = vector.load %arg6[%c1_735, %c0_736, %c1_737, %c1_738] : memref<2x3x14x14xf32, #tpu.memory_space<vmem>>, vector<1x1x12x12xf32>
    %1573 = vector.shape_cast %1572 : vector<1x1x12x12xf32> to vector<12x12xf32>
    %1574 = arith.addf %1563, %1573 : vector<12x12xf32>
    %c1_739 = arith.constant 1 : index
    %c0_740 = arith.constant 0 : index
    %c0_741 = arith.constant 0 : index
    %c0_742 = arith.constant 0 : index
    %1575 = vector.load %arg5[%c1_739, %c0_740, %c0_741, %c0_742] : memref<2x3x12x12xf32, #tpu.memory_space<vmem>>, vector<1x1x12x12xf32>
    %1576 = vector.shape_cast %1575 : vector<1x1x12x12xf32> to vector<12x12xf32>
    %1577 = vector.shape_cast %1574 : vector<12x12xf32> to vector<1x1x12x12xf32>
    tpu.vector_store %arg5[%c1_739, %c0_740, %c0_741, %c0_742], %1577 {strides = array<i32>} : memref<2x3x12x12xf32, #tpu.memory_space<vmem>>, vector<1x1x12x12xf32>,
    %c1_743 = arith.constant 1 : index
    %c1_744 = arith.constant 1 : index
    %c1_745 = arith.constant 1 : index
    %c1_746 = arith.constant 1 : index
    %1578 = vector.load %arg6[%c1_743, %c1_744, %c1_745, %c1_746] : memref<2x3x14x14xf32, #tpu.memory_space<vmem>>, vector<1x1x12x12xf32>
    %1579 = vector.shape_cast %1578 : vector<1x1x12x12xf32> to vector<12x12xf32>
    %1580 = arith.addf %1567, %1579 : vector<12x12xf32>
    %c1_747 = arith.constant 1 : index
    %c1_748 = arith.constant 1 : index
    %c0_749 = arith.constant 0 : index
    %c0_750 = arith.constant 0 : index
    %1581 = vector.load %arg5[%c1_747, %c1_748, %c0_749, %c0_750] : memref<2x3x12x12xf32, #tpu.memory_space<vmem>>, vector<1x1x12x12xf32>
    %1582 = vector.shape_cast %1581 : vector<1x1x12x12xf32> to vector<12x12xf32>
    %1583 = vector.shape_cast %1580 : vector<12x12xf32> to vector<1x1x12x12xf32>
    tpu.vector_store %arg5[%c1_747, %c1_748, %c0_749, %c0_750], %1583 {strides = array<i32>} : memref<2x3x12x12xf32, #tpu.memory_space<vmem>>, vector<1x1x12x12xf32>,
    %c1_751 = arith.constant 1 : index
    %c2_752 = arith.constant 2 : index
    %c1_753 = arith.constant 1 : index
    %c1_754 = arith.constant 1 : index
    %1584 = vector.load %arg6[%c1_751, %c2_752, %c1_753, %c1_754] : memref<2x3x14x14xf32, #tpu.memory_space<vmem>>, vector<1x1x12x12xf32>
    %1585 = vector.shape_cast %1584 : vector<1x1x12x12xf32> to vector<12x12xf32>
    %1586 = arith.addf %1571, %1585 : vector<12x12xf32>
    %c1_755 = arith.constant 1 : index
    %c2_756 = arith.constant 2 : index
    %c0_757 = arith.constant 0 : index
    %c0_758 = arith.constant 0 : index
    %1587 = vector.load %arg5[%c1_755, %c2_756, %c0_757, %c0_758] : memref<2x3x12x12xf32, #tpu.memory_space<vmem>>, vector<1x1x12x12xf32>
    %1588 = vector.shape_cast %1587 : vector<1x1x12x12xf32> to vector<12x12xf32>
    %1589 = vector.shape_cast %1586 : vector<12x12xf32> to vector<1x1x12x12xf32>
    tpu.vector_store %arg5[%c1_755, %c2_756, %c0_757, %c0_758], %1589 {strides = array<i32>} : memref<2x3x12x12xf32, #tpu.memory_space<vmem>>, vector<1x1x12x12xf32>,
    return
  }
}

</mosaic_0001>

<llo_original>
// kernel: tpu_custom_call.1
$region0: #{tpu_custom_call.1}
  #allocation0 [shape = 'u32[]', space=smem, size = 0x4, offset = 0x4, fixed_abs, tag = 'smem constant byte address 0x4 - core index']
  #allocation1 [shape = 'u32[144,128]{1,0:T(1,128)}', space=vmem, size = 0x12000, scoped, tag = 'internal scratch']
  #allocation2 [shape = 'f32[2,3,14,14]{3,2,1,0:T(8,128)}', space=vmem, size = 0xc000, scoped, tag = 'scratch operand']
  %s0 = inlined_call_operand.hbm [shape: f32[2,3,16,16], index: 0, kind: input, shape index: {}]
  %s1 = inlined_call_operand.vmem [shape: f32[81], index: 1, kind: input, shape index: {}]
  %s2 = inlined_call_operand.vmem [shape: f32[3], index: 2, kind: input, shape index: {}]
  %s3 = inlined_call_operand.vmem [shape: f32[81], index: 3, kind: input, shape index: {}]
  %s4 = inlined_call_operand.vmem [shape: f32[3], index: 4, kind: input, shape index: {}]
  %s5 = inlined_call_operand.vmem [shape: f32[2,3,12,12], index: 5, kind: output, shape index: {}]
  %s6 = sld [smem:[#allocation0]]
  $region50: #{tpu_custom_call.1} parent=0
    _
  %s8 = ssub.s32 1, %s6
  %s9 = scalar_select 0, %s8, %s6
  $region1: #{tpu_custom_call.1} parent=0
    #allocation3 [shape = 'u8[49152]{0}', space=vmem, size = 0xc000, scoped, tag = 'input window, operand 0, single buffered']
    #allocation4 [shape = 's32[1]{0}', space=sflag, size = 0x4, scoped, tag = 'scoped memory for tpu_custom_call.1']
    #allocation5 [shape = 's32[1]{0}', space=sflag, size = 0x4, scoped, tag = 'scoped memory for tpu_custom_call.1']
    #allocation6 [shape = 'u8[512]{0}', space=smem, size = 0x200, scoped, tag = 'input window, operand 1, single buffered']
    #allocation7 [shape = 'u8[512]{0}', space=smem, size = 0x200, scoped, tag = 'input window, operand 2, single buffered']
    #allocation8 [shape = 's32[1]{0}', space=sflag, size = 0x4, scoped, tag = 'scoped memory for tpu_custom_call.1']
    #allocation9 [shape = 'u8[512]{0}', space=smem, size = 0x200, scoped, tag = 'input window, operand 3, single buffered']
    #allocation10 [shape = 'u8[512]{0}', space=smem, size = 0x200, scoped, tag = 'input window, operand 4, single buffered']
    #allocation11 [shape = 's32[1]{0}', space=sflag, size = 0x4, scoped, tag = 'scoped memory for tpu_custom_call.1']
    %10 = vsyncpa [#allocation4], 0
    %11 = vsyncpa [#allocation5], 0
    %12 = vsyncpa [#allocation8], 0
    %13 = vsyncpa [#allocation11], 0
    // Predicated region
    $region2: #{tpu_custom_call.1} parent=1 // pred_check
      _
    $region3: #{tpu_custom_call.1} parent=1 // pred_check_branch
      %15 = sbr.rel (0) target = $region5
    $region4: #{tpu_custom_call.1} parent=1 // pred_region
      %s17 = ssub.s32 1536, 1536
      %18 = vsyncadd [#allocation4], %s17
      %s19 = sshll.u32 [#allocation3], 4
      %s20 = int_to_ptr.vmem [resolvable:$true] %s19
      %25 = dma.hbm_to_vmem [thread:$0]  %s0, 1536, %s20, [#allocation4], 128, 128, 8
    $region5: #{tpu_custom_call.1} parent=1 // pred_fallthru
      _
    // Predicated region
    $region6: #{tpu_custom_call.1} parent=1 // pred_check
      _
    $region7: #{tpu_custom_call.1} parent=1 // pred_check_branch
      %27 = sbr.rel (0) target = $region9
    $region8: #{tpu_custom_call.1} parent=1 // pred_region
      %s29 = ssub.s32 16, 16
      %30 = vsyncadd [#allocation5], %s29
      %s32 = sshll.u32 %s1, 4
      %s33 = int_to_ptr.vmem [resolvable:$true] %s32
      %35 = dma.vmem_to_smem %s33, 16, [#allocation6], [#allocation5]
    $region9: #{tpu_custom_call.1} parent=1 // pred_fallthru
      _
    // Predicated region
    $region10: #{tpu_custom_call.1} parent=1 // pred_check
      _
    $region11: #{tpu_custom_call.1} parent=1 // pred_check_branch
      %37 = sbr.rel (0) target = $region13
    $region12: #{tpu_custom_call.1} parent=1 // pred_region
      %s39 = ssub.s32 16, 16
      %40 = vsyncadd [#allocation8], %s39
      %s42 = sshll.u32 %s2, 4
      %s43 = int_to_ptr.vmem [resolvable:$true] %s42
      %45 = dma.vmem_to_smem %s43, 16, [#allocation7], [#allocation8]
    $region13: #{tpu_custom_call.1} parent=1 // pred_fallthru
      _
    // Predicated region
    $region14: #{tpu_custom_call.1} parent=1 // pred_check
      _
    $region15: #{tpu_custom_call.1} parent=1 // pred_check_branch
      %47 = sbr.rel (0) target = $region17
    $region16: #{tpu_custom_call.1} parent=1 // pred_region
      %s49 = ssub.s32 16, 16
      %50 = vsyncadd [#allocation8], %s49
      %s52 = sshll.u32 %s3, 4
      %s53 = int_to_ptr.vmem [resolvable:$true] %s52
      %55 = dma.vmem_to_smem %s53, 16, [#allocation9], [#allocation8]
    $region17: #{tpu_custom_call.1} parent=1 // pred_fallthru
      _
    // Predicated region
    $region18: #{tpu_custom_call.1} parent=1 // pred_check
      _
    $region19: #{tpu_custom_call.1} parent=1 // pred_check_branch
      %57 = sbr.rel (0) target = $region21
    $region20: #{tpu_custom_call.1} parent=1 // pred_region
      %s59 = ssub.s32 16, 16
      %60 = vsyncadd [#allocation11], %s59
      %s62 = sshll.u32 %s4, 4
      %s63 = int_to_ptr.vmem [resolvable:$true] %s62
      %65 = dma.vmem_to_smem %s63, 16, [#allocation10], [#allocation11]
    $region21: #{tpu_custom_call.1} parent=1 // pred_fallthru
      _
    // Predicated region
    $region22: #{tpu_custom_call.1} parent=1 // pred_check
      _
    $region23: #{tpu_custom_call.1} parent=1 // pred_check_branch
      %67 = sbr.rel (0) target = $region25
    $region24: #{tpu_custom_call.1} parent=1 // pred_region
      %68 = dma.done [#allocation4], 1536
    $region25: #{tpu_custom_call.1} parent=1 // pred_fallthru
      _
    // Predicated region
    $region26: #{tpu_custom_call.1} parent=1 // pred_check
      _
    $region27: #{tpu_custom_call.1} parent=1 // pred_check_branch
      %70 = sbr.rel (0) target = $region29
    $region28: #{tpu_custom_call.1} parent=1 // pred_region
      %71 = dma.done [#allocation5], 16
    $region29: #{tpu_custom_call.1} parent=1 // pred_fallthru
      _
    // Predicated region
    $region30: #{tpu_custom_call.1} parent=1 // pred_check
      _
    $region31: #{tpu_custom_call.1} parent=1 // pred_check_branch
      %73 = sbr.rel (0) target = $region33
    $region32: #{tpu_custom_call.1} parent=1 // pred_region
      %74 = dma.done [#allocation8], 16
    $region33: #{tpu_custom_call.1} parent=1 // pred_fallthru
      _
    // Predicated region
    $region34: #{tpu_custom_call.1} parent=1 // pred_check
      _
    $region35: #{tpu_custom_call.1} parent=1 // pred_check_branch
      %76 = sbr.rel (0) target = $region37
    $region36: #{tpu_custom_call.1} parent=1 // pred_region
      %77 = dma.done [#allocation8], 16
    $region37: #{tpu_custom_call.1} parent=1 // pred_fallthru
      _
    // Predicated region
    $region38: #{tpu_custom_call.1} parent=1 // pred_check
      _
    $region39: #{tpu_custom_call.1} parent=1 // pred_check_branch
      %79 = sbr.rel (0) target = $region41
    $region40: #{tpu_custom_call.1} parent=1 // pred_region
      %80 = dma.done [#allocation11], 16
    $region41: #{tpu_custom_call.1} parent=1 // pred_fallthru
      _
    %81 = sfence
    %s82 = sld [smem:[#allocation7]]
    %v83 = vstv %s82
    %s84 = sld [smem:[#allocation7 + $0x1]]
    %v85 = vstv %s84
    %s86 = sld [smem:[#allocation7 + $0x2]]
    %v87 = vstv %s86
    %v88 = vld [vmem:[#allocation3] sm:$0xff]
    %v89 = vld [vmem:[#allocation3 + $0x8] sm:$0x3f]
    %s90 = sld [smem:[#allocation6]]
    %v91 = vstv %s90
    %v92 = vmul.f32 %v88, %v91
    %v93 = vmul.f32 %v89, %v91
    %v94 = vadd.f32 %v83, %v92
    %v95 = vadd.f32 %v83, %v93
    %s96 = sld [smem:[#allocation6 + $0x1b]]
    %v97 = vstv %s96
    %v98 = vmul.f32 %v88, %v97
    %v99 = vmul.f32 %v89, %v97
    %v100 = vadd.f32 %v85, %v98
    %v101 = vadd.f32 %v85, %v99
    %s102 = sld [smem:[#allocation6 + $0x36]]
    %v103 = vstv %s102
    %v104 = vmul.f32 %v88, %v103
    %v105 = vmul.f32 %v89, %v103
    %v106 = vadd.f32 %v87, %v104
    %v107 = vadd.f32 %v87, %v105
    %s108 = sld [smem:[#allocation6 + $0x1]]
    %v109 = vstv %s108
    %v110 = vmul.f32 %v88, %v109
    %v111 = vmul.f32 %v89, %v109
    %114 = vrot.lane.b32.xlu0 %v110, 127
    %v115 = vpop.permute.xlu0 %114
    %116 = vrot.lane.b32.xlu0 %v111, 127
    %v117 = vpop.permute.xlu0 %116
    %v120 = vadd.f32 %v94, %v115
    %v121 = vadd.f32 %v95, %v117
    %s122 = sld [smem:[#allocation6 + $0x1c]]
    %v123 = vstv %s122
    %v124 = vmul.f32 %v88, %v123
    %v125 = vmul.f32 %v89, %v123
    %128 = vrot.lane.b32.xlu0 %v124, 127
    %v129 = vpop.permute.xlu0 %128
    %130 = vrot.lane.b32.xlu0 %v125, 127
    %v131 = vpop.permute.xlu0 %130
    %v134 = vadd.f32 %v100, %v129
    %v135 = vadd.f32 %v101, %v131
    %s136 = sld [smem:[#allocation6 + $0x37]]
    %v137 = vstv %s136
    %v138 = vmul.f32 %v88, %v137
    %v139 = vmul.f32 %v89, %v137
    %142 = vrot.lane.b32.xlu0 %v138, 127
    %v143 = vpop.permute.xlu0 %142
    %144 = vrot.lane.b32.xlu0 %v139, 127
    %v145 = vpop.permute.xlu0 %144
    %v148 = vadd.f32 %v106, %v143
    %v149 = vadd.f32 %v107, %v145
    %s150 = sld [smem:[#allocation6 + $0x2]]
    %v151 = vstv %s150
    %v152 = vmul.f32 %v88, %v151
    %v153 = vmul.f32 %v89, %v151
    %156 = vrot.lane.b32.xlu0 %v152, 126
    %v157 = vpop.permute.xlu0 %156
    %158 = vrot.lane.b32.xlu0 %v153, 126
    %v159 = vpop.permute.xlu0 %158
    %v162 = vadd.f32 %v120, %v157
    %v163 = vadd.f32 %v121, %v159
    %s164 = sld [smem:[#allocation6 + $0x1d]]
    %v165 = vstv %s164
    %v166 = vmul.f32 %v88, %v165
    %v167 = vmul.f32 %v89, %v165
    %170 = vrot.lane.b32.xlu0 %v166, 126
    %v171 = vpop.permute.xlu0 %170
    %172 = vrot.lane.b32.xlu0 %v167, 126
    %v173 = vpop.permute.xlu0 %172
    %v176 = vadd.f32 %v134, %v171
    %v177 = vadd.f32 %v135, %v173
    %s178 = sld [smem:[#allocation6 + $0x38]]
    %v179 = vstv %s178
    %v180 = vmul.f32 %v88, %v179
    %v181 = vmul.f32 %v89, %v179
    %184 = vrot.lane.b32.xlu0 %v180, 126
    %v185 = vpop.permute.xlu0 %184
    %186 = vrot.lane.b32.xlu0 %v181, 126
    %v187 = vpop.permute.xlu0 %186
    %v190 = vadd.f32 %v148, %v185
    %v191 = vadd.f32 %v149, %v187
    %v192 = vld [vmem:[#allocation3 + $0x1] sm:$0xff]
    %v193 = vld [vmem:[#allocation3 + $0x9] sm:$0x3f]
    %s194 = sld [smem:[#allocation6 + $0x3]]
    %v195 = vstv %s194
    %v196 = vmul.f32 %v192, %v195
    %v197 = vmul.f32 %v193, %v195
    %v198 = vadd.f32 %v162, %v196
    %v199 = vadd.f32 %v163, %v197
    %s200 = sld [smem:[#allocation6 + $0x1e]]
    %v201 = vstv %s200
    %v202 = vmul.f32 %v192, %v201
    %v203 = vmul.f32 %v193, %v201
    %v204 = vadd.f32 %v176, %v202
    %v205 = vadd.f32 %v177, %v203
    %s206 = sld [smem:[#allocation6 + $0x39]]
    %v207 = vstv %s206
    %v208 = vmul.f32 %v192, %v207
    %v209 = vmul.f32 %v193, %v207
    %v210 = vadd.f32 %v190, %v208
    %v211 = vadd.f32 %v191, %v209
    %s212 = sld [smem:[#allocation6 + $0x4]]
    %v213 = vstv %s212
    %v214 = vmul.f32 %v192, %v213
    %v215 = vmul.f32 %v193, %v213
    %218 = vrot.lane.b32.xlu0 %v214, 127
    %v219 = vpop.permute.xlu0 %218
    %220 = vrot.lane.b32.xlu0 %v215, 127
    %v221 = vpop.permute.xlu0 %220
    %v224 = vadd.f32 %v198, %v219
    %v225 = vadd.f32 %v199, %v221
    %s226 = sld [smem:[#allocation6 + $0x1f]]
    %v227 = vstv %s226
    %v228 = vmul.f32 %v192, %v227
    %v229 = vmul.f32 %v193, %v227
    %232 = vrot.lane.b32.xlu0 %v228, 127
    %v233 = vpop.permute.xlu0 %232
    %234 = vrot.lane.b32.xlu0 %v229, 127
    %v235 = vpop.permute.xlu0 %234
    %v238 = vadd.f32 %v204, %v233
    %v239 = vadd.f32 %v205, %v235
    %s240 = sld [smem:[#allocation6 + $0x3a]]
    %v241 = vstv %s240
    %v242 = vmul.f32 %v192, %v241
    %v243 = vmul.f32 %v193, %v241
    %246 = vrot.lane.b32.xlu0 %v242, 127
    %v247 = vpop.permute.xlu0 %246
    %248 = vrot.lane.b32.xlu0 %v243, 127
    %v249 = vpop.permute.xlu0 %248
    %v252 = vadd.f32 %v210, %v247
    %v253 = vadd.f32 %v211, %v249
    %s254 = sld [smem:[#allocation6 + $0x5]]
    %v255 = vstv %s254
    %v256 = vmul.f32 %v192, %v255
    %v257 = vmul.f32 %v193, %v255
    %260 = vrot.lane.b32.xlu0 %v256, 126
    %v261 = vpop.permute.xlu0 %260
    %262 = vrot.lane.b32.xlu0 %v257, 126
    %v263 = vpop.permute.xlu0 %262
    %v266 = vadd.f32 %v224, %v261
    %v267 = vadd.f32 %v225, %v263
    %s268 = sld [smem:[#allocation6 + $0x20]]
    %v269 = vstv %s268
    %v270 = vmul.f32 %v192, %v269
    %v271 = vmul.f32 %v193, %v269
    %274 = vrot.lane.b32.xlu0 %v270, 126
    %v275 = vpop.permute.xlu0 %274
    %276 = vrot.lane.b32.xlu0 %v271, 126
    %v277 = vpop.permute.xlu0 %276
    %v280 = vadd.f32 %v238, %v275
    %v281 = vadd.f32 %v239, %v277
    %s282 = sld [smem:[#allocation6 + $0x3b]]
    %v283 = vstv %s282
    %v284 = vmul.f32 %v192, %v283
    %v285 = vmul.f32 %v193, %v283
    %288 = vrot.lane.b32.xlu0 %v284, 126
    %v289 = vpop.permute.xlu0 %288
    %290 = vrot.lane.b32.xlu0 %v285, 126
    %v291 = vpop.permute.xlu0 %290
    %v294 = vadd.f32 %v252, %v289
    %v295 = vadd.f32 %v253, %v291
    %v296 = vld [vmem:[#allocation3 + $0x2] sm:$0xff]
    %v297 = vld [vmem:[#allocation3 + $0xa] sm:$0x3f]
    %s298 = sld [smem:[#allocation6 + $0x6]]
    %v299 = vstv %s298
    %v300 = vmul.f32 %v296, %v299
    %v301 = vmul.f32 %v297, %v299
    %v302 = vadd.f32 %v266, %v300
    %v303 = vadd.f32 %v267, %v301
    %s304 = sld [smem:[#allocation6 + $0x21]]
    %v305 = vstv %s304
    %v306 = vmul.f32 %v296, %v305
    %v307 = vmul.f32 %v297, %v305
    %v308 = vadd.f32 %v280, %v306
    %v309 = vadd.f32 %v281, %v307
    %s310 = sld [smem:[#allocation6 + $0x3c]]
    %v311 = vstv %s310
    %v312 = vmul.f32 %v296, %v311
    %v313 = vmul.f32 %v297, %v311
    %v314 = vadd.f32 %v294, %v312
    %v315 = vadd.f32 %v295, %v313
    %s316 = sld [smem:[#allocation6 + $0x7]]
    %v317 = vstv %s316
    %v318 = vmul.f32 %v296, %v317
    %v319 = vmul.f32 %v297, %v317
    %322 = vrot.lane.b32.xlu0 %v318, 127
    %v323 = vpop.permute.xlu0 %322
    %324 = vrot.lane.b32.xlu0 %v319, 127
    %v325 = vpop.permute.xlu0 %324
    %v328 = vadd.f32 %v302, %v323
    %v329 = vadd.f32 %v303, %v325
    %s330 = sld [smem:[#allocation6 + $0x22]]
    %v331 = vstv %s330
    %v332 = vmul.f32 %v296, %v331
    %v333 = vmul.f32 %v297, %v331
    %336 = vrot.lane.b32.xlu0 %v332, 127
    %v337 = vpop.permute.xlu0 %336
    %338 = vrot.lane.b32.xlu0 %v333, 127
    %v339 = vpop.permute.xlu0 %338
    %v342 = vadd.f32 %v308, %v337
    %v343 = vadd.f32 %v309, %v339
    %s344 = sld [smem:[#allocation6 + $0x3d]]
    %v345 = vstv %s344
    %v346 = vmul.f32 %v296, %v345
    %v347 = vmul.f32 %v297, %v345
    %350 = vrot.lane.b32.xlu0 %v346, 127
    %v351 = vpop.permute.xlu0 %350
    %352 = vrot.lane.b32.xlu0 %v347, 127
    %v353 = vpop.permute.xlu0 %352
    %v356 = vadd.f32 %v314, %v351
    %v357 = vadd.f32 %v315, %v353
    %s358 = sld [smem:[#allocation6 + $0x8]]
    %v359 = vstv %s358
    %v360 = vmul.f32 %v296, %v359
    %v361 = vmul.f32 %v297, %v359
    %364 = vrot.lane.b32.xlu0 %v360, 126
    %v365 = vpop.permute.xlu0 %364
    %366 = vrot.lane.b32.xlu0 %v361, 126
    %v367 = vpop.permute.xlu0 %366
    %v370 = vadd.f32 %v328, %v365
    %v371 = vadd.f32 %v329, %v367
    %s372 = sld [smem:[#allocation6 + $0x23]]
    %v373 = vstv %s372
    %v374 = vmul.f32 %v296, %v373
    %v375 = vmul.f32 %v297, %v373
    %378 = vrot.lane.b32.xlu0 %v374, 126
    %v379 = vpop.permute.xlu0 %378
    %380 = vrot.lane.b32.xlu0 %v375, 126
    %v381 = vpop.permute.xlu0 %380
    %v384 = vadd.f32 %v342, %v379
    %v385 = vadd.f32 %v343, %v381
    %s386 = sld [smem:[#allocation6 + $0x3e]]
    %v387 = vstv %s386
    %v388 = vmul.f32 %v296, %v387
    %v389 = vmul.f32 %v297, %v387
    %392 = vrot.lane.b32.xlu0 %v388, 126
    %v393 = vpop.permute.xlu0 %392
    %394 = vrot.lane.b32.xlu0 %v389, 126
    %v395 = vpop.permute.xlu0 %394
    %v398 = vadd.f32 %v356, %v393
    %v399 = vadd.f32 %v357, %v395
    %s400 = scalar_lea.vmem [#allocation3], 16
    %v401 = vld [vmem:[%s400] sm:$0xff]
    %v402 = vld [vmem:[%s400 + $0x8] sm:$0x3f]
    %s403 = sld [smem:[#allocation6 + $0x9]]
    %v404 = vstv %s403
    %v405 = vmul.f32 %v401, %v404
    %v406 = vmul.f32 %v402, %v404
    %v407 = vadd.f32 %v370, %v405
    %v408 = vadd.f32 %v371, %v406
    %s409 = sld [smem:[#allocation6 + $0x24]]
    %v410 = vstv %s409
    %v411 = vmul.f32 %v401, %v410
    %v412 = vmul.f32 %v402, %v410
    %v413 = vadd.f32 %v384, %v411
    %v414 = vadd.f32 %v385, %v412
    %s415 = sld [smem:[#allocation6 + $0x3f]]
    %v416 = vstv %s415
    %v417 = vmul.f32 %v401, %v416
    %v418 = vmul.f32 %v402, %v416
    %v419 = vadd.f32 %v398, %v417
    %v420 = vadd.f32 %v399, %v418
    %s421 = sld [smem:[#allocation6 + $0xa]]
    %v422 = vstv %s421
    %v423 = vmul.f32 %v401, %v422
    %v424 = vmul.f32 %v402, %v422
    %427 = vrot.lane.b32.xlu0 %v423, 127
    %v428 = vpop.permute.xlu0 %427
    %429 = vrot.lane.b32.xlu0 %v424, 127
    %v430 = vpop.permute.xlu0 %429
    %v433 = vadd.f32 %v407, %v428
    %v434 = vadd.f32 %v408, %v430
    %s435 = sld [smem:[#allocation6 + $0x25]]
    %v436 = vstv %s435
    %v437 = vmul.f32 %v401, %v436
    %v438 = vmul.f32 %v402, %v436
    %441 = vrot.lane.b32.xlu0 %v437, 127
    %v442 = vpop.permute.xlu0 %441
    %443 = vrot.lane.b32.xlu0 %v438, 127
    %v444 = vpop.permute.xlu0 %443
    %v447 = vadd.f32 %v413, %v442
    %v448 = vadd.f32 %v414, %v444
    %s449 = sld [smem:[#allocation6 + $0x40]]
    %v450 = vstv %s449
    %v451 = vmul.f32 %v401, %v450
    %v452 = vmul.f32 %v402, %v450
    %455 = vrot.lane.b32.xlu0 %v451, 127
    %v456 = vpop.permute.xlu0 %455
    %457 = vrot.lane.b32.xlu0 %v452, 127
    %v458 = vpop.permute.xlu0 %457
    %v461 = vadd.f32 %v419, %v456
    %v462 = vadd.f32 %v420, %v458
    %s463 = sld [smem:[#allocation6 + $0xb]]
    %v464 = vstv %s463
    %v465 = vmul.f32 %v401, %v464
    %v466 = vmul.f32 %v402, %v464
    %469 = vrot.lane.b32.xlu0 %v465, 126
    %v470 = vpop.permute.xlu0 %469
    %471 = vrot.lane.b32.xlu0 %v466, 126
    %v472 = vpop.permute.xlu0 %471
    %v475 = vadd.f32 %v433, %v470
    %v476 = vadd.f32 %v434, %v472
    %s477 = sld [smem:[#allocation6 + $0x26]]
    %v478 = vstv %s477
    %v479 = vmul.f32 %v401, %v478
    %v480 = vmul.f32 %v402, %v478
    %483 = vrot.lane.b32.xlu0 %v479, 126
    %v484 = vpop.permute.xlu0 %483
    %485 = vrot.lane.b32.xlu0 %v480, 126
    %v486 = vpop.permute.xlu0 %485
    %v489 = vadd.f32 %v447, %v484
    %v490 = vadd.f32 %v448, %v486
    %s491 = sld [smem:[#allocation6 + $0x41]]
    %v492 = vstv %s491
    %v493 = vmul.f32 %v401, %v492
    %v494 = vmul.f32 %v402, %v492
    %497 = vrot.lane.b32.xlu0 %v493, 126
    %v498 = vpop.permute.xlu0 %497
    %499 = vrot.lane.b32.xlu0 %v494, 126
    %v500 = vpop.permute.xlu0 %499
    %v503 = vadd.f32 %v461, %v498
    %v504 = vadd.f32 %v462, %v500
    %v505 = vld [vmem:[%s400 + $0x1] sm:$0xff]
    %v506 = vld [vmem:[%s400 + $0x9] sm:$0x3f]
    %s507 = sld [smem:[#allocation6 + $0xc]]
    %v508 = vstv %s507
    %v509 = vmul.f32 %v505, %v508
    %v510 = vmul.f32 %v506, %v508
    %v511 = vadd.f32 %v475, %v509
    %v512 = vadd.f32 %v476, %v510
    %s513 = sld [smem:[#allocation6 + $0x27]]
    %v514 = vstv %s513
    %v515 = vmul.f32 %v505, %v514
    %v516 = vmul.f32 %v506, %v514
    %v517 = vadd.f32 %v489, %v515
    %v518 = vadd.f32 %v490, %v516
    %s519 = sld [smem:[#allocation6 + $0x42]]
    %v520 = vstv %s519
    %v521 = vmul.f32 %v505, %v520
    %v522 = vmul.f32 %v506, %v520
    %v523 = vadd.f32 %v503, %v521
    %v524 = vadd.f32 %v504, %v522
    %s525 = sld [smem:[#allocation6 + $0xd]]
    %v526 = vstv %s525
    %v527 = vmul.f32 %v505, %v526
    %v528 = vmul.f32 %v506, %v526
    %531 = vrot.lane.b32.xlu0 %v527, 127
    %v532 = vpop.permute.xlu0 %531
    %533 = vrot.lane.b32.xlu0 %v528, 127
    %v534 = vpop.permute.xlu0 %533
    %v537 = vadd.f32 %v511, %v532
    %v538 = vadd.f32 %v512, %v534
    %s539 = sld [smem:[#allocation6 + $0x28]]
    %v540 = vstv %s539
    %v541 = vmul.f32 %v505, %v540
    %v542 = vmul.f32 %v506, %v540
    %545 = vrot.lane.b32.xlu0 %v541, 127
    %v546 = vpop.permute.xlu0 %545
    %547 = vrot.lane.b32.xlu0 %v542, 127
    %v548 = vpop.permute.xlu0 %547
    %v551 = vadd.f32 %v517, %v546
    %v552 = vadd.f32 %v518, %v548
    %s553 = sld [smem:[#allocation6 + $0x43]]
    %v554 = vstv %s553
    %v555 = vmul.f32 %v505, %v554
    %v556 = vmul.f32 %v506, %v554
    %559 = vrot.lane.b32.xlu0 %v555, 127
    %v560 = vpop.permute.xlu0 %559
    %561 = vrot.lane.b32.xlu0 %v556, 127
    %v562 = vpop.permute.xlu0 %561
    %v565 = vadd.f32 %v523, %v560
    %v566 = vadd.f32 %v524, %v562
    %s567 = sld [smem:[#allocation6 + $0xe]]
    %v568 = vstv %s567
    %v569 = vmul.f32 %v505, %v568
    %v570 = vmul.f32 %v506, %v568
    %573 = vrot.lane.b32.xlu0 %v569, 126
    %v574 = vpop.permute.xlu0 %573
    %575 = vrot.lane.b32.xlu0 %v570, 126
    %v576 = vpop.permute.xlu0 %575
    %v579 = vadd.f32 %v537, %v574
    %v580 = vadd.f32 %v538, %v576
    %s581 = sld [smem:[#allocation6 + $0x29]]
    %v582 = vstv %s581
    %v583 = vmul.f32 %v505, %v582
    %v584 = vmul.f32 %v506, %v582
    %587 = vrot.lane.b32.xlu0 %v583, 126
    %v588 = vpop.permute.xlu0 %587
    %589 = vrot.lane.b32.xlu0 %v584, 126
    %v590 = vpop.permute.xlu0 %589
    %v593 = vadd.f32 %v551, %v588
    %v594 = vadd.f32 %v552, %v590
    %s595 = sld [smem:[#allocation6 + $0x44]]
    %v596 = vstv %s595
    %v597 = vmul.f32 %v505, %v596
    %v598 = vmul.f32 %v506, %v596
    %601 = vrot.lane.b32.xlu0 %v597, 126
    %v602 = vpop.permute.xlu0 %601
    %603 = vrot.lane.b32.xlu0 %v598, 126
    %v604 = vpop.permute.xlu0 %603
    %v607 = vadd.f32 %v565, %v602
    %v608 = vadd.f32 %v566, %v604
    %v609 = vld [vmem:[%s400 + $0x2] sm:$0xff]
    %v610 = vld [vmem:[%s400 + $0xa] sm:$0x3f]
    %s611 = sld [smem:[#allocation6 + $0xf]]
    %v612 = vstv %s611
    %v613 = vmul.f32 %v609, %v612
    %v614 = vmul.f32 %v610, %v612
    %v615 = vadd.f32 %v579, %v613
    %v616 = vadd.f32 %v580, %v614
    %s617 = sld [smem:[#allocation6 + $0x2a]]
    %v618 = vstv %s617
    %v619 = vmul.f32 %v609, %v618
    %v620 = vmul.f32 %v610, %v618
    %v621 = vadd.f32 %v593, %v619
    %v622 = vadd.f32 %v594, %v620
    %s623 = sld [smem:[#allocation6 + $0x45]]
    %v624 = vstv %s623
    %v625 = vmul.f32 %v609, %v624
    %v626 = vmul.f32 %v610, %v624
    %v627 = vadd.f32 %v607, %v625
    %v628 = vadd.f32 %v608, %v626
    %s629 = sld [smem:[#allocation6 + $0x10]]
    %v630 = vstv %s629
    %v631 = vmul.f32 %v609, %v630
    %v632 = vmul.f32 %v610, %v630
    %635 = vrot.lane.b32.xlu0 %v631, 127
    %v636 = vpop.permute.xlu0 %635
    %637 = vrot.lane.b32.xlu0 %v632, 127
    %v638 = vpop.permute.xlu0 %637
    %v641 = vadd.f32 %v615, %v636
    %v642 = vadd.f32 %v616, %v638
    %s643 = sld [smem:[#allocation6 + $0x2b]]
    %v644 = vstv %s643
    %v645 = vmul.f32 %v609, %v644
    %v646 = vmul.f32 %v610, %v644
    %649 = vrot.lane.b32.xlu0 %v645, 127
    %v650 = vpop.permute.xlu0 %649
    %651 = vrot.lane.b32.xlu0 %v646, 127
    %v652 = vpop.permute.xlu0 %651
    %v655 = vadd.f32 %v621, %v650
    %v656 = vadd.f32 %v622, %v652
    %s657 = sld [smem:[#allocation6 + $0x46]]
    %v658 = vstv %s657
    %v659 = vmul.f32 %v609, %v658
    %v660 = vmul.f32 %v610, %v658
    %663 = vrot.lane.b32.xlu0 %v659, 127
    %v664 = vpop.permute.xlu0 %663
    %665 = vrot.lane.b32.xlu0 %v660, 127
    %v666 = vpop.permute.xlu0 %665
    %v669 = vadd.f32 %v627, %v664
    %v670 = vadd.f32 %v628, %v666
    %s671 = sld [smem:[#allocation6 + $0x11]]
    %v672 = vstv %s671
    %v673 = vmul.f32 %v609, %v672
    %v674 = vmul.f32 %v610, %v672
    %677 = vrot.lane.b32.xlu0 %v673, 126
    %v678 = vpop.permute.xlu0 %677
    %679 = vrot.lane.b32.xlu0 %v674, 126
    %v680 = vpop.permute.xlu0 %679
    %v683 = vadd.f32 %v641, %v678
    %v684 = vadd.f32 %v642, %v680
    %s685 = sld [smem:[#allocation6 + $0x2c]]
    %v686 = vstv %s685
    %v687 = vmul.f32 %v609, %v686
    %v688 = vmul.f32 %v610, %v686
    %691 = vrot.lane.b32.xlu0 %v687, 126
    %v692 = vpop.permute.xlu0 %691
    %693 = vrot.lane.b32.xlu0 %v688, 126
    %v694 = vpop.permute.xlu0 %693
    %v697 = vadd.f32 %v655, %v692
    %v698 = vadd.f32 %v656, %v694
    %s699 = sld [smem:[#allocation6 + $0x47]]
    %v700 = vstv %s699
    %v701 = vmul.f32 %v609, %v700
    %v702 = vmul.f32 %v610, %v700
    %705 = vrot.lane.b32.xlu0 %v701, 126
    %v706 = vpop.permute.xlu0 %705
    %707 = vrot.lane.b32.xlu0 %v702, 126
    %v708 = vpop.permute.xlu0 %707
    %v711 = vadd.f32 %v669, %v706
    %v712 = vadd.f32 %v670, %v708
    %s713 = scalar_lea.vmem [#allocation3], 32
    %v714 = vld [vmem:[%s713] sm:$0xff]
    %v715 = vld [vmem:[%s713 + $0x8] sm:$0x3f]
    %s716 = sld [smem:[#allocation6 + $0x12]]
    %v717 = vstv %s716
    %v718 = vmul.f32 %v714, %v717
    %v719 = vmul.f32 %v715, %v717
    %v720 = vadd.f32 %v683, %v718
    %v721 = vadd.f32 %v684, %v719
    %s722 = sld [smem:[#allocation6 + $0x2d]]
    %v723 = vstv %s722
    %v724 = vmul.f32 %v714, %v723
    %v725 = vmul.f32 %v715, %v723
    %v726 = vadd.f32 %v697, %v724
    %v727 = vadd.f32 %v698, %v725
    %s728 = sld [smem:[#allocation6 + $0x48]]
    %v729 = vstv %s728
    %v730 = vmul.f32 %v714, %v729
    %v731 = vmul.f32 %v715, %v729
    %v732 = vadd.f32 %v711, %v730
    %v733 = vadd.f32 %v712, %v731
    %s734 = sld [smem:[#allocation6 + $0x13]]
    %v735 = vstv %s734
    %v736 = vmul.f32 %v714, %v735
    %v737 = vmul.f32 %v715, %v735
    %740 = vrot.lane.b32.xlu0 %v736, 127
    %v741 = vpop.permute.xlu0 %740
    %742 = vrot.lane.b32.xlu0 %v737, 127
    %v743 = vpop.permute.xlu0 %742
    %v746 = vadd.f32 %v720, %v741
    %v747 = vadd.f32 %v721, %v743
    %s748 = sld [smem:[#allocation6 + $0x2e]]
    %v749 = vstv %s748
    %v750 = vmul.f32 %v714, %v749
    %v751 = vmul.f32 %v715, %v749
    %754 = vrot.lane.b32.xlu0 %v750, 127
    %v755 = vpop.permute.xlu0 %754
    %756 = vrot.lane.b32.xlu0 %v751, 127
    %v757 = vpop.permute.xlu0 %756
    %v760 = vadd.f32 %v726, %v755
    %v761 = vadd.f32 %v727, %v757
    %s762 = sld [smem:[#allocation6 + $0x49]]
    %v763 = vstv %s762
    %v764 = vmul.f32 %v714, %v763
    %v765 = vmul.f32 %v715, %v763
    %768 = vrot.lane.b32.xlu0 %v764, 127
    %v769 = vpop.permute.xlu0 %768
    %770 = vrot.lane.b32.xlu0 %v765, 127
    %v771 = vpop.permute.xlu0 %770
    %v774 = vadd.f32 %v732, %v769
    %v775 = vadd.f32 %v733, %v771
    %s776 = sld [smem:[#allocation6 + $0x14]]
    %v777 = vstv %s776
    %v778 = vmul.f32 %v714, %v777
    %v779 = vmul.f32 %v715, %v777
    %782 = vrot.lane.b32.xlu0 %v778, 126
    %v783 = vpop.permute.xlu0 %782
    %784 = vrot.lane.b32.xlu0 %v779, 126
    %v785 = vpop.permute.xlu0 %784
    %v788 = vadd.f32 %v746, %v783
    %v789 = vadd.f32 %v747, %v785
    %s790 = sld [smem:[#allocation6 + $0x2f]]
    %v791 = vstv %s790
    %v792 = vmul.f32 %v714, %v791
    %v793 = vmul.f32 %v715, %v791
    %796 = vrot.lane.b32.xlu0 %v792, 126
    %v797 = vpop.permute.xlu0 %796
    %798 = vrot.lane.b32.xlu0 %v793, 126
    %v799 = vpop.permute.xlu0 %798
    %v802 = vadd.f32 %v760, %v797
    %v803 = vadd.f32 %v761, %v799
    %s804 = sld [smem:[#allocation6 + $0x4a]]
    %v805 = vstv %s804
    %v806 = vmul.f32 %v714, %v805
    %v807 = vmul.f32 %v715, %v805
    %810 = vrot.lane.b32.xlu0 %v806, 126
    %v811 = vpop.permute.xlu0 %810
    %812 = vrot.lane.b32.xlu0 %v807, 126
    %v813 = vpop.permute.xlu0 %812
    %v816 = vadd.f32 %v774, %v811
    %v817 = vadd.f32 %v775, %v813
    %v818 = vld [vmem:[%s713 + $0x1] sm:$0xff]
    %v819 = vld [vmem:[%s713 + $0x9] sm:$0x3f]
    %s820 = sld [smem:[#allocation6 + $0x15]]
    %v821 = vstv %s820
    %v822 = vmul.f32 %v818, %v821
    %v823 = vmul.f32 %v819, %v821
    %v824 = vadd.f32 %v788, %v822
    %v825 = vadd.f32 %v789, %v823
    %s826 = sld [smem:[#allocation6 + $0x30]]
    %v827 = vstv %s826
    %v828 = vmul.f32 %v818, %v827
    %v829 = vmul.f32 %v819, %v827
    %v830 = vadd.f32 %v802, %v828
    %v831 = vadd.f32 %v803, %v829
    %s832 = sld [smem:[#allocation6 + $0x4b]]
    %v833 = vstv %s832
    %v834 = vmul.f32 %v818, %v833
    %v835 = vmul.f32 %v819, %v833
    %v836 = vadd.f32 %v816, %v834
    %v837 = vadd.f32 %v817, %v835
    %s838 = sld [smem:[#allocation6 + $0x16]]
    %v839 = vstv %s838
    %v840 = vmul.f32 %v818, %v839
    %v841 = vmul.f32 %v819, %v839
    %844 = vrot.lane.b32.xlu0 %v840, 127
    %v845 = vpop.permute.xlu0 %844
    %846 = vrot.lane.b32.xlu0 %v841, 127
    %v847 = vpop.permute.xlu0 %846
    %v850 = vadd.f32 %v824, %v845
    %v851 = vadd.f32 %v825, %v847
    %s852 = sld [smem:[#allocation6 + $0x31]]
    %v853 = vstv %s852
    %v854 = vmul.f32 %v818, %v853
    %v855 = vmul.f32 %v819, %v853
    %858 = vrot.lane.b32.xlu0 %v854, 127
    %v859 = vpop.permute.xlu0 %858
    %860 = vrot.lane.b32.xlu0 %v855, 127
    %v861 = vpop.permute.xlu0 %860
    %v864 = vadd.f32 %v830, %v859
    %v865 = vadd.f32 %v831, %v861
    %s866 = sld [smem:[#allocation6 + $0x4c]]
    %v867 = vstv %s866
    %v868 = vmul.f32 %v818, %v867
    %v869 = vmul.f32 %v819, %v867
    %872 = vrot.lane.b32.xlu0 %v868, 127
    %v873 = vpop.permute.xlu0 %872
    %874 = vrot.lane.b32.xlu0 %v869, 127
    %v875 = vpop.permute.xlu0 %874
    %v878 = vadd.f32 %v836, %v873
    %v879 = vadd.f32 %v837, %v875
    %s880 = sld [smem:[#allocation6 + $0x17]]
    %v881 = vstv %s880
    %v882 = vmul.f32 %v818, %v881
    %v883 = vmul.f32 %v819, %v881
    %886 = vrot.lane.b32.xlu0 %v882, 126
    %v887 = vpop.permute.xlu0 %886
    %888 = vrot.lane.b32.xlu0 %v883, 126
    %v889 = vpop.permute.xlu0 %888
    %v892 = vadd.f32 %v850, %v887
    %v893 = vadd.f32 %v851, %v889
    %s894 = sld [smem:[#allocation6 + $0x32]]
    %v895 = vstv %s894
    %v896 = vmul.f32 %v818, %v895
    %v897 = vmul.f32 %v819, %v895
    %900 = vrot.lane.b32.xlu0 %v896, 126
    %v901 = vpop.permute.xlu0 %900
    %902 = vrot.lane.b32.xlu0 %v897, 126
    %v903 = vpop.permute.xlu0 %902
    %v906 = vadd.f32 %v864, %v901
    %v907 = vadd.f32 %v865, %v903
    %s908 = sld [smem:[#allocation6 + $0x4d]]
    %v909 = vstv %s908
    %v910 = vmul.f32 %v818, %v909
    %v911 = vmul.f32 %v819, %v909
    %914 = vrot.lane.b32.xlu0 %v910, 126
    %v915 = vpop.permute.xlu0 %914
    %916 = vrot.lane.b32.xlu0 %v911, 126
    %v917 = vpop.permute.xlu0 %916
    %v920 = vadd.f32 %v878, %v915
    %v921 = vadd.f32 %v879, %v917
    %v922 = vld [vmem:[%s713 + $0x2] sm:$0xff]
    %v923 = vld [vmem:[%s713 + $0xa] sm:$0x3f]
    %s924 = sld [smem:[#allocation6 + $0x18]]
    %v925 = vstv %s924
    %v926 = vmul.f32 %v922, %v925
    %v927 = vmul.f32 %v923, %v925
    %v928 = vadd.f32 %v892, %v926
    %v929 = vadd.f32 %v893, %v927
    %s930 = sld [smem:[#allocation6 + $0x33]]
    %v931 = vstv %s930
    %v932 = vmul.f32 %v922, %v931
    %v933 = vmul.f32 %v923, %v931
    %v934 = vadd.f32 %v906, %v932
    %v935 = vadd.f32 %v907, %v933
    %s936 = sld [smem:[#allocation6 + $0x4e]]
    %v937 = vstv %s936
    %v938 = vmul.f32 %v922, %v937
    %v939 = vmul.f32 %v923, %v937
    %v940 = vadd.f32 %v920, %v938
    %v941 = vadd.f32 %v921, %v939
    %s942 = sld [smem:[#allocation6 + $0x19]]
    %v943 = vstv %s942
    %v944 = vmul.f32 %v922, %v943
    %v945 = vmul.f32 %v923, %v943
    %948 = vrot.lane.b32.xlu0 %v944, 127
    %v949 = vpop.permute.xlu0 %948
    %950 = vrot.lane.b32.xlu0 %v945, 127
    %v951 = vpop.permute.xlu0 %950
    %v954 = vadd.f32 %v928, %v949
    %v955 = vadd.f32 %v929, %v951
    %s956 = sld [smem:[#allocation6 + $0x34]]
    %v957 = vstv %s956
    %v958 = vmul.f32 %v922, %v957
    %v959 = vmul.f32 %v923, %v957
    %962 = vrot.lane.b32.xlu0 %v958, 127
    %v963 = vpop.permute.xlu0 %962
    %964 = vrot.lane.b32.xlu0 %v959, 127
    %v965 = vpop.permute.xlu0 %964
    %v968 = vadd.f32 %v934, %v963
    %v969 = vadd.f32 %v935, %v965
    %s970 = sld [smem:[#allocation6 + $0x4f]]
    %v971 = vstv %s970
    %v972 = vmul.f32 %v922, %v971
    %v973 = vmul.f32 %v923, %v971
    %976 = vrot.lane.b32.xlu0 %v972, 127
    %v977 = vpop.permute.xlu0 %976
    %978 = vrot.lane.b32.xlu0 %v973, 127
    %v979 = vpop.permute.xlu0 %978
    %v982 = vadd.f32 %v940, %v977
    %v983 = vadd.f32 %v941, %v979
    %s984 = sld [smem:[#allocation6 + $0x1a]]
    %v985 = vstv %s984
    %v986 = vmul.f32 %v922, %v985
    %v987 = vmul.f32 %v923, %v985
    %990 = vrot.lane.b32.xlu0 %v986, 126
    %v991 = vpop.permute.xlu0 %990
    %992 = vrot.lane.b32.xlu0 %v987, 126
    %v993 = vpop.permute.xlu0 %992
    %v996 = vadd.f32 %v954, %v991
    %v997 = vadd.f32 %v955, %v993
    %s998 = sld [smem:[#allocation6 + $0x35]]
    %v999 = vstv %s998
    %v1000 = vmul.f32 %v922, %v999
    %v1001 = vmul.f32 %v923, %v999
    %1004 = vrot.lane.b32.xlu0 %v1000, 126
    %v1005 = vpop.permute.xlu0 %1004
    %1006 = vrot.lane.b32.xlu0 %v1001, 126
    %v1007 = vpop.permute.xlu0 %1006
    %v1010 = vadd.f32 %v968, %v1005
    %v1011 = vadd.f32 %v969, %v1007
    %s1012 = sld [smem:[#allocation6 + $0x50]]
    %v1013 = vstv %s1012
    %v1014 = vmul.f32 %v922, %v1013
    %v1015 = vmul.f32 %v923, %v1013
    %1018 = vrot.lane.b32.xlu0 %v1014, 126
    %v1019 = vpop.permute.xlu0 %1018
    %1020 = vrot.lane.b32.xlu0 %v1015, 126
    %v1021 = vpop.permute.xlu0 %1020
    %v1024 = vadd.f32 %v982, %v1019
    %v1025 = vadd.f32 %v983, %v1021
    %vm1026 = vcmask 113664
    %1027 = vst.msk [vmem:[#allocation2] sm:$0xff] %vm1026, %v996
    %vm1028 = vcmask 111616
    %1029 = vst.msk [vmem:[#allocation2 + $0x8] sm:$0x3f] %vm1028, %v997
    %s1030 = scalar_lea.vmem [#allocation2], 16
    %1031 = vst.msk [vmem:[%s1030] sm:$0xff] %vm1026, %v1010
    %1032 = vst.msk [vmem:[%s1030 + $0x8] sm:$0x3f] %vm1028, %v1011
    %s1033 = scalar_lea.vmem [#allocation2], 32
    %1034 = vst.msk [vmem:[%s1033] sm:$0xff] %vm1026, %v1024
    %1035 = vst.msk [vmem:[%s1033 + $0x8] sm:$0x3f] %vm1028, %v1025
    %s1036 = sld [smem:[#allocation10]]
    %v1037 = vstv %s1036
    %s1038 = sld [smem:[#allocation10 + $0x1]]
    %v1039 = vstv %s1038
    %s1040 = sld [smem:[#allocation10 + $0x2]]
    %v1041 = vstv %s1040
    %v1042 = vld [vmem:[#allocation2] sm:$0xff]
    %v1043 = vld [vmem:[#allocation2 + $0x8] sm:$0xf]
    %s1044 = sld [smem:[#allocation9]]
    %v1045 = vstv %s1044
    %v1046 = vmul.f32 %v1042, %v1045
    %v1047 = vmul.f32 %v1043, %v1045
    %v1048 = vadd.f32 %v1037, %v1046
    %v1049 = vadd.f32 %v1037, %v1047
    %s1050 = sld [smem:[#allocation9 + $0x1b]]
    %v1051 = vstv %s1050
    %v1052 = vmul.f32 %v1042, %v1051
    %v1053 = vmul.f32 %v1043, %v1051
    %v1054 = vadd.f32 %v1039, %v1052
    %v1055 = vadd.f32 %v1039, %v1053
    %s1056 = sld [smem:[#allocation9 + $0x36]]
    %v1057 = vstv %s1056
    %v1058 = vmul.f32 %v1042, %v1057
    %v1059 = vmul.f32 %v1043, %v1057
    %v1060 = vadd.f32 %v1041, %v1058
    %v1061 = vadd.f32 %v1041, %v1059
    %s1062 = sld [smem:[#allocation9 + $0x1]]
    %v1063 = vstv %s1062
    %v1064 = vmul.f32 %v1042, %v1063
    %v1065 = vmul.f32 %v1043, %v1063
    %1068 = vrot.lane.b32.xlu0 %v1064, 127
    %v1069 = vpop.permute.xlu0 %1068
    %1070 = vrot.lane.b32.xlu0 %v1065, 127
    %v1071 = vpop.permute.xlu0 %1070
    %v1074 = vadd.f32 %v1048, %v1069
    %v1075 = vadd.f32 %v1049, %v1071
    %s1076 = sld [smem:[#allocation9 + $0x1c]]
    %v1077 = vstv %s1076
    %v1078 = vmul.f32 %v1042, %v1077
    %v1079 = vmul.f32 %v1043, %v1077
    %1082 = vrot.lane.b32.xlu0 %v1078, 127
    %v1083 = vpop.permute.xlu0 %1082
    %1084 = vrot.lane.b32.xlu0 %v1079, 127
    %v1085 = vpop.permute.xlu0 %1084
    %v1088 = vadd.f32 %v1054, %v1083
    %v1089 = vadd.f32 %v1055, %v1085
    %s1090 = sld [smem:[#allocation9 + $0x37]]
    %v1091 = vstv %s1090
    %v1092 = vmul.f32 %v1042, %v1091
    %v1093 = vmul.f32 %v1043, %v1091
    %1096 = vrot.lane.b32.xlu0 %v1092, 127
    %v1097 = vpop.permute.xlu0 %1096
    %1098 = vrot.lane.b32.xlu0 %v1093, 127
    %v1099 = vpop.permute.xlu0 %1098
    %v1102 = vadd.f32 %v1060, %v1097
    %v1103 = vadd.f32 %v1061, %v1099
    %s1104 = sld [smem:[#allocation9 + $0x2]]
    %v1105 = vstv %s1104
    %v1106 = vmul.f32 %v1042, %v1105
    %v1107 = vmul.f32 %v1043, %v1105
    %1110 = vrot.lane.b32.xlu0 %v1106, 126
    %v1111 = vpop.permute.xlu0 %1110
    %1112 = vrot.lane.b32.xlu0 %v1107, 126
    %v1113 = vpop.permute.xlu0 %1112
    %v1116 = vadd.f32 %v1074, %v1111
    %v1117 = vadd.f32 %v1075, %v1113
    %s1118 = sld [smem:[#allocation9 + $0x1d]]
    %v1119 = vstv %s1118
    %v1120 = vmul.f32 %v1042, %v1119
    %v1121 = vmul.f32 %v1043, %v1119
    %1124 = vrot.lane.b32.xlu0 %v1120, 126
    %v1125 = vpop.permute.xlu0 %1124
    %1126 = vrot.lane.b32.xlu0 %v1121, 126
    %v1127 = vpop.permute.xlu0 %1126
    %v1130 = vadd.f32 %v1088, %v1125
    %v1131 = vadd.f32 %v1089, %v1127
    %s1132 = sld [smem:[#allocation9 + $0x38]]
    %v1133 = vstv %s1132
    %v1134 = vmul.f32 %v1042, %v1133
    %v1135 = vmul.f32 %v1043, %v1133
    %1138 = vrot.lane.b32.xlu0 %v1134, 126
    %v1139 = vpop.permute.xlu0 %1138
    %1140 = vrot.lane.b32.xlu0 %v1135, 126
    %v1141 = vpop.permute.xlu0 %1140
    %v1144 = vadd.f32 %v1102, %v1139
    %v1145 = vadd.f32 %v1103, %v1141
    %v1146 = vld [vmem:[#allocation2 + $0x1] sm:$0xff]
    %v1147 = vld [vmem:[#allocation2 + $0x9] sm:$0xf]
    %s1148 = sld [smem:[#allocation9 + $0x3]]
    %v1149 = vstv %s1148
    %v1150 = vmul.f32 %v1146, %v1149
    %v1151 = vmul.f32 %v1147, %v1149
    %v1152 = vadd.f32 %v1116, %v1150
    %v1153 = vadd.f32 %v1117, %v1151
    %s1154 = sld [smem:[#allocation9 + $0x1e]]
    %v1155 = vstv %s1154
    %v1156 = vmul.f32 %v1146, %v1155
    %v1157 = vmul.f32 %v1147, %v1155
    %v1158 = vadd.f32 %v1130, %v1156
    %v1159 = vadd.f32 %v1131, %v1157
    %s1160 = sld [smem:[#allocation9 + $0x39]]
    %v1161 = vstv %s1160
    %v1162 = vmul.f32 %v1146, %v1161
    %v1163 = vmul.f32 %v1147, %v1161
    %v1164 = vadd.f32 %v1144, %v1162
    %v1165 = vadd.f32 %v1145, %v1163
    %s1166 = sld [smem:[#allocation9 + $0x4]]
    %v1167 = vstv %s1166
    %v1168 = vmul.f32 %v1146, %v1167
    %v1169 = vmul.f32 %v1147, %v1167
    %1172 = vrot.lane.b32.xlu0 %v1168, 127
    %v1173 = vpop.permute.xlu0 %1172
    %1174 = vrot.lane.b32.xlu0 %v1169, 127
    %v1175 = vpop.permute.xlu0 %1174
    %v1178 = vadd.f32 %v1152, %v1173
    %v1179 = vadd.f32 %v1153, %v1175
    %s1180 = sld [smem:[#allocation9 + $0x1f]]
    %v1181 = vstv %s1180
    %v1182 = vmul.f32 %v1146, %v1181
    %v1183 = vmul.f32 %v1147, %v1181
    %1186 = vrot.lane.b32.xlu0 %v1182, 127
    %v1187 = vpop.permute.xlu0 %1186
    %1188 = vrot.lane.b32.xlu0 %v1183, 127
    %v1189 = vpop.permute.xlu0 %1188
    %v1192 = vadd.f32 %v1158, %v1187
    %v1193 = vadd.f32 %v1159, %v1189
    %s1194 = sld [smem:[#allocation9 + $0x3a]]
    %v1195 = vstv %s1194
    %v1196 = vmul.f32 %v1146, %v1195
    %v1197 = vmul.f32 %v1147, %v1195
    %1200 = vrot.lane.b32.xlu0 %v1196, 127
    %v1201 = vpop.permute.xlu0 %1200
    %1202 = vrot.lane.b32.xlu0 %v1197, 127
    %v1203 = vpop.permute.xlu0 %1202
    %v1206 = vadd.f32 %v1164, %v1201
    %v1207 = vadd.f32 %v1165, %v1203
    %s1208 = sld [smem:[#allocation9 + $0x5]]
    %v1209 = vstv %s1208
    %v1210 = vmul.f32 %v1146, %v1209
    %v1211 = vmul.f32 %v1147, %v1209
    %1214 = vrot.lane.b32.xlu0 %v1210, 126
    %v1215 = vpop.permute.xlu0 %1214
    %1216 = vrot.lane.b32.xlu0 %v1211, 126
    %v1217 = vpop.permute.xlu0 %1216
    %v1220 = vadd.f32 %v1178, %v1215
    %v1221 = vadd.f32 %v1179, %v1217
    %s1222 = sld [smem:[#allocation9 + $0x20]]
    %v1223 = vstv %s1222
    %v1224 = vmul.f32 %v1146, %v1223
    %v1225 = vmul.f32 %v1147, %v1223
    %1228 = vrot.lane.b32.xlu0 %v1224, 126
    %v1229 = vpop.permute.xlu0 %1228
    %1230 = vrot.lane.b32.xlu0 %v1225, 126
    %v1231 = vpop.permute.xlu0 %1230
    %v1234 = vadd.f32 %v1192, %v1229
    %v1235 = vadd.f32 %v1193, %v1231
    %s1236 = sld [smem:[#allocation9 + $0x3b]]
    %v1237 = vstv %s1236
    %v1238 = vmul.f32 %v1146, %v1237
    %v1239 = vmul.f32 %v1147, %v1237
    %1242 = vrot.lane.b32.xlu0 %v1238, 126
    %v1243 = vpop.permute.xlu0 %1242
    %1244 = vrot.lane.b32.xlu0 %v1239, 126
    %v1245 = vpop.permute.xlu0 %1244
    %v1248 = vadd.f32 %v1206, %v1243
    %v1249 = vadd.f32 %v1207, %v1245
    %v1250 = vld [vmem:[#allocation2 + $0x2] sm:$0xff]
    %v1251 = vld [vmem:[#allocation2 + $0xa] sm:$0xf]
    %s1252 = sld [smem:[#allocation9 + $0x6]]
    %v1253 = vstv %s1252
    %v1254 = vmul.f32 %v1250, %v1253
    %v1255 = vmul.f32 %v1251, %v1253
    %v1256 = vadd.f32 %v1220, %v1254
    %v1257 = vadd.f32 %v1221, %v1255
    %s1258 = sld [smem:[#allocation9 + $0x21]]
    %v1259 = vstv %s1258
    %v1260 = vmul.f32 %v1250, %v1259
    %v1261 = vmul.f32 %v1251, %v1259
    %v1262 = vadd.f32 %v1234, %v1260
    %v1263 = vadd.f32 %v1235, %v1261
    %s1264 = sld [smem:[#allocation9 + $0x3c]]
    %v1265 = vstv %s1264
    %v1266 = vmul.f32 %v1250, %v1265
    %v1267 = vmul.f32 %v1251, %v1265
    %v1268 = vadd.f32 %v1248, %v1266
    %v1269 = vadd.f32 %v1249, %v1267
    %s1270 = sld [smem:[#allocation9 + $0x7]]
    %v1271 = vstv %s1270
    %v1272 = vmul.f32 %v1250, %v1271
    %v1273 = vmul.f32 %v1251, %v1271
    %1276 = vrot.lane.b32.xlu0 %v1272, 127
    %v1277 = vpop.permute.xlu0 %1276
    %1278 = vrot.lane.b32.xlu0 %v1273, 127
    %v1279 = vpop.permute.xlu0 %1278
    %v1282 = vadd.f32 %v1256, %v1277
    %v1283 = vadd.f32 %v1257, %v1279
    %s1284 = sld [smem:[#allocation9 + $0x22]]
    %v1285 = vstv %s1284
    %v1286 = vmul.f32 %v1250, %v1285
    %v1287 = vmul.f32 %v1251, %v1285
    %1290 = vrot.lane.b32.xlu0 %v1286, 127
    %v1291 = vpop.permute.xlu0 %1290
    %1292 = vrot.lane.b32.xlu0 %v1287, 127
    %v1293 = vpop.permute.xlu0 %1292
    %v1296 = vadd.f32 %v1262, %v1291
    %v1297 = vadd.f32 %v1263, %v1293
    %s1298 = sld [smem:[#allocation9 + $0x3d]]
    %v1299 = vstv %s1298
    %v1300 = vmul.f32 %v1250, %v1299
    %v1301 = vmul.f32 %v1251, %v1299
    %1304 = vrot.lane.b32.xlu0 %v1300, 127
    %v1305 = vpop.permute.xlu0 %1304
    %1306 = vrot.lane.b32.xlu0 %v1301, 127
    %v1307 = vpop.permute.xlu0 %1306
    %v1310 = vadd.f32 %v1268, %v1305
    %v1311 = vadd.f32 %v1269, %v1307
    %s1312 = sld [smem:[#allocation9 + $0x8]]
    %v1313 = vstv %s1312
    %v1314 = vmul.f32 %v1250, %v1313
    %v1315 = vmul.f32 %v1251, %v1313
    %1318 = vrot.lane.b32.xlu0 %v1314, 126
    %v1319 = vpop.permute.xlu0 %1318
    %1320 = vrot.lane.b32.xlu0 %v1315, 126
    %v1321 = vpop.permute.xlu0 %1320
    %v1324 = vadd.f32 %v1282, %v1319
    %v1325 = vadd.f32 %v1283, %v1321
    %s1326 = sld [smem:[#allocation9 + $0x23]]
    %v1327 = vstv %s1326
    %v1328 = vmul.f32 %v1250, %v1327
    %v1329 = vmul.f32 %v1251, %v1327
    %1332 = vrot.lane.b32.xlu0 %v1328, 126
    %v1333 = vpop.permute.xlu0 %1332
    %1334 = vrot.lane.b32.xlu0 %v1329, 126
    %v1335 = vpop.permute.xlu0 %1334
    %v1338 = vadd.f32 %v1296, %v1333
    %v1339 = vadd.f32 %v1297, %v1335
    %s1340 = sld [smem:[#allocation9 + $0x3e]]
    %v1341 = vstv %s1340
    %v1342 = vmul.f32 %v1250, %v1341
    %v1343 = vmul.f32 %v1251, %v1341
    %1346 = vrot.lane.b32.xlu0 %v1342, 126
    %v1347 = vpop.permute.xlu0 %1346
    %1348 = vrot.lane.b32.xlu0 %v1343, 126
    %v1349 = vpop.permute.xlu0 %1348
    %v1352 = vadd.f32 %v1310, %v1347
    %v1353 = vadd.f32 %v1311, %v1349
    %v1354 = vld [vmem:[%s1030] sm:$0xff]
    %v1355 = vld [vmem:[%s1030 + $0x8] sm:$0xf]
    %s1356 = sld [smem:[#allocation9 + $0x9]]
    %v1357 = vstv %s1356
    %v1358 = vmul.f32 %v1354, %v1357
    %v1359 = vmul.f32 %v1355, %v1357
    %v1360 = vadd.f32 %v1324, %v1358
    %v1361 = vadd.f32 %v1325, %v1359
    %s1362 = sld [smem:[#allocation9 + $0x24]]
    %v1363 = vstv %s1362
    %v1364 = vmul.f32 %v1354, %v1363
    %v1365 = vmul.f32 %v1355, %v1363
    %v1366 = vadd.f32 %v1338, %v1364
    %v1367 = vadd.f32 %v1339, %v1365
    %s1368 = sld [smem:[#allocation9 + $0x3f]]
    %v1369 = vstv %s1368
    %v1370 = vmul.f32 %v1354, %v1369
    %v1371 = vmul.f32 %v1355, %v1369
    %v1372 = vadd.f32 %v1352, %v1370
    %v1373 = vadd.f32 %v1353, %v1371
    %s1374 = sld [smem:[#allocation9 + $0xa]]
    %v1375 = vstv %s1374
    %v1376 = vmul.f32 %v1354, %v1375
    %v1377 = vmul.f32 %v1355, %v1375
    %1380 = vrot.lane.b32.xlu0 %v1376, 127
    %v1381 = vpop.permute.xlu0 %1380
    %1382 = vrot.lane.b32.xlu0 %v1377, 127
    %v1383 = vpop.permute.xlu0 %1382
    %v1386 = vadd.f32 %v1360, %v1381
    %v1387 = vadd.f32 %v1361, %v1383
    %s1388 = sld [smem:[#allocation9 + $0x25]]
    %v1389 = vstv %s1388
    %v1390 = vmul.f32 %v1354, %v1389
    %v1391 = vmul.f32 %v1355, %v1389
    %1394 = vrot.lane.b32.xlu0 %v1390, 127
    %v1395 = vpop.permute.xlu0 %1394
    %1396 = vrot.lane.b32.xlu0 %v1391, 127
    %v1397 = vpop.permute.xlu0 %1396
    %v1400 = vadd.f32 %v1366, %v1395
    %v1401 = vadd.f32 %v1367, %v1397
    %s1402 = sld [smem:[#allocation9 + $0x40]]
    %v1403 = vstv %s1402
    %v1404 = vmul.f32 %v1354, %v1403
    %v1405 = vmul.f32 %v1355, %v1403
    %1408 = vrot.lane.b32.xlu0 %v1404, 127
    %v1409 = vpop.permute.xlu0 %1408
    %1410 = vrot.lane.b32.xlu0 %v1405, 127
    %v1411 = vpop.permute.xlu0 %1410
    %v1414 = vadd.f32 %v1372, %v1409
    %v1415 = vadd.f32 %v1373, %v1411
    %s1416 = sld [smem:[#allocation9 + $0xb]]
    %v1417 = vstv %s1416
    %v1418 = vmul.f32 %v1354, %v1417
    %v1419 = vmul.f32 %v1355, %v1417
    %1422 = vrot.lane.b32.xlu0 %v1418, 126
    %v1423 = vpop.permute.xlu0 %1422
    %1424 = vrot.lane.b32.xlu0 %v1419, 126
    %v1425 = vpop.permute.xlu0 %1424
    %v1428 = vadd.f32 %v1386, %v1423
    %v1429 = vadd.f32 %v1387, %v1425
    %s1430 = sld [smem:[#allocation9 + $0x26]]
    %v1431 = vstv %s1430
    %v1432 = vmul.f32 %v1354, %v1431
    %v1433 = vmul.f32 %v1355, %v1431
    %1436 = vrot.lane.b32.xlu0 %v1432, 126
    %v1437 = vpop.permute.xlu0 %1436
    %1438 = vrot.lane.b32.xlu0 %v1433, 126
    %v1439 = vpop.permute.xlu0 %1438
    %v1442 = vadd.f32 %v1400, %v1437
    %v1443 = vadd.f32 %v1401, %v1439
    %s1444 = sld [smem:[#allocation9 + $0x41]]
    %v1445 = vstv %s1444
    %v1446 = vmul.f32 %v1354, %v1445
    %v1447 = vmul.f32 %v1355, %v1445
    %1450 = vrot.lane.b32.xlu0 %v1446, 126
    %v1451 = vpop.permute.xlu0 %1450
    %1452 = vrot.lane.b32.xlu0 %v1447, 126
    %v1453 = vpop.permute.xlu0 %1452
    %v1456 = vadd.f32 %v1414, %v1451
    %v1457 = vadd.f32 %v1415, %v1453
    %v1458 = vld [vmem:[%s1030 + $0x1] sm:$0xff]
    %v1459 = vld [vmem:[%s1030 + $0x9] sm:$0xf]
    %s1460 = sld [smem:[#allocation9 + $0xc]]
    %v1461 = vstv %s1460
    %v1462 = vmul.f32 %v1458, %v1461
    %v1463 = vmul.f32 %v1459, %v1461
    %v1464 = vadd.f32 %v1428, %v1462
    %v1465 = vadd.f32 %v1429, %v1463
    %s1466 = sld [smem:[#allocation9 + $0x27]]
    %v1467 = vstv %s1466
    %v1468 = vmul.f32 %v1458, %v1467
    %v1469 = vmul.f32 %v1459, %v1467
    %v1470 = vadd.f32 %v1442, %v1468
    %v1471 = vadd.f32 %v1443, %v1469
    %s1472 = sld [smem:[#allocation9 + $0x42]]
    %v1473 = vstv %s1472
    %v1474 = vmul.f32 %v1458, %v1473
    %v1475 = vmul.f32 %v1459, %v1473
    %v1476 = vadd.f32 %v1456, %v1474
    %v1477 = vadd.f32 %v1457, %v1475
    %s1478 = sld [smem:[#allocation9 + $0xd]]
    %v1479 = vstv %s1478
    %v1480 = vmul.f32 %v1458, %v1479
    %v1481 = vmul.f32 %v1459, %v1479
    %1484 = vrot.lane.b32.xlu0 %v1480, 127
    %v1485 = vpop.permute.xlu0 %1484
    %1486 = vrot.lane.b32.xlu0 %v1481, 127
    %v1487 = vpop.permute.xlu0 %1486
    %v1490 = vadd.f32 %v1464, %v1485
    %v1491 = vadd.f32 %v1465, %v1487
    %s1492 = sld [smem:[#allocation9 + $0x28]]
    %v1493 = vstv %s1492
    %v1494 = vmul.f32 %v1458, %v1493
    %v1495 = vmul.f32 %v1459, %v1493
    %1498 = vrot.lane.b32.xlu0 %v1494, 127
    %v1499 = vpop.permute.xlu0 %1498
    %1500 = vrot.lane.b32.xlu0 %v1495, 127
    %v1501 = vpop.permute.xlu0 %1500
    %v1504 = vadd.f32 %v1470, %v1499
    %v1505 = vadd.f32 %v1471, %v1501
    %s1506 = sld [smem:[#allocation9 + $0x43]]
    %v1507 = vstv %s1506
    %v1508 = vmul.f32 %v1458, %v1507
    %v1509 = vmul.f32 %v1459, %v1507
    %1512 = vrot.lane.b32.xlu0 %v1508, 127
    %v1513 = vpop.permute.xlu0 %1512
    %1514 = vrot.lane.b32.xlu0 %v1509, 127
    %v1515 = vpop.permute.xlu0 %1514
    %v1518 = vadd.f32 %v1476, %v1513
    %v1519 = vadd.f32 %v1477, %v1515
    %s1520 = sld [smem:[#allocation9 + $0xe]]
    %v1521 = vstv %s1520
    %v1522 = vmul.f32 %v1458, %v1521
    %v1523 = vmul.f32 %v1459, %v1521
    %1526 = vrot.lane.b32.xlu0 %v1522, 126
    %v1527 = vpop.permute.xlu0 %1526
    %1528 = vrot.lane.b32.xlu0 %v1523, 126
    %v1529 = vpop.permute.xlu0 %1528
    %v1532 = vadd.f32 %v1490, %v1527
    %v1533 = vadd.f32 %v1491, %v1529
    %s1534 = sld [smem:[#allocation9 + $0x29]]
    %v1535 = vstv %s1534
    %v1536 = vmul.f32 %v1458, %v1535
    %v1537 = vmul.f32 %v1459, %v1535
    %1540 = vrot.lane.b32.xlu0 %v1536, 126
    %v1541 = vpop.permute.xlu0 %1540
    %1542 = vrot.lane.b32.xlu0 %v1537, 126
    %v1543 = vpop.permute.xlu0 %1542
    %v1546 = vadd.f32 %v1504, %v1541
    %v1547 = vadd.f32 %v1505, %v1543
    %s1548 = sld [smem:[#allocation9 + $0x44]]
    %v1549 = vstv %s1548
    %v1550 = vmul.f32 %v1458, %v1549
    %v1551 = vmul.f32 %v1459, %v1549
    %1554 = vrot.lane.b32.xlu0 %v1550, 126
    %v1555 = vpop.permute.xlu0 %1554
    %1556 = vrot.lane.b32.xlu0 %v1551, 126
    %v1557 = vpop.permute.xlu0 %1556
    %v1560 = vadd.f32 %v1518, %v1555
    %v1561 = vadd.f32 %v1519, %v1557
    %v1562 = vld [vmem:[%s1030 + $0x2] sm:$0xff]
    %v1563 = vld [vmem:[%s1030 + $0xa] sm:$0xf]
    %s1564 = sld [smem:[#allocation9 + $0xf]]
    %v1565 = vstv %s1564
    %v1566 = vmul.f32 %v1562, %v1565
    %v1567 = vmul.f32 %v1563, %v1565
    %v1568 = vadd.f32 %v1532, %v1566
    %v1569 = vadd.f32 %v1533, %v1567
    %s1570 = sld [smem:[#allocation9 + $0x2a]]
    %v1571 = vstv %s1570
    %v1572 = vmul.f32 %v1562, %v1571
    %v1573 = vmul.f32 %v1563, %v1571
    %v1574 = vadd.f32 %v1546, %v1572
    %v1575 = vadd.f32 %v1547, %v1573
    %s1576 = sld [smem:[#allocation9 + $0x45]]
    %v1577 = vstv %s1576
    %v1578 = vmul.f32 %v1562, %v1577
    %v1579 = vmul.f32 %v1563, %v1577
    %v1580 = vadd.f32 %v1560, %v1578
    %v1581 = vadd.f32 %v1561, %v1579
    %s1582 = sld [smem:[#allocation9 + $0x10]]
    %v1583 = vstv %s1582
    %v1584 = vmul.f32 %v1562, %v1583
    %v1585 = vmul.f32 %v1563, %v1583
    %1588 = vrot.lane.b32.xlu0 %v1584, 127
    %v1589 = vpop.permute.xlu0 %1588
    %1590 = vrot.lane.b32.xlu0 %v1585, 127
    %v1591 = vpop.permute.xlu0 %1590
    %v1594 = vadd.f32 %v1568, %v1589
    %v1595 = vadd.f32 %v1569, %v1591
    %s1596 = sld [smem:[#allocation9 + $0x2b]]
    %v1597 = vstv %s1596
    %v1598 = vmul.f32 %v1562, %v1597
    %v1599 = vmul.f32 %v1563, %v1597
    %1602 = vrot.lane.b32.xlu0 %v1598, 127
    %v1603 = vpop.permute.xlu0 %1602
    %1604 = vrot.lane.b32.xlu0 %v1599, 127
    %v1605 = vpop.permute.xlu0 %1604
    %v1608 = vadd.f32 %v1574, %v1603
    %v1609 = vadd.f32 %v1575, %v1605
    %s1610 = sld [smem:[#allocation9 + $0x46]]
    %v1611 = vstv %s1610
    %v1612 = vmul.f32 %v1562, %v1611
    %v1613 = vmul.f32 %v1563, %v1611
    %1616 = vrot.lane.b32.xlu0 %v1612, 127
    %v1617 = vpop.permute.xlu0 %1616
    %1618 = vrot.lane.b32.xlu0 %v1613, 127
    %v1619 = vpop.permute.xlu0 %1618
    %v1622 = vadd.f32 %v1580, %v1617
    %v1623 = vadd.f32 %v1581, %v1619
    %s1624 = sld [smem:[#allocation9 + $0x11]]
    %v1625 = vstv %s1624
    %v1626 = vmul.f32 %v1562, %v1625
    %v1627 = vmul.f32 %v1563, %v1625
    %1630 = vrot.lane.b32.xlu0 %v1626, 126
    %v1631 = vpop.permute.xlu0 %1630
    %1632 = vrot.lane.b32.xlu0 %v1627, 126
    %v1633 = vpop.permute.xlu0 %1632
    %v1636 = vadd.f32 %v1594, %v1631
    %v1637 = vadd.f32 %v1595, %v1633
    %s1638 = sld [smem:[#allocation9 + $0x2c]]
    %v1639 = vstv %s1638
    %v1640 = vmul.f32 %v1562, %v1639
    %v1641 = vmul.f32 %v1563, %v1639
    %1644 = vrot.lane.b32.xlu0 %v1640, 126
    %v1645 = vpop.permute.xlu0 %1644
    %1646 = vrot.lane.b32.xlu0 %v1641, 126
    %v1647 = vpop.permute.xlu0 %1646
    %v1650 = vadd.f32 %v1608, %v1645
    %v1651 = vadd.f32 %v1609, %v1647
    %s1652 = sld [smem:[#allocation9 + $0x47]]
    %v1653 = vstv %s1652
    %v1654 = vmul.f32 %v1562, %v1653
    %v1655 = vmul.f32 %v1563, %v1653
    %1658 = vrot.lane.b32.xlu0 %v1654, 126
    %v1659 = vpop.permute.xlu0 %1658
    %1660 = vrot.lane.b32.xlu0 %v1655, 126
    %v1661 = vpop.permute.xlu0 %1660
    %v1664 = vadd.f32 %v1622, %v1659
    %v1665 = vadd.f32 %v1623, %v1661
    %v1666 = vld [vmem:[%s1033] sm:$0xff]
    %v1667 = vld [vmem:[%s1033 + $0x8] sm:$0xf]
    %s1668 = sld [smem:[#allocation9 + $0x12]]
    %v1669 = vstv %s1668
    %v1670 = vmul.f32 %v1666, %v1669
    %v1671 = vmul.f32 %v1667, %v1669
    %v1672 = vadd.f32 %v1636, %v1670
    %v1673 = vadd.f32 %v1637, %v1671
    %s1674 = sld [smem:[#allocation9 + $0x2d]]
    %v1675 = vstv %s1674
    %v1676 = vmul.f32 %v1666, %v1675
    %v1677 = vmul.f32 %v1667, %v1675
    %v1678 = vadd.f32 %v1650, %v1676
    %v1679 = vadd.f32 %v1651, %v1677
    %s1680 = sld [smem:[#allocation9 + $0x48]]
    %v1681 = vstv %s1680
    %v1682 = vmul.f32 %v1666, %v1681
    %v1683 = vmul.f32 %v1667, %v1681
    %v1684 = vadd.f32 %v1664, %v1682
    %v1685 = vadd.f32 %v1665, %v1683
    %s1686 = sld [smem:[#allocation9 + $0x13]]
    %v1687 = vstv %s1686
    %v1688 = vmul.f32 %v1666, %v1687
    %v1689 = vmul.f32 %v1667, %v1687
    %1692 = vrot.lane.b32.xlu0 %v1688, 127
    %v1693 = vpop.permute.xlu0 %1692
    %1694 = vrot.lane.b32.xlu0 %v1689, 127
    %v1695 = vpop.permute.xlu0 %1694
    %v1698 = vadd.f32 %v1672, %v1693
    %v1699 = vadd.f32 %v1673, %v1695
    %s1700 = sld [smem:[#allocation9 + $0x2e]]
    %v1701 = vstv %s1700
    %v1702 = vmul.f32 %v1666, %v1701
    %v1703 = vmul.f32 %v1667, %v1701
    %1706 = vrot.lane.b32.xlu0 %v1702, 127
    %v1707 = vpop.permute.xlu0 %1706
    %1708 = vrot.lane.b32.xlu0 %v1703, 127
    %v1709 = vpop.permute.xlu0 %1708
    %v1712 = vadd.f32 %v1678, %v1707
    %v1713 = vadd.f32 %v1679, %v1709
    %s1714 = sld [smem:[#allocation9 + $0x49]]
    %v1715 = vstv %s1714
    %v1716 = vmul.f32 %v1666, %v1715
    %v1717 = vmul.f32 %v1667, %v1715
    %1720 = vrot.lane.b32.xlu0 %v1716, 127
    %v1721 = vpop.permute.xlu0 %1720
    %1722 = vrot.lane.b32.xlu0 %v1717, 127
    %v1723 = vpop.permute.xlu0 %1722
    %v1726 = vadd.f32 %v1684, %v1721
    %v1727 = vadd.f32 %v1685, %v1723
    %s1728 = sld [smem:[#allocation9 + $0x14]]
    %v1729 = vstv %s1728
    %v1730 = vmul.f32 %v1666, %v1729
    %v1731 = vmul.f32 %v1667, %v1729
    %1734 = vrot.lane.b32.xlu0 %v1730, 126
    %v1735 = vpop.permute.xlu0 %1734
    %1736 = vrot.lane.b32.xlu0 %v1731, 126
    %v1737 = vpop.permute.xlu0 %1736
    %v1740 = vadd.f32 %v1698, %v1735
    %v1741 = vadd.f32 %v1699, %v1737
    %s1742 = sld [smem:[#allocation9 + $0x2f]]
    %v1743 = vstv %s1742
    %v1744 = vmul.f32 %v1666, %v1743
    %v1745 = vmul.f32 %v1667, %v1743
    %1748 = vrot.lane.b32.xlu0 %v1744, 126
    %v1749 = vpop.permute.xlu0 %1748
    %1750 = vrot.lane.b32.xlu0 %v1745, 126
    %v1751 = vpop.permute.xlu0 %1750
    %v1754 = vadd.f32 %v1712, %v1749
    %v1755 = vadd.f32 %v1713, %v1751
    %s1756 = sld [smem:[#allocation9 + $0x4a]]
    %v1757 = vstv %s1756
    %v1758 = vmul.f32 %v1666, %v1757
    %v1759 = vmul.f32 %v1667, %v1757
    %1762 = vrot.lane.b32.xlu0 %v1758, 126
    %v1763 = vpop.permute.xlu0 %1762
    %1764 = vrot.lane.b32.xlu0 %v1759, 126
    %v1765 = vpop.permute.xlu0 %1764
    %v1768 = vadd.f32 %v1726, %v1763
    %v1769 = vadd.f32 %v1727, %v1765
    %v1770 = vld [vmem:[%s1033 + $0x1] sm:$0xff]
    %v1771 = vld [vmem:[%s1033 + $0x9] sm:$0xf]
    %s1772 = sld [smem:[#allocation9 + $0x15]]
    %v1773 = vstv %s1772
    %v1774 = vmul.f32 %v1770, %v1773
    %v1775 = vmul.f32 %v1771, %v1773
    %v1776 = vadd.f32 %v1740, %v1774
    %v1777 = vadd.f32 %v1741, %v1775
    %s1778 = sld [smem:[#allocation9 + $0x30]]
    %v1779 = vstv %s1778
    %v1780 = vmul.f32 %v1770, %v1779
    %v1781 = vmul.f32 %v1771, %v1779
    %v1782 = vadd.f32 %v1754, %v1780
    %v1783 = vadd.f32 %v1755, %v1781
    %s1784 = sld [smem:[#allocation9 + $0x4b]]
    %v1785 = vstv %s1784
    %v1786 = vmul.f32 %v1770, %v1785
    %v1787 = vmul.f32 %v1771, %v1785
    %v1788 = vadd.f32 %v1768, %v1786
    %v1789 = vadd.f32 %v1769, %v1787
    %s1790 = sld [smem:[#allocation9 + $0x16]]
    %v1791 = vstv %s1790
    %v1792 = vmul.f32 %v1770, %v1791
    %v1793 = vmul.f32 %v1771, %v1791
    %1796 = vrot.lane.b32.xlu0 %v1792, 127
    %v1797 = vpop.permute.xlu0 %1796
    %1798 = vrot.lane.b32.xlu0 %v1793, 127
    %v1799 = vpop.permute.xlu0 %1798
    %v1802 = vadd.f32 %v1776, %v1797
    %v1803 = vadd.f32 %v1777, %v1799
    %s1804 = sld [smem:[#allocation9 + $0x31]]
    %v1805 = vstv %s1804
    %v1806 = vmul.f32 %v1770, %v1805
    %v1807 = vmul.f32 %v1771, %v1805
    %1810 = vrot.lane.b32.xlu0 %v1806, 127
    %v1811 = vpop.permute.xlu0 %1810
    %1812 = vrot.lane.b32.xlu0 %v1807, 127
    %v1813 = vpop.permute.xlu0 %1812
    %v1816 = vadd.f32 %v1782, %v1811
    %v1817 = vadd.f32 %v1783, %v1813
    %s1818 = sld [smem:[#allocation9 + $0x4c]]
    %v1819 = vstv %s1818
    %v1820 = vmul.f32 %v1770, %v1819
    %v1821 = vmul.f32 %v1771, %v1819
    %1824 = vrot.lane.b32.xlu0 %v1820, 127
    %v1825 = vpop.permute.xlu0 %1824
    %1826 = vrot.lane.b32.xlu0 %v1821, 127
    %v1827 = vpop.permute.xlu0 %1826
    %v1830 = vadd.f32 %v1788, %v1825
    %v1831 = vadd.f32 %v1789, %v1827
    %s1832 = sld [smem:[#allocation9 + $0x17]]
    %v1833 = vstv %s1832
    %v1834 = vmul.f32 %v1770, %v1833
    %v1835 = vmul.f32 %v1771, %v1833
    %1838 = vrot.lane.b32.xlu0 %v1834, 126
    %v1839 = vpop.permute.xlu0 %1838
    %1840 = vrot.lane.b32.xlu0 %v1835, 126
    %v1841 = vpop.permute.xlu0 %1840
    %v1844 = vadd.f32 %v1802, %v1839
    %v1845 = vadd.f32 %v1803, %v1841
    %s1846 = sld [smem:[#allocation9 + $0x32]]
    %v1847 = vstv %s1846
    %v1848 = vmul.f32 %v1770, %v1847
    %v1849 = vmul.f32 %v1771, %v1847
    %1852 = vrot.lane.b32.xlu0 %v1848, 126
    %v1853 = vpop.permute.xlu0 %1852
    %1854 = vrot.lane.b32.xlu0 %v1849, 126
    %v1855 = vpop.permute.xlu0 %1854
    %v1858 = vadd.f32 %v1816, %v1853
    %v1859 = vadd.f32 %v1817, %v1855
    %s1860 = sld [smem:[#allocation9 + $0x4d]]
    %v1861 = vstv %s1860
    %v1862 = vmul.f32 %v1770, %v1861
    %v1863 = vmul.f32 %v1771, %v1861
    %1866 = vrot.lane.b32.xlu0 %v1862, 126
    %v1867 = vpop.permute.xlu0 %1866
    %1868 = vrot.lane.b32.xlu0 %v1863, 126
    %v1869 = vpop.permute.xlu0 %1868
    %v1872 = vadd.f32 %v1830, %v1867
    %v1873 = vadd.f32 %v1831, %v1869
    %v1874 = vld [vmem:[%s1033 + $0x2] sm:$0xff]
    %v1875 = vld [vmem:[%s1033 + $0xa] sm:$0xf]
    %s1876 = sld [smem:[#allocation9 + $0x18]]
    %v1877 = vstv %s1876
    %v1878 = vmul.f32 %v1874, %v1877
    %v1879 = vmul.f32 %v1875, %v1877
    %v1880 = vadd.f32 %v1844, %v1878
    %v1881 = vadd.f32 %v1845, %v1879
    %s1882 = sld [smem:[#allocation9 + $0x33]]
    %v1883 = vstv %s1882
    %v1884 = vmul.f32 %v1874, %v1883
    %v1885 = vmul.f32 %v1875, %v1883
    %v1886 = vadd.f32 %v1858, %v1884
    %v1887 = vadd.f32 %v1859, %v1885
    %s1888 = sld [smem:[#allocation9 + $0x4e]]
    %v1889 = vstv %s1888
    %v1890 = vmul.f32 %v1874, %v1889
    %v1891 = vmul.f32 %v1875, %v1889
    %v1892 = vadd.f32 %v1872, %v1890
    %v1893 = vadd.f32 %v1873, %v1891
    %s1894 = sld [smem:[#allocation9 + $0x19]]
    %v1895 = vstv %s1894
    %v1896 = vmul.f32 %v1874, %v1895
    %v1897 = vmul.f32 %v1875, %v1895
    %1900 = vrot.lane.b32.xlu0 %v1896, 127
    %v1901 = vpop.permute.xlu0 %1900
    %1902 = vrot.lane.b32.xlu0 %v1897, 127
    %v1903 = vpop.permute.xlu0 %1902
    %v1906 = vadd.f32 %v1880, %v1901
    %v1907 = vadd.f32 %v1881, %v1903
    %s1908 = sld [smem:[#allocation9 + $0x34]]
    %v1909 = vstv %s1908
    %v1910 = vmul.f32 %v1874, %v1909
    %v1911 = vmul.f32 %v1875, %v1909
    %1914 = vrot.lane.b32.xlu0 %v1910, 127
    %v1915 = vpop.permute.xlu0 %1914
    %1916 = vrot.lane.b32.xlu0 %v1911, 127
    %v1917 = vpop.permute.xlu0 %1916
    %v1920 = vadd.f32 %v1886, %v1915
    %v1921 = vadd.f32 %v1887, %v1917
    %s1922 = sld [smem:[#allocation9 + $0x4f]]
    %v1923 = vstv %s1922
    %v1924 = vmul.f32 %v1874, %v1923
    %v1925 = vmul.f32 %v1875, %v1923
    %1928 = vrot.lane.b32.xlu0 %v1924, 127
    %v1929 = vpop.permute.xlu0 %1928
    %1930 = vrot.lane.b32.xlu0 %v1925, 127
    %v1931 = vpop.permute.xlu0 %1930
    %v1934 = vadd.f32 %v1892, %v1929
    %v1935 = vadd.f32 %v1893, %v1931
    %s1936 = sld [smem:[#allocation9 + $0x1a]]
    %v1937 = vstv %s1936
    %v1938 = vmul.f32 %v1874, %v1937
    %v1939 = vmul.f32 %v1875, %v1937
    %1942 = vrot.lane.b32.xlu0 %v1938, 126
    %v1943 = vpop.permute.xlu0 %1942
    %1944 = vrot.lane.b32.xlu0 %v1939, 126
    %v1945 = vpop.permute.xlu0 %1944
    %v1948 = vadd.f32 %v1906, %v1943
    %v1949 = vadd.f32 %v1907, %v1945
    %s1950 = sld [smem:[#allocation9 + $0x35]]
    %v1951 = vstv %s1950
    %v1952 = vmul.f32 %v1874, %v1951
    %v1953 = vmul.f32 %v1875, %v1951
    %1956 = vrot.lane.b32.xlu0 %v1952, 126
    %v1957 = vpop.permute.xlu0 %1956
    %1958 = vrot.lane.b32.xlu0 %v1953, 126
    %v1959 = vpop.permute.xlu0 %1958
    %v1962 = vadd.f32 %v1920, %v1957
    %v1963 = vadd.f32 %v1921, %v1959
    %s1964 = sld [smem:[#allocation9 + $0x50]]
    %v1965 = vstv %s1964
    %v1966 = vmul.f32 %v1874, %v1965
    %v1967 = vmul.f32 %v1875, %v1965
    %1970 = vrot.lane.b32.xlu0 %v1966, 126
    %v1971 = vpop.permute.xlu0 %1970
    %1972 = vrot.lane.b32.xlu0 %v1967, 126
    %v1973 = vpop.permute.xlu0 %1972
    %v1976 = vadd.f32 %v1934, %v1971
    %v1977 = vadd.f32 %v1935, %v1973
    %1980 = vrot.lane.b32.xlu0 %v1146, 127
    %v1981 = vpop.permute.xlu0 %1980
    %1982 = vrot.lane.b32.xlu0 %v1147, 127
    %v1983 = vpop.permute.xlu0 %1982
    %v1986 = vadd.f32 %v1948, %v1981
    %v1987 = vadd.f32 %v1949, %v1983
    %vm1988 = vcmask 97280
    %1989 = vst.msk [vmem:[%s5] sm:$0xff] %vm1988, %v1986
    %vm1990 = vcmask 93184
    %1991 = vst.msk [vmem:[%s5 + $0x8] sm:$0xf] %vm1990, %v1987
    %v1992 = vld [vmem:[%s1030 + $0x1] sm:$0xff]
    %v1993 = vld [vmem:[%s1030 + $0x9] sm:$0xf]
    %1996 = vrot.lane.b32.xlu0 %v1992, 127
    %v1997 = vpop.permute.xlu0 %1996
    %1998 = vrot.lane.b32.xlu0 %v1993, 127
    %v1999 = vpop.permute.xlu0 %1998
    %v2002 = vadd.f32 %v1962, %v1997
    %v2003 = vadd.f32 %v1963, %v1999
    %s2004 = scalar_lea.vmem %s5, 16
    %2005 = vst.msk [vmem:[%s2004] sm:$0xff] %vm1988, %v2002
    %2006 = vst.msk [vmem:[%s2004 + $0x8] sm:$0xf] %vm1990, %v2003
    %v2007 = vld [vmem:[%s1033 + $0x1] sm:$0xff]
    %v2008 = vld [vmem:[%s1033 + $0x9] sm:$0xf]
    %2011 = vrot.lane.b32.xlu0 %v2007, 127
    %v2012 = vpop.permute.xlu0 %2011
    %2013 = vrot.lane.b32.xlu0 %v2008, 127
    %v2014 = vpop.permute.xlu0 %2013
    %v2017 = vadd.f32 %v1976, %v2012
    %v2018 = vadd.f32 %v1977, %v2014
    %s2019 = scalar_lea.vmem %s5, 32
    %2020 = vst.msk [vmem:[%s2019] sm:$0xff] %vm1988, %v2017
    %2021 = vst.msk [vmem:[%s2019 + $0x8] sm:$0xf] %vm1990, %v2018
    %s2022 = sld [smem:[#allocation7]]
    %v2023 = vstv %s2022
    %s2024 = sld [smem:[#allocation7 + $0x1]]
    %v2025 = vstv %s2024
    %s2026 = sld [smem:[#allocation7 + $0x2]]
    %v2027 = vstv %s2026
    %s2028 = scalar_lea.vmem [#allocation3], 48
    %v2029 = vld [vmem:[%s2028] sm:$0xff]
    %v2030 = vld [vmem:[%s2028 + $0x8] sm:$0x3f]
    %s2031 = sld [smem:[#allocation6]]
    %v2032 = vstv %s2031
    %v2033 = vmul.f32 %v2029, %v2032
    %v2034 = vmul.f32 %v2030, %v2032
    %v2035 = vadd.f32 %v2023, %v2033
    %v2036 = vadd.f32 %v2023, %v2034
    %s2037 = sld [smem:[#allocation6 + $0x1b]]
    %v2038 = vstv %s2037
    %v2039 = vmul.f32 %v2029, %v2038
    %v2040 = vmul.f32 %v2030, %v2038
    %v2041 = vadd.f32 %v2025, %v2039
    %v2042 = vadd.f32 %v2025, %v2040
    %s2043 = sld [smem:[#allocation6 + $0x36]]
    %v2044 = vstv %s2043
    %v2045 = vmul.f32 %v2029, %v2044
    %v2046 = vmul.f32 %v2030, %v2044
    %v2047 = vadd.f32 %v2027, %v2045
    %v2048 = vadd.f32 %v2027, %v2046
    %s2049 = sld [smem:[#allocation6 + $0x1]]
    %v2050 = vstv %s2049
    %v2051 = vmul.f32 %v2029, %v2050
    %v2052 = vmul.f32 %v2030, %v2050
    %2055 = vrot.lane.b32.xlu0 %v2051, 127
    %v2056 = vpop.permute.xlu0 %2055
    %2057 = vrot.lane.b32.xlu0 %v2052, 127
    %v2058 = vpop.permute.xlu0 %2057
    %v2061 = vadd.f32 %v2035, %v2056
    %v2062 = vadd.f32 %v2036, %v2058
    %s2063 = sld [smem:[#allocation6 + $0x1c]]
    %v2064 = vstv %s2063
    %v2065 = vmul.f32 %v2029, %v2064
    %v2066 = vmul.f32 %v2030, %v2064
    %2069 = vrot.lane.b32.xlu0 %v2065, 127
    %v2070 = vpop.permute.xlu0 %2069
    %2071 = vrot.lane.b32.xlu0 %v2066, 127
    %v2072 = vpop.permute.xlu0 %2071
    %v2075 = vadd.f32 %v2041, %v2070
    %v2076 = vadd.f32 %v2042, %v2072
    %s2077 = sld [smem:[#allocation6 + $0x37]]
    %v2078 = vstv %s2077
    %v2079 = vmul.f32 %v2029, %v2078
    %v2080 = vmul.f32 %v2030, %v2078
    %2083 = vrot.lane.b32.xlu0 %v2079, 127
    %v2084 = vpop.permute.xlu0 %2083
    %2085 = vrot.lane.b32.xlu0 %v2080, 127
    %v2086 = vpop.permute.xlu0 %2085
    %v2089 = vadd.f32 %v2047, %v2084
    %v2090 = vadd.f32 %v2048, %v2086
    %s2091 = sld [smem:[#allocation6 + $0x2]]
    %v2092 = vstv %s2091
    %v2093 = vmul.f32 %v2029, %v2092
    %v2094 = vmul.f32 %v2030, %v2092
    %2097 = vrot.lane.b32.xlu0 %v2093, 126
    %v2098 = vpop.permute.xlu0 %2097
    %2099 = vrot.lane.b32.xlu0 %v2094, 126
    %v2100 = vpop.permute.xlu0 %2099
    %v2103 = vadd.f32 %v2061, %v2098
    %v2104 = vadd.f32 %v2062, %v2100
    %s2105 = sld [smem:[#allocation6 + $0x1d]]
    %v2106 = vstv %s2105
    %v2107 = vmul.f32 %v2029, %v2106
    %v2108 = vmul.f32 %v2030, %v2106
    %2111 = vrot.lane.b32.xlu0 %v2107, 126
    %v2112 = vpop.permute.xlu0 %2111
    %2113 = vrot.lane.b32.xlu0 %v2108, 126
    %v2114 = vpop.permute.xlu0 %2113
    %v2117 = vadd.f32 %v2075, %v2112
    %v2118 = vadd.f32 %v2076, %v2114
    %s2119 = sld [smem:[#allocation6 + $0x38]]
    %v2120 = vstv %s2119
    %v2121 = vmul.f32 %v2029, %v2120
    %v2122 = vmul.f32 %v2030, %v2120
    %2125 = vrot.lane.b32.xlu0 %v2121, 126
    %v2126 = vpop.permute.xlu0 %2125
    %2127 = vrot.lane.b32.xlu0 %v2122, 126
    %v2128 = vpop.permute.xlu0 %2127
    %v2131 = vadd.f32 %v2089, %v2126
    %v2132 = vadd.f32 %v2090, %v2128
    %v2133 = vld [vmem:[%s2028 + $0x1] sm:$0xff]
    %v2134 = vld [vmem:[%s2028 + $0x9] sm:$0x3f]
    %s2135 = sld [smem:[#allocation6 + $0x3]]
    %v2136 = vstv %s2135
    %v2137 = vmul.f32 %v2133, %v2136
    %v2138 = vmul.f32 %v2134, %v2136
    %v2139 = vadd.f32 %v2103, %v2137
    %v2140 = vadd.f32 %v2104, %v2138
    %s2141 = sld [smem:[#allocation6 + $0x1e]]
    %v2142 = vstv %s2141
    %v2143 = vmul.f32 %v2133, %v2142
    %v2144 = vmul.f32 %v2134, %v2142
    %v2145 = vadd.f32 %v2117, %v2143
    %v2146 = vadd.f32 %v2118, %v2144
    %s2147 = sld [smem:[#allocation6 + $0x39]]
    %v2148 = vstv %s2147
    %v2149 = vmul.f32 %v2133, %v2148
    %v2150 = vmul.f32 %v2134, %v2148
    %v2151 = vadd.f32 %v2131, %v2149
    %v2152 = vadd.f32 %v2132, %v2150
    %s2153 = sld [smem:[#allocation6 + $0x4]]
    %v2154 = vstv %s2153
    %v2155 = vmul.f32 %v2133, %v2154
    %v2156 = vmul.f32 %v2134, %v2154
    %2159 = vrot.lane.b32.xlu0 %v2155, 127
    %v2160 = vpop.permute.xlu0 %2159
    %2161 = vrot.lane.b32.xlu0 %v2156, 127
    %v2162 = vpop.permute.xlu0 %2161
    %v2165 = vadd.f32 %v2139, %v2160
    %v2166 = vadd.f32 %v2140, %v2162
    %s2167 = sld [smem:[#allocation6 + $0x1f]]
    %v2168 = vstv %s2167
    %v2169 = vmul.f32 %v2133, %v2168
    %v2170 = vmul.f32 %v2134, %v2168
    %2173 = vrot.lane.b32.xlu0 %v2169, 127
    %v2174 = vpop.permute.xlu0 %2173
    %2175 = vrot.lane.b32.xlu0 %v2170, 127
    %v2176 = vpop.permute.xlu0 %2175
    %v2179 = vadd.f32 %v2145, %v2174
    %v2180 = vadd.f32 %v2146, %v2176
    %s2181 = sld [smem:[#allocation6 + $0x3a]]
    %v2182 = vstv %s2181
    %v2183 = vmul.f32 %v2133, %v2182
    %v2184 = vmul.f32 %v2134, %v2182
    %2187 = vrot.lane.b32.xlu0 %v2183, 127
    %v2188 = vpop.permute.xlu0 %2187
    %2189 = vrot.lane.b32.xlu0 %v2184, 127
    %v2190 = vpop.permute.xlu0 %2189
    %v2193 = vadd.f32 %v2151, %v2188
    %v2194 = vadd.f32 %v2152, %v2190
    %s2195 = sld [smem:[#allocation6 + $0x5]]
    %v2196 = vstv %s2195
    %v2197 = vmul.f32 %v2133, %v2196
    %v2198 = vmul.f32 %v2134, %v2196
    %2201 = vrot.lane.b32.xlu0 %v2197, 126
    %v2202 = vpop.permute.xlu0 %2201
    %2203 = vrot.lane.b32.xlu0 %v2198, 126
    %v2204 = vpop.permute.xlu0 %2203
    %v2207 = vadd.f32 %v2165, %v2202
    %v2208 = vadd.f32 %v2166, %v2204
    %s2209 = sld [smem:[#allocation6 + $0x20]]
    %v2210 = vstv %s2209
    %v2211 = vmul.f32 %v2133, %v2210
    %v2212 = vmul.f32 %v2134, %v2210
    %2215 = vrot.lane.b32.xlu0 %v2211, 126
    %v2216 = vpop.permute.xlu0 %2215
    %2217 = vrot.lane.b32.xlu0 %v2212, 126
    %v2218 = vpop.permute.xlu0 %2217
    %v2221 = vadd.f32 %v2179, %v2216
    %v2222 = vadd.f32 %v2180, %v2218
    %s2223 = sld [smem:[#allocation6 + $0x3b]]
    %v2224 = vstv %s2223
    %v2225 = vmul.f32 %v2133, %v2224
    %v2226 = vmul.f32 %v2134, %v2224
    %2229 = vrot.lane.b32.xlu0 %v2225, 126
    %v2230 = vpop.permute.xlu0 %2229
    %2231 = vrot.lane.b32.xlu0 %v2226, 126
    %v2232 = vpop.permute.xlu0 %2231
    %v2235 = vadd.f32 %v2193, %v2230
    %v2236 = vadd.f32 %v2194, %v2232
    %v2237 = vld [vmem:[%s2028 + $0x2] sm:$0xff]
    %v2238 = vld [vmem:[%s2028 + $0xa] sm:$0x3f]
    %s2239 = sld [smem:[#allocation6 + $0x6]]
    %v2240 = vstv %s2239
    %v2241 = vmul.f32 %v2237, %v2240
    %v2242 = vmul.f32 %v2238, %v2240
    %v2243 = vadd.f32 %v2207, %v2241
    %v2244 = vadd.f32 %v2208, %v2242
    %s2245 = sld [smem:[#allocation6 + $0x21]]
    %v2246 = vstv %s2245
    %v2247 = vmul.f32 %v2237, %v2246
    %v2248 = vmul.f32 %v2238, %v2246
    %v2249 = vadd.f32 %v2221, %v2247
    %v2250 = vadd.f32 %v2222, %v2248
    %s2251 = sld [smem:[#allocation6 + $0x3c]]
    %v2252 = vstv %s2251
    %v2253 = vmul.f32 %v2237, %v2252
    %v2254 = vmul.f32 %v2238, %v2252
    %v2255 = vadd.f32 %v2235, %v2253
    %v2256 = vadd.f32 %v2236, %v2254
    %s2257 = sld [smem:[#allocation6 + $0x7]]
    %v2258 = vstv %s2257
    %v2259 = vmul.f32 %v2237, %v2258
    %v2260 = vmul.f32 %v2238, %v2258
    %2263 = vrot.lane.b32.xlu0 %v2259, 127
    %v2264 = vpop.permute.xlu0 %2263
    %2265 = vrot.lane.b32.xlu0 %v2260, 127
    %v2266 = vpop.permute.xlu0 %2265
    %v2269 = vadd.f32 %v2243, %v2264
    %v2270 = vadd.f32 %v2244, %v2266
    %s2271 = sld [smem:[#allocation6 + $0x22]]
    %v2272 = vstv %s2271
    %v2273 = vmul.f32 %v2237, %v2272
    %v2274 = vmul.f32 %v2238, %v2272
    %2277 = vrot.lane.b32.xlu0 %v2273, 127
    %v2278 = vpop.permute.xlu0 %2277
    %2279 = vrot.lane.b32.xlu0 %v2274, 127
    %v2280 = vpop.permute.xlu0 %2279
    %v2283 = vadd.f32 %v2249, %v2278
    %v2284 = vadd.f32 %v2250, %v2280
    %s2285 = sld [smem:[#allocation6 + $0x3d]]
    %v2286 = vstv %s2285
    %v2287 = vmul.f32 %v2237, %v2286
    %v2288 = vmul.f32 %v2238, %v2286
    %2291 = vrot.lane.b32.xlu0 %v2287, 127
    %v2292 = vpop.permute.xlu0 %2291
    %2293 = vrot.lane.b32.xlu0 %v2288, 127
    %v2294 = vpop.permute.xlu0 %2293
    %v2297 = vadd.f32 %v2255, %v2292
    %v2298 = vadd.f32 %v2256, %v2294
    %s2299 = sld [smem:[#allocation6 + $0x8]]
    %v2300 = vstv %s2299
    %v2301 = vmul.f32 %v2237, %v2300
    %v2302 = vmul.f32 %v2238, %v2300
    %2305 = vrot.lane.b32.xlu0 %v2301, 126
    %v2306 = vpop.permute.xlu0 %2305
    %2307 = vrot.lane.b32.xlu0 %v2302, 126
    %v2308 = vpop.permute.xlu0 %2307
    %v2311 = vadd.f32 %v2269, %v2306
    %v2312 = vadd.f32 %v2270, %v2308
    %s2313 = sld [smem:[#allocation6 + $0x23]]
    %v2314 = vstv %s2313
    %v2315 = vmul.f32 %v2237, %v2314
    %v2316 = vmul.f32 %v2238, %v2314
    %2319 = vrot.lane.b32.xlu0 %v2315, 126
    %v2320 = vpop.permute.xlu0 %2319
    %2321 = vrot.lane.b32.xlu0 %v2316, 126
    %v2322 = vpop.permute.xlu0 %2321
    %v2325 = vadd.f32 %v2283, %v2320
    %v2326 = vadd.f32 %v2284, %v2322
    %s2327 = sld [smem:[#allocation6 + $0x3e]]
    %v2328 = vstv %s2327
    %v2329 = vmul.f32 %v2237, %v2328
    %v2330 = vmul.f32 %v2238, %v2328
    %2333 = vrot.lane.b32.xlu0 %v2329, 126
    %v2334 = vpop.permute.xlu0 %2333
    %2335 = vrot.lane.b32.xlu0 %v2330, 126
    %v2336 = vpop.permute.xlu0 %2335
    %v2339 = vadd.f32 %v2297, %v2334
    %v2340 = vadd.f32 %v2298, %v2336
    %s2341 = scalar_lea.vmem [#allocation3], 64
    %v2342 = vld [vmem:[%s2341] sm:$0xff]
    %v2343 = vld [vmem:[%s2341 + $0x8] sm:$0x3f]
    %s2344 = sld [smem:[#allocation6 + $0x9]]
    %v2345 = vstv %s2344
    %v2346 = vmul.f32 %v2342, %v2345
    %v2347 = vmul.f32 %v2343, %v2345
    %v2348 = vadd.f32 %v2311, %v2346
    %v2349 = vadd.f32 %v2312, %v2347
    %s2350 = sld [smem:[#allocation6 + $0x24]]
    %v2351 = vstv %s2350
    %v2352 = vmul.f32 %v2342, %v2351
    %v2353 = vmul.f32 %v2343, %v2351
    %v2354 = vadd.f32 %v2325, %v2352
    %v2355 = vadd.f32 %v2326, %v2353
    %s2356 = sld [smem:[#allocation6 + $0x3f]]
    %v2357 = vstv %s2356
    %v2358 = vmul.f32 %v2342, %v2357
    %v2359 = vmul.f32 %v2343, %v2357
    %v2360 = vadd.f32 %v2339, %v2358
    %v2361 = vadd.f32 %v2340, %v2359
    %s2362 = sld [smem:[#allocation6 + $0xa]]
    %v2363 = vstv %s2362
    %v2364 = vmul.f32 %v2342, %v2363
    %v2365 = vmul.f32 %v2343, %v2363
    %2368 = vrot.lane.b32.xlu0 %v2364, 127
    %v2369 = vpop.permute.xlu0 %2368
    %2370 = vrot.lane.b32.xlu0 %v2365, 127
    %v2371 = vpop.permute.xlu0 %2370
    %v2374 = vadd.f32 %v2348, %v2369
    %v2375 = vadd.f32 %v2349, %v2371
    %s2376 = sld [smem:[#allocation6 + $0x25]]
    %v2377 = vstv %s2376
    %v2378 = vmul.f32 %v2342, %v2377
    %v2379 = vmul.f32 %v2343, %v2377
    %2382 = vrot.lane.b32.xlu0 %v2378, 127
    %v2383 = vpop.permute.xlu0 %2382
    %2384 = vrot.lane.b32.xlu0 %v2379, 127
    %v2385 = vpop.permute.xlu0 %2384
    %v2388 = vadd.f32 %v2354, %v2383
    %v2389 = vadd.f32 %v2355, %v2385
    %s2390 = sld [smem:[#allocation6 + $0x40]]
    %v2391 = vstv %s2390
    %v2392 = vmul.f32 %v2342, %v2391
    %v2393 = vmul.f32 %v2343, %v2391
    %2396 = vrot.lane.b32.xlu0 %v2392, 127
    %v2397 = vpop.permute.xlu0 %2396
    %2398 = vrot.lane.b32.xlu0 %v2393, 127
    %v2399 = vpop.permute.xlu0 %2398
    %v2402 = vadd.f32 %v2360, %v2397
    %v2403 = vadd.f32 %v2361, %v2399
    %s2404 = sld [smem:[#allocation6 + $0xb]]
    %v2405 = vstv %s2404
    %v2406 = vmul.f32 %v2342, %v2405
    %v2407 = vmul.f32 %v2343, %v2405
    %2410 = vrot.lane.b32.xlu0 %v2406, 126
    %v2411 = vpop.permute.xlu0 %2410
    %2412 = vrot.lane.b32.xlu0 %v2407, 126
    %v2413 = vpop.permute.xlu0 %2412
    %v2416 = vadd.f32 %v2374, %v2411
    %v2417 = vadd.f32 %v2375, %v2413
    %s2418 = sld [smem:[#allocation6 + $0x26]]
    %v2419 = vstv %s2418
    %v2420 = vmul.f32 %v2342, %v2419
    %v2421 = vmul.f32 %v2343, %v2419
    %2424 = vrot.lane.b32.xlu0 %v2420, 126
    %v2425 = vpop.permute.xlu0 %2424
    %2426 = vrot.lane.b32.xlu0 %v2421, 126
    %v2427 = vpop.permute.xlu0 %2426
    %v2430 = vadd.f32 %v2388, %v2425
    %v2431 = vadd.f32 %v2389, %v2427
    %s2432 = sld [smem:[#allocation6 + $0x41]]
    %v2433 = vstv %s2432
    %v2434 = vmul.f32 %v2342, %v2433
    %v2435 = vmul.f32 %v2343, %v2433
    %2438 = vrot.lane.b32.xlu0 %v2434, 126
    %v2439 = vpop.permute.xlu0 %2438
    %2440 = vrot.lane.b32.xlu0 %v2435, 126
    %v2441 = vpop.permute.xlu0 %2440
    %v2444 = vadd.f32 %v2402, %v2439
    %v2445 = vadd.f32 %v2403, %v2441
    %v2446 = vld [vmem:[%s2341 + $0x1] sm:$0xff]
    %v2447 = vld [vmem:[%s2341 + $0x9] sm:$0x3f]
    %s2448 = sld [smem:[#allocation6 + $0xc]]
    %v2449 = vstv %s2448
    %v2450 = vmul.f32 %v2446, %v2449
    %v2451 = vmul.f32 %v2447, %v2449
    %v2452 = vadd.f32 %v2416, %v2450
    %v2453 = vadd.f32 %v2417, %v2451
    %s2454 = sld [smem:[#allocation6 + $0x27]]
    %v2455 = vstv %s2454
    %v2456 = vmul.f32 %v2446, %v2455
    %v2457 = vmul.f32 %v2447, %v2455
    %v2458 = vadd.f32 %v2430, %v2456
    %v2459 = vadd.f32 %v2431, %v2457
    %s2460 = sld [smem:[#allocation6 + $0x42]]
    %v2461 = vstv %s2460
    %v2462 = vmul.f32 %v2446, %v2461
    %v2463 = vmul.f32 %v2447, %v2461
    %v2464 = vadd.f32 %v2444, %v2462
    %v2465 = vadd.f32 %v2445, %v2463
    %s2466 = sld [smem:[#allocation6 + $0xd]]
    %v2467 = vstv %s2466
    %v2468 = vmul.f32 %v2446, %v2467
    %v2469 = vmul.f32 %v2447, %v2467
    %2472 = vrot.lane.b32.xlu0 %v2468, 127
    %v2473 = vpop.permute.xlu0 %2472
    %2474 = vrot.lane.b32.xlu0 %v2469, 127
    %v2475 = vpop.permute.xlu0 %2474
    %v2478 = vadd.f32 %v2452, %v2473
    %v2479 = vadd.f32 %v2453, %v2475
    %s2480 = sld [smem:[#allocation6 + $0x28]]
    %v2481 = vstv %s2480
    %v2482 = vmul.f32 %v2446, %v2481
    %v2483 = vmul.f32 %v2447, %v2481
    %2486 = vrot.lane.b32.xlu0 %v2482, 127
    %v2487 = vpop.permute.xlu0 %2486
    %2488 = vrot.lane.b32.xlu0 %v2483, 127
    %v2489 = vpop.permute.xlu0 %2488
    %v2492 = vadd.f32 %v2458, %v2487
    %v2493 = vadd.f32 %v2459, %v2489
    %s2494 = sld [smem:[#allocation6 + $0x43]]
    %v2495 = vstv %s2494
    %v2496 = vmul.f32 %v2446, %v2495
    %v2497 = vmul.f32 %v2447, %v2495
    %2500 = vrot.lane.b32.xlu0 %v2496, 127
    %v2501 = vpop.permute.xlu0 %2500
    %2502 = vrot.lane.b32.xlu0 %v2497, 127
    %v2503 = vpop.permute.xlu0 %2502
    %v2506 = vadd.f32 %v2464, %v2501
    %v2507 = vadd.f32 %v2465, %v2503
    %s2508 = sld [smem:[#allocation6 + $0xe]]
    %v2509 = vstv %s2508
    %v2510 = vmul.f32 %v2446, %v2509
    %v2511 = vmul.f32 %v2447, %v2509
    %2514 = vrot.lane.b32.xlu0 %v2510, 126
    %v2515 = vpop.permute.xlu0 %2514
    %2516 = vrot.lane.b32.xlu0 %v2511, 126
    %v2517 = vpop.permute.xlu0 %2516
    %v2520 = vadd.f32 %v2478, %v2515
    %v2521 = vadd.f32 %v2479, %v2517
    %s2522 = sld [smem:[#allocation6 + $0x29]]
    %v2523 = vstv %s2522
    %v2524 = vmul.f32 %v2446, %v2523
    %v2525 = vmul.f32 %v2447, %v2523
    %2528 = vrot.lane.b32.xlu0 %v2524, 126
    %v2529 = vpop.permute.xlu0 %2528
    %2530 = vrot.lane.b32.xlu0 %v2525, 126
    %v2531 = vpop.permute.xlu0 %2530
    %v2534 = vadd.f32 %v2492, %v2529
    %v2535 = vadd.f32 %v2493, %v2531
    %s2536 = sld [smem:[#allocation6 + $0x44]]
    %v2537 = vstv %s2536
    %v2538 = vmul.f32 %v2446, %v2537
    %v2539 = vmul.f32 %v2447, %v2537
    %2542 = vrot.lane.b32.xlu0 %v2538, 126
    %v2543 = vpop.permute.xlu0 %2542
    %2544 = vrot.lane.b32.xlu0 %v2539, 126
    %v2545 = vpop.permute.xlu0 %2544
    %v2548 = vadd.f32 %v2506, %v2543
    %v2549 = vadd.f32 %v2507, %v2545
    %v2550 = vld [vmem:[%s2341 + $0x2] sm:$0xff]
    %v2551 = vld [vmem:[%s2341 + $0xa] sm:$0x3f]
    %s2552 = sld [smem:[#allocation6 + $0xf]]
    %v2553 = vstv %s2552
    %v2554 = vmul.f32 %v2550, %v2553
    %v2555 = vmul.f32 %v2551, %v2553
    %v2556 = vadd.f32 %v2520, %v2554
    %v2557 = vadd.f32 %v2521, %v2555
    %s2558 = sld [smem:[#allocation6 + $0x2a]]
    %v2559 = vstv %s2558
    %v2560 = vmul.f32 %v2550, %v2559
    %v2561 = vmul.f32 %v2551, %v2559
    %v2562 = vadd.f32 %v2534, %v2560
    %v2563 = vadd.f32 %v2535, %v2561
    %s2564 = sld [smem:[#allocation6 + $0x45]]
    %v2565 = vstv %s2564
    %v2566 = vmul.f32 %v2550, %v2565
    %v2567 = vmul.f32 %v2551, %v2565
    %v2568 = vadd.f32 %v2548, %v2566
    %v2569 = vadd.f32 %v2549, %v2567
    %s2570 = sld [smem:[#allocation6 + $0x10]]
    %v2571 = vstv %s2570
    %v2572 = vmul.f32 %v2550, %v2571
    %v2573 = vmul.f32 %v2551, %v2571
    %2576 = vrot.lane.b32.xlu0 %v2572, 127
    %v2577 = vpop.permute.xlu0 %2576
    %2578 = vrot.lane.b32.xlu0 %v2573, 127
    %v2579 = vpop.permute.xlu0 %2578
    %v2582 = vadd.f32 %v2556, %v2577
    %v2583 = vadd.f32 %v2557, %v2579
    %s2584 = sld [smem:[#allocation6 + $0x2b]]
    %v2585 = vstv %s2584
    %v2586 = vmul.f32 %v2550, %v2585
    %v2587 = vmul.f32 %v2551, %v2585
    %2590 = vrot.lane.b32.xlu0 %v2586, 127
    %v2591 = vpop.permute.xlu0 %2590
    %2592 = vrot.lane.b32.xlu0 %v2587, 127
    %v2593 = vpop.permute.xlu0 %2592
    %v2596 = vadd.f32 %v2562, %v2591
    %v2597 = vadd.f32 %v2563, %v2593
    %s2598 = sld [smem:[#allocation6 + $0x46]]
    %v2599 = vstv %s2598
    %v2600 = vmul.f32 %v2550, %v2599
    %v2601 = vmul.f32 %v2551, %v2599
    %2604 = vrot.lane.b32.xlu0 %v2600, 127
    %v2605 = vpop.permute.xlu0 %2604
    %2606 = vrot.lane.b32.xlu0 %v2601, 127
    %v2607 = vpop.permute.xlu0 %2606
    %v2610 = vadd.f32 %v2568, %v2605
    %v2611 = vadd.f32 %v2569, %v2607
    %s2612 = sld [smem:[#allocation6 + $0x11]]
    %v2613 = vstv %s2612
    %v2614 = vmul.f32 %v2550, %v2613
    %v2615 = vmul.f32 %v2551, %v2613
    %2618 = vrot.lane.b32.xlu0 %v2614, 126
    %v2619 = vpop.permute.xlu0 %2618
    %2620 = vrot.lane.b32.xlu0 %v2615, 126
    %v2621 = vpop.permute.xlu0 %2620
    %v2624 = vadd.f32 %v2582, %v2619
    %v2625 = vadd.f32 %v2583, %v2621
    %s2626 = sld [smem:[#allocation6 + $0x2c]]
    %v2627 = vstv %s2626
    %v2628 = vmul.f32 %v2550, %v2627
    %v2629 = vmul.f32 %v2551, %v2627
    %2632 = vrot.lane.b32.xlu0 %v2628, 126
    %v2633 = vpop.permute.xlu0 %2632
    %2634 = vrot.lane.b32.xlu0 %v2629, 126
    %v2635 = vpop.permute.xlu0 %2634
    %v2638 = vadd.f32 %v2596, %v2633
    %v2639 = vadd.f32 %v2597, %v2635
    %s2640 = sld [smem:[#allocation6 + $0x47]]
    %v2641 = vstv %s2640
    %v2642 = vmul.f32 %v2550, %v2641
    %v2643 = vmul.f32 %v2551, %v2641
    %2646 = vrot.lane.b32.xlu0 %v2642, 126
    %v2647 = vpop.permute.xlu0 %2646
    %2648 = vrot.lane.b32.xlu0 %v2643, 126
    %v2649 = vpop.permute.xlu0 %2648
    %v2652 = vadd.f32 %v2610, %v2647
    %v2653 = vadd.f32 %v2611, %v2649
    %s2654 = scalar_lea.vmem [#allocation3], 80
    %v2655 = vld [vmem:[%s2654] sm:$0xff]
    %v2656 = vld [vmem:[%s2654 + $0x8] sm:$0x3f]
    %s2657 = sld [smem:[#allocation6 + $0x12]]
    %v2658 = vstv %s2657
    %v2659 = vmul.f32 %v2655, %v2658
    %v2660 = vmul.f32 %v2656, %v2658
    %v2661 = vadd.f32 %v2624, %v2659
    %v2662 = vadd.f32 %v2625, %v2660
    %s2663 = sld [smem:[#allocation6 + $0x2d]]
    %v2664 = vstv %s2663
    %v2665 = vmul.f32 %v2655, %v2664
    %v2666 = vmul.f32 %v2656, %v2664
    %v2667 = vadd.f32 %v2638, %v2665
    %v2668 = vadd.f32 %v2639, %v2666
    %s2669 = sld [smem:[#allocation6 + $0x48]]
    %v2670 = vstv %s2669
    %v2671 = vmul.f32 %v2655, %v2670
    %v2672 = vmul.f32 %v2656, %v2670
    %v2673 = vadd.f32 %v2652, %v2671
    %v2674 = vadd.f32 %v2653, %v2672
    %s2675 = sld [smem:[#allocation6 + $0x13]]
    %v2676 = vstv %s2675
    %v2677 = vmul.f32 %v2655, %v2676
    %v2678 = vmul.f32 %v2656, %v2676
    %2681 = vrot.lane.b32.xlu0 %v2677, 127
    %v2682 = vpop.permute.xlu0 %2681
    %2683 = vrot.lane.b32.xlu0 %v2678, 127
    %v2684 = vpop.permute.xlu0 %2683
    %v2687 = vadd.f32 %v2661, %v2682
    %v2688 = vadd.f32 %v2662, %v2684
    %s2689 = sld [smem:[#allocation6 + $0x2e]]
    %v2690 = vstv %s2689
    %v2691 = vmul.f32 %v2655, %v2690
    %v2692 = vmul.f32 %v2656, %v2690
    %2695 = vrot.lane.b32.xlu0 %v2691, 127
    %v2696 = vpop.permute.xlu0 %2695
    %2697 = vrot.lane.b32.xlu0 %v2692, 127
    %v2698 = vpop.permute.xlu0 %2697
    %v2701 = vadd.f32 %v2667, %v2696
    %v2702 = vadd.f32 %v2668, %v2698
    %s2703 = sld [smem:[#allocation6 + $0x49]]
    %v2704 = vstv %s2703
    %v2705 = vmul.f32 %v2655, %v2704
    %v2706 = vmul.f32 %v2656, %v2704
    %2709 = vrot.lane.b32.xlu0 %v2705, 127
    %v2710 = vpop.permute.xlu0 %2709
    %2711 = vrot.lane.b32.xlu0 %v2706, 127
    %v2712 = vpop.permute.xlu0 %2711
    %v2715 = vadd.f32 %v2673, %v2710
    %v2716 = vadd.f32 %v2674, %v2712
    %s2717 = sld [smem:[#allocation6 + $0x14]]
    %v2718 = vstv %s2717
    %v2719 = vmul.f32 %v2655, %v2718
    %v2720 = vmul.f32 %v2656, %v2718
    %2723 = vrot.lane.b32.xlu0 %v2719, 126
    %v2724 = vpop.permute.xlu0 %2723
    %2725 = vrot.lane.b32.xlu0 %v2720, 126
    %v2726 = vpop.permute.xlu0 %2725
    %v2729 = vadd.f32 %v2687, %v2724
    %v2730 = vadd.f32 %v2688, %v2726
    %s2731 = sld [smem:[#allocation6 + $0x2f]]
    %v2732 = vstv %s2731
    %v2733 = vmul.f32 %v2655, %v2732
    %v2734 = vmul.f32 %v2656, %v2732
    %2737 = vrot.lane.b32.xlu0 %v2733, 126
    %v2738 = vpop.permute.xlu0 %2737
    %2739 = vrot.lane.b32.xlu0 %v2734, 126
    %v2740 = vpop.permute.xlu0 %2739
    %v2743 = vadd.f32 %v2701, %v2738
    %v2744 = vadd.f32 %v2702, %v2740
    %s2745 = sld [smem:[#allocation6 + $0x4a]]
    %v2746 = vstv %s2745
    %v2747 = vmul.f32 %v2655, %v2746
    %v2748 = vmul.f32 %v2656, %v2746
    %2751 = vrot.lane.b32.xlu0 %v2747, 126
    %v2752 = vpop.permute.xlu0 %2751
    %2753 = vrot.lane.b32.xlu0 %v2748, 126
    %v2754 = vpop.permute.xlu0 %2753
    %v2757 = vadd.f32 %v2715, %v2752
    %v2758 = vadd.f32 %v2716, %v2754
    %v2759 = vld [vmem:[%s2654 + $0x1] sm:$0xff]
    %v2760 = vld [vmem:[%s2654 + $0x9] sm:$0x3f]
    %s2761 = sld [smem:[#allocation6 + $0x15]]
    %v2762 = vstv %s2761
    %v2763 = vmul.f32 %v2759, %v2762
    %v2764 = vmul.f32 %v2760, %v2762
    %v2765 = vadd.f32 %v2729, %v2763
    %v2766 = vadd.f32 %v2730, %v2764
    %s2767 = sld [smem:[#allocation6 + $0x30]]
    %v2768 = vstv %s2767
    %v2769 = vmul.f32 %v2759, %v2768
    %v2770 = vmul.f32 %v2760, %v2768
    %v2771 = vadd.f32 %v2743, %v2769
    %v2772 = vadd.f32 %v2744, %v2770
    %s2773 = sld [smem:[#allocation6 + $0x4b]]
    %v2774 = vstv %s2773
    %v2775 = vmul.f32 %v2759, %v2774
    %v2776 = vmul.f32 %v2760, %v2774
    %v2777 = vadd.f32 %v2757, %v2775
    %v2778 = vadd.f32 %v2758, %v2776
    %s2779 = sld [smem:[#allocation6 + $0x16]]
    %v2780 = vstv %s2779
    %v2781 = vmul.f32 %v2759, %v2780
    %v2782 = vmul.f32 %v2760, %v2780
    %2785 = vrot.lane.b32.xlu0 %v2781, 127
    %v2786 = vpop.permute.xlu0 %2785
    %2787 = vrot.lane.b32.xlu0 %v2782, 127
    %v2788 = vpop.permute.xlu0 %2787
    %v2791 = vadd.f32 %v2765, %v2786
    %v2792 = vadd.f32 %v2766, %v2788
    %s2793 = sld [smem:[#allocation6 + $0x31]]
    %v2794 = vstv %s2793
    %v2795 = vmul.f32 %v2759, %v2794
    %v2796 = vmul.f32 %v2760, %v2794
    %2799 = vrot.lane.b32.xlu0 %v2795, 127
    %v2800 = vpop.permute.xlu0 %2799
    %2801 = vrot.lane.b32.xlu0 %v2796, 127
    %v2802 = vpop.permute.xlu0 %2801
    %v2805 = vadd.f32 %v2771, %v2800
    %v2806 = vadd.f32 %v2772, %v2802
    %s2807 = sld [smem:[#allocation6 + $0x4c]]
    %v2808 = vstv %s2807
    %v2809 = vmul.f32 %v2759, %v2808
    %v2810 = vmul.f32 %v2760, %v2808
    %2813 = vrot.lane.b32.xlu0 %v2809, 127
    %v2814 = vpop.permute.xlu0 %2813
    %2815 = vrot.lane.b32.xlu0 %v2810, 127
    %v2816 = vpop.permute.xlu0 %2815
    %v2819 = vadd.f32 %v2777, %v2814
    %v2820 = vadd.f32 %v2778, %v2816
    %s2821 = sld [smem:[#allocation6 + $0x17]]
    %v2822 = vstv %s2821
    %v2823 = vmul.f32 %v2759, %v2822
    %v2824 = vmul.f32 %v2760, %v2822
    %2827 = vrot.lane.b32.xlu0 %v2823, 126
    %v2828 = vpop.permute.xlu0 %2827
    %2829 = vrot.lane.b32.xlu0 %v2824, 126
    %v2830 = vpop.permute.xlu0 %2829
    %v2833 = vadd.f32 %v2791, %v2828
    %v2834 = vadd.f32 %v2792, %v2830
    %s2835 = sld [smem:[#allocation6 + $0x32]]
    %v2836 = vstv %s2835
    %v2837 = vmul.f32 %v2759, %v2836
    %v2838 = vmul.f32 %v2760, %v2836
    %2841 = vrot.lane.b32.xlu0 %v2837, 126
    %v2842 = vpop.permute.xlu0 %2841
    %2843 = vrot.lane.b32.xlu0 %v2838, 126
    %v2844 = vpop.permute.xlu0 %2843
    %v2847 = vadd.f32 %v2805, %v2842
    %v2848 = vadd.f32 %v2806, %v2844
    %s2849 = sld [smem:[#allocation6 + $0x4d]]
    %v2850 = vstv %s2849
    %v2851 = vmul.f32 %v2759, %v2850
    %v2852 = vmul.f32 %v2760, %v2850
    %2855 = vrot.lane.b32.xlu0 %v2851, 126
    %v2856 = vpop.permute.xlu0 %2855
    %2857 = vrot.lane.b32.xlu0 %v2852, 126
    %v2858 = vpop.permute.xlu0 %2857
    %v2861 = vadd.f32 %v2819, %v2856
    %v2862 = vadd.f32 %v2820, %v2858
    %v2863 = vld [vmem:[%s2654 + $0x2] sm:$0xff]
    %v2864 = vld [vmem:[%s2654 + $0xa] sm:$0x3f]
    %s2865 = sld [smem:[#allocation6 + $0x18]]
    %v2866 = vstv %s2865
    %v2867 = vmul.f32 %v2863, %v2866
    %v2868 = vmul.f32 %v2864, %v2866
    %v2869 = vadd.f32 %v2833, %v2867
    %v2870 = vadd.f32 %v2834, %v2868
    %s2871 = sld [smem:[#allocation6 + $0x33]]
    %v2872 = vstv %s2871
    %v2873 = vmul.f32 %v2863, %v2872
    %v2874 = vmul.f32 %v2864, %v2872
    %v2875 = vadd.f32 %v2847, %v2873
    %v2876 = vadd.f32 %v2848, %v2874
    %s2877 = sld [smem:[#allocation6 + $0x4e]]
    %v2878 = vstv %s2877
    %v2879 = vmul.f32 %v2863, %v2878
    %v2880 = vmul.f32 %v2864, %v2878
    %v2881 = vadd.f32 %v2861, %v2879
    %v2882 = vadd.f32 %v2862, %v2880
    %s2883 = sld [smem:[#allocation6 + $0x19]]
    %v2884 = vstv %s2883
    %v2885 = vmul.f32 %v2863, %v2884
    %v2886 = vmul.f32 %v2864, %v2884
    %2889 = vrot.lane.b32.xlu0 %v2885, 127
    %v2890 = vpop.permute.xlu0 %2889
    %2891 = vrot.lane.b32.xlu0 %v2886, 127
    %v2892 = vpop.permute.xlu0 %2891
    %v2895 = vadd.f32 %v2869, %v2890
    %v2896 = vadd.f32 %v2870, %v2892
    %s2897 = sld [smem:[#allocation6 + $0x34]]
    %v2898 = vstv %s2897
    %v2899 = vmul.f32 %v2863, %v2898
    %v2900 = vmul.f32 %v2864, %v2898
    %2903 = vrot.lane.b32.xlu0 %v2899, 127
    %v2904 = vpop.permute.xlu0 %2903
    %2905 = vrot.lane.b32.xlu0 %v2900, 127
    %v2906 = vpop.permute.xlu0 %2905
    %v2909 = vadd.f32 %v2875, %v2904
    %v2910 = vadd.f32 %v2876, %v2906
    %s2911 = sld [smem:[#allocation6 + $0x4f]]
    %v2912 = vstv %s2911
    %v2913 = vmul.f32 %v2863, %v2912
    %v2914 = vmul.f32 %v2864, %v2912
    %2917 = vrot.lane.b32.xlu0 %v2913, 127
    %v2918 = vpop.permute.xlu0 %2917
    %2919 = vrot.lane.b32.xlu0 %v2914, 127
    %v2920 = vpop.permute.xlu0 %2919
    %v2923 = vadd.f32 %v2881, %v2918
    %v2924 = vadd.f32 %v2882, %v2920
    %s2925 = sld [smem:[#allocation6 + $0x1a]]
    %v2926 = vstv %s2925
    %v2927 = vmul.f32 %v2863, %v2926
    %v2928 = vmul.f32 %v2864, %v2926
    %2931 = vrot.lane.b32.xlu0 %v2927, 126
    %v2932 = vpop.permute.xlu0 %2931
    %2933 = vrot.lane.b32.xlu0 %v2928, 126
    %v2934 = vpop.permute.xlu0 %2933
    %v2937 = vadd.f32 %v2895, %v2932
    %v2938 = vadd.f32 %v2896, %v2934
    %s2939 = sld [smem:[#allocation6 + $0x35]]
    %v2940 = vstv %s2939
    %v2941 = vmul.f32 %v2863, %v2940
    %v2942 = vmul.f32 %v2864, %v2940
    %2945 = vrot.lane.b32.xlu0 %v2941, 126
    %v2946 = vpop.permute.xlu0 %2945
    %2947 = vrot.lane.b32.xlu0 %v2942, 126
    %v2948 = vpop.permute.xlu0 %2947
    %v2951 = vadd.f32 %v2909, %v2946
    %v2952 = vadd.f32 %v2910, %v2948
    %s2953 = sld [smem:[#allocation6 + $0x50]]
    %v2954 = vstv %s2953
    %v2955 = vmul.f32 %v2863, %v2954
    %v2956 = vmul.f32 %v2864, %v2954
    %2959 = vrot.lane.b32.xlu0 %v2955, 126
    %v2960 = vpop.permute.xlu0 %2959
    %2961 = vrot.lane.b32.xlu0 %v2956, 126
    %v2962 = vpop.permute.xlu0 %2961
    %v2965 = vadd.f32 %v2923, %v2960
    %v2966 = vadd.f32 %v2924, %v2962
    %s2967 = scalar_lea.vmem [#allocation2], 48
    %2968 = vst.msk [vmem:[%s2967] sm:$0xff] %vm1026, %v2937
    %2969 = vst.msk [vmem:[%s2967 + $0x8] sm:$0x3f] %vm1028, %v2938
    %s2970 = scalar_lea.vmem [#allocation2], 64
    %2971 = vst.msk [vmem:[%s2970] sm:$0xff] %vm1026, %v2951
    %2972 = vst.msk [vmem:[%s2970 + $0x8] sm:$0x3f] %vm1028, %v2952
    %s2973 = scalar_lea.vmem [#allocation2], 80
    %2974 = vst.msk [vmem:[%s2973] sm:$0xff] %vm1026, %v2965
    %2975 = vst.msk [vmem:[%s2973 + $0x8] sm:$0x3f] %vm1028, %v2966
    %s2976 = sld [smem:[#allocation10]]
    %v2977 = vstv %s2976
    %s2978 = sld [smem:[#allocation10 + $0x1]]
    %v2979 = vstv %s2978
    %s2980 = sld [smem:[#allocation10 + $0x2]]
    %v2981 = vstv %s2980
    %v2982 = vld [vmem:[%s2967] sm:$0xff]
    %v2983 = vld [vmem:[%s2967 + $0x8] sm:$0xf]
    %s2984 = sld [smem:[#allocation9]]
    %v2985 = vstv %s2984
    %v2986 = vmul.f32 %v2982, %v2985
    %v2987 = vmul.f32 %v2983, %v2985
    %v2988 = vadd.f32 %v2977, %v2986
    %v2989 = vadd.f32 %v2977, %v2987
    %s2990 = sld [smem:[#allocation9 + $0x1b]]
    %v2991 = vstv %s2990
    %v2992 = vmul.f32 %v2982, %v2991
    %v2993 = vmul.f32 %v2983, %v2991
    %v2994 = vadd.f32 %v2979, %v2992
    %v2995 = vadd.f32 %v2979, %v2993
    %s2996 = sld [smem:[#allocation9 + $0x36]]
    %v2997 = vstv %s2996
    %v2998 = vmul.f32 %v2982, %v2997
    %v2999 = vmul.f32 %v2983, %v2997
    %v3000 = vadd.f32 %v2981, %v2998
    %v3001 = vadd.f32 %v2981, %v2999
    %s3002 = sld [smem:[#allocation9 + $0x1]]
    %v3003 = vstv %s3002
    %v3004 = vmul.f32 %v2982, %v3003
    %v3005 = vmul.f32 %v2983, %v3003
    %3008 = vrot.lane.b32.xlu0 %v3004, 127
    %v3009 = vpop.permute.xlu0 %3008
    %3010 = vrot.lane.b32.xlu0 %v3005, 127
    %v3011 = vpop.permute.xlu0 %3010
    %v3014 = vadd.f32 %v2988, %v3009
    %v3015 = vadd.f32 %v2989, %v3011
    %s3016 = sld [smem:[#allocation9 + $0x1c]]
    %v3017 = vstv %s3016
    %v3018 = vmul.f32 %v2982, %v3017
    %v3019 = vmul.f32 %v2983, %v3017
    %3022 = vrot.lane.b32.xlu0 %v3018, 127
    %v3023 = vpop.permute.xlu0 %3022
    %3024 = vrot.lane.b32.xlu0 %v3019, 127
    %v3025 = vpop.permute.xlu0 %3024
    %v3028 = vadd.f32 %v2994, %v3023
    %v3029 = vadd.f32 %v2995, %v3025
    %s3030 = sld [smem:[#allocation9 + $0x37]]
    %v3031 = vstv %s3030
    %v3032 = vmul.f32 %v2982, %v3031
    %v3033 = vmul.f32 %v2983, %v3031
    %3036 = vrot.lane.b32.xlu0 %v3032, 127
    %v3037 = vpop.permute.xlu0 %3036
    %3038 = vrot.lane.b32.xlu0 %v3033, 127
    %v3039 = vpop.permute.xlu0 %3038
    %v3042 = vadd.f32 %v3000, %v3037
    %v3043 = vadd.f32 %v3001, %v3039
    %s3044 = sld [smem:[#allocation9 + $0x2]]
    %v3045 = vstv %s3044
    %v3046 = vmul.f32 %v2982, %v3045
    %v3047 = vmul.f32 %v2983, %v3045
    %3050 = vrot.lane.b32.xlu0 %v3046, 126
    %v3051 = vpop.permute.xlu0 %3050
    %3052 = vrot.lane.b32.xlu0 %v3047, 126
    %v3053 = vpop.permute.xlu0 %3052
    %v3056 = vadd.f32 %v3014, %v3051
    %v3057 = vadd.f32 %v3015, %v3053
    %s3058 = sld [smem:[#allocation9 + $0x1d]]
    %v3059 = vstv %s3058
    %v3060 = vmul.f32 %v2982, %v3059
    %v3061 = vmul.f32 %v2983, %v3059
    %3064 = vrot.lane.b32.xlu0 %v3060, 126
    %v3065 = vpop.permute.xlu0 %3064
    %3066 = vrot.lane.b32.xlu0 %v3061, 126
    %v3067 = vpop.permute.xlu0 %3066
    %v3070 = vadd.f32 %v3028, %v3065
    %v3071 = vadd.f32 %v3029, %v3067
    %s3072 = sld [smem:[#allocation9 + $0x38]]
    %v3073 = vstv %s3072
    %v3074 = vmul.f32 %v2982, %v3073
    %v3075 = vmul.f32 %v2983, %v3073
    %3078 = vrot.lane.b32.xlu0 %v3074, 126
    %v3079 = vpop.permute.xlu0 %3078
    %3080 = vrot.lane.b32.xlu0 %v3075, 126
    %v3081 = vpop.permute.xlu0 %3080
    %v3084 = vadd.f32 %v3042, %v3079
    %v3085 = vadd.f32 %v3043, %v3081
    %v3086 = vld [vmem:[%s2967 + $0x1] sm:$0xff]
    %v3087 = vld [vmem:[%s2967 + $0x9] sm:$0xf]
    %s3088 = sld [smem:[#allocation9 + $0x3]]
    %v3089 = vstv %s3088
    %v3090 = vmul.f32 %v3086, %v3089
    %v3091 = vmul.f32 %v3087, %v3089
    %v3092 = vadd.f32 %v3056, %v3090
    %v3093 = vadd.f32 %v3057, %v3091
    %s3094 = sld [smem:[#allocation9 + $0x1e]]
    %v3095 = vstv %s3094
    %v3096 = vmul.f32 %v3086, %v3095
    %v3097 = vmul.f32 %v3087, %v3095
    %v3098 = vadd.f32 %v3070, %v3096
    %v3099 = vadd.f32 %v3071, %v3097
    %s3100 = sld [smem:[#allocation9 + $0x39]]
    %v3101 = vstv %s3100
    %v3102 = vmul.f32 %v3086, %v3101
    %v3103 = vmul.f32 %v3087, %v3101
    %v3104 = vadd.f32 %v3084, %v3102
    %v3105 = vadd.f32 %v3085, %v3103
    %s3106 = sld [smem:[#allocation9 + $0x4]]
    %v3107 = vstv %s3106
    %v3108 = vmul.f32 %v3086, %v3107
    %v3109 = vmul.f32 %v3087, %v3107
    %3112 = vrot.lane.b32.xlu0 %v3108, 127
    %v3113 = vpop.permute.xlu0 %3112
    %3114 = vrot.lane.b32.xlu0 %v3109, 127
    %v3115 = vpop.permute.xlu0 %3114
    %v3118 = vadd.f32 %v3092, %v3113
    %v3119 = vadd.f32 %v3093, %v3115
    %s3120 = sld [smem:[#allocation9 + $0x1f]]
    %v3121 = vstv %s3120
    %v3122 = vmul.f32 %v3086, %v3121
    %v3123 = vmul.f32 %v3087, %v3121
    %3126 = vrot.lane.b32.xlu0 %v3122, 127
    %v3127 = vpop.permute.xlu0 %3126
    %3128 = vrot.lane.b32.xlu0 %v3123, 127
    %v3129 = vpop.permute.xlu0 %3128
    %v3132 = vadd.f32 %v3098, %v3127
    %v3133 = vadd.f32 %v3099, %v3129
    %s3134 = sld [smem:[#allocation9 + $0x3a]]
    %v3135 = vstv %s3134
    %v3136 = vmul.f32 %v3086, %v3135
    %v3137 = vmul.f32 %v3087, %v3135
    %3140 = vrot.lane.b32.xlu0 %v3136, 127
    %v3141 = vpop.permute.xlu0 %3140
    %3142 = vrot.lane.b32.xlu0 %v3137, 127
    %v3143 = vpop.permute.xlu0 %3142
    %v3146 = vadd.f32 %v3104, %v3141
    %v3147 = vadd.f32 %v3105, %v3143
    %s3148 = sld [smem:[#allocation9 + $0x5]]
    %v3149 = vstv %s3148
    %v3150 = vmul.f32 %v3086, %v3149
    %v3151 = vmul.f32 %v3087, %v3149
    %3154 = vrot.lane.b32.xlu0 %v3150, 126
    %v3155 = vpop.permute.xlu0 %3154
    %3156 = vrot.lane.b32.xlu0 %v3151, 126
    %v3157 = vpop.permute.xlu0 %3156
    %v3160 = vadd.f32 %v3118, %v3155
    %v3161 = vadd.f32 %v3119, %v3157
    %s3162 = sld [smem:[#allocation9 + $0x20]]
    %v3163 = vstv %s3162
    %v3164 = vmul.f32 %v3086, %v3163
    %v3165 = vmul.f32 %v3087, %v3163
    %3168 = vrot.lane.b32.xlu0 %v3164, 126
    %v3169 = vpop.permute.xlu0 %3168
    %3170 = vrot.lane.b32.xlu0 %v3165, 126
    %v3171 = vpop.permute.xlu0 %3170
    %v3174 = vadd.f32 %v3132, %v3169
    %v3175 = vadd.f32 %v3133, %v3171
    %s3176 = sld [smem:[#allocation9 + $0x3b]]
    %v3177 = vstv %s3176
    %v3178 = vmul.f32 %v3086, %v3177
    %v3179 = vmul.f32 %v3087, %v3177
    %3182 = vrot.lane.b32.xlu0 %v3178, 126
    %v3183 = vpop.permute.xlu0 %3182
    %3184 = vrot.lane.b32.xlu0 %v3179, 126
    %v3185 = vpop.permute.xlu0 %3184
    %v3188 = vadd.f32 %v3146, %v3183
    %v3189 = vadd.f32 %v3147, %v3185
    %v3190 = vld [vmem:[%s2967 + $0x2] sm:$0xff]
    %v3191 = vld [vmem:[%s2967 + $0xa] sm:$0xf]
    %s3192 = sld [smem:[#allocation9 + $0x6]]
    %v3193 = vstv %s3192
    %v3194 = vmul.f32 %v3190, %v3193
    %v3195 = vmul.f32 %v3191, %v3193
    %v3196 = vadd.f32 %v3160, %v3194
    %v3197 = vadd.f32 %v3161, %v3195
    %s3198 = sld [smem:[#allocation9 + $0x21]]
    %v3199 = vstv %s3198
    %v3200 = vmul.f32 %v3190, %v3199
    %v3201 = vmul.f32 %v3191, %v3199
    %v3202 = vadd.f32 %v3174, %v3200
    %v3203 = vadd.f32 %v3175, %v3201
    %s3204 = sld [smem:[#allocation9 + $0x3c]]
    %v3205 = vstv %s3204
    %v3206 = vmul.f32 %v3190, %v3205
    %v3207 = vmul.f32 %v3191, %v3205
    %v3208 = vadd.f32 %v3188, %v3206
    %v3209 = vadd.f32 %v3189, %v3207
    %s3210 = sld [smem:[#allocation9 + $0x7]]
    %v3211 = vstv %s3210
    %v3212 = vmul.f32 %v3190, %v3211
    %v3213 = vmul.f32 %v3191, %v3211
    %3216 = vrot.lane.b32.xlu0 %v3212, 127
    %v3217 = vpop.permute.xlu0 %3216
    %3218 = vrot.lane.b32.xlu0 %v3213, 127
    %v3219 = vpop.permute.xlu0 %3218
    %v3222 = vadd.f32 %v3196, %v3217
    %v3223 = vadd.f32 %v3197, %v3219
    %s3224 = sld [smem:[#allocation9 + $0x22]]
    %v3225 = vstv %s3224
    %v3226 = vmul.f32 %v3190, %v3225
    %v3227 = vmul.f32 %v3191, %v3225
    %3230 = vrot.lane.b32.xlu0 %v3226, 127
    %v3231 = vpop.permute.xlu0 %3230
    %3232 = vrot.lane.b32.xlu0 %v3227, 127
    %v3233 = vpop.permute.xlu0 %3232
    %v3236 = vadd.f32 %v3202, %v3231
    %v3237 = vadd.f32 %v3203, %v3233
    %s3238 = sld [smem:[#allocation9 + $0x3d]]
    %v3239 = vstv %s3238
    %v3240 = vmul.f32 %v3190, %v3239
    %v3241 = vmul.f32 %v3191, %v3239
    %3244 = vrot.lane.b32.xlu0 %v3240, 127
    %v3245 = vpop.permute.xlu0 %3244
    %3246 = vrot.lane.b32.xlu0 %v3241, 127
    %v3247 = vpop.permute.xlu0 %3246
    %v3250 = vadd.f32 %v3208, %v3245
    %v3251 = vadd.f32 %v3209, %v3247
    %s3252 = sld [smem:[#allocation9 + $0x8]]
    %v3253 = vstv %s3252
    %v3254 = vmul.f32 %v3190, %v3253
    %v3255 = vmul.f32 %v3191, %v3253
    %3258 = vrot.lane.b32.xlu0 %v3254, 126
    %v3259 = vpop.permute.xlu0 %3258
    %3260 = vrot.lane.b32.xlu0 %v3255, 126
    %v3261 = vpop.permute.xlu0 %3260
    %v3264 = vadd.f32 %v3222, %v3259
    %v3265 = vadd.f32 %v3223, %v3261
    %s3266 = sld [smem:[#allocation9 + $0x23]]
    %v3267 = vstv %s3266
    %v3268 = vmul.f32 %v3190, %v3267
    %v3269 = vmul.f32 %v3191, %v3267
    %3272 = vrot.lane.b32.xlu0 %v3268, 126
    %v3273 = vpop.permute.xlu0 %3272
    %3274 = vrot.lane.b32.xlu0 %v3269, 126
    %v3275 = vpop.permute.xlu0 %3274
    %v3278 = vadd.f32 %v3236, %v3273
    %v3279 = vadd.f32 %v3237, %v3275
    %s3280 = sld [smem:[#allocation9 + $0x3e]]
    %v3281 = vstv %s3280
    %v3282 = vmul.f32 %v3190, %v3281
    %v3283 = vmul.f32 %v3191, %v3281
    %3286 = vrot.lane.b32.xlu0 %v3282, 126
    %v3287 = vpop.permute.xlu0 %3286
    %3288 = vrot.lane.b32.xlu0 %v3283, 126
    %v3289 = vpop.permute.xlu0 %3288
    %v3292 = vadd.f32 %v3250, %v3287
    %v3293 = vadd.f32 %v3251, %v3289
    %v3294 = vld [vmem:[%s2970] sm:$0xff]
    %v3295 = vld [vmem:[%s2970 + $0x8] sm:$0xf]
    %s3296 = sld [smem:[#allocation9 + $0x9]]
    %v3297 = vstv %s3296
    %v3298 = vmul.f32 %v3294, %v3297
    %v3299 = vmul.f32 %v3295, %v3297
    %v3300 = vadd.f32 %v3264, %v3298
    %v3301 = vadd.f32 %v3265, %v3299
    %s3302 = sld [smem:[#allocation9 + $0x24]]
    %v3303 = vstv %s3302
    %v3304 = vmul.f32 %v3294, %v3303
    %v3305 = vmul.f32 %v3295, %v3303
    %v3306 = vadd.f32 %v3278, %v3304
    %v3307 = vadd.f32 %v3279, %v3305
    %s3308 = sld [smem:[#allocation9 + $0x3f]]
    %v3309 = vstv %s3308
    %v3310 = vmul.f32 %v3294, %v3309
    %v3311 = vmul.f32 %v3295, %v3309
    %v3312 = vadd.f32 %v3292, %v3310
    %v3313 = vadd.f32 %v3293, %v3311
    %s3314 = sld [smem:[#allocation9 + $0xa]]
    %v3315 = vstv %s3314
    %v3316 = vmul.f32 %v3294, %v3315
    %v3317 = vmul.f32 %v3295, %v3315
    %3320 = vrot.lane.b32.xlu0 %v3316, 127
    %v3321 = vpop.permute.xlu0 %3320
    %3322 = vrot.lane.b32.xlu0 %v3317, 127
    %v3323 = vpop.permute.xlu0 %3322
    %v3326 = vadd.f32 %v3300, %v3321
    %v3327 = vadd.f32 %v3301, %v3323
    %s3328 = sld [smem:[#allocation9 + $0x25]]
    %v3329 = vstv %s3328
    %v3330 = vmul.f32 %v3294, %v3329
    %v3331 = vmul.f32 %v3295, %v3329
    %3334 = vrot.lane.b32.xlu0 %v3330, 127
    %v3335 = vpop.permute.xlu0 %3334
    %3336 = vrot.lane.b32.xlu0 %v3331, 127
    %v3337 = vpop.permute.xlu0 %3336
    %v3340 = vadd.f32 %v3306, %v3335
    %v3341 = vadd.f32 %v3307, %v3337
    %s3342 = sld [smem:[#allocation9 + $0x40]]
    %v3343 = vstv %s3342
    %v3344 = vmul.f32 %v3294, %v3343
    %v3345 = vmul.f32 %v3295, %v3343
    %3348 = vrot.lane.b32.xlu0 %v3344, 127
    %v3349 = vpop.permute.xlu0 %3348
    %3350 = vrot.lane.b32.xlu0 %v3345, 127
    %v3351 = vpop.permute.xlu0 %3350
    %v3354 = vadd.f32 %v3312, %v3349
    %v3355 = vadd.f32 %v3313, %v3351
    %s3356 = sld [smem:[#allocation9 + $0xb]]
    %v3357 = vstv %s3356
    %v3358 = vmul.f32 %v3294, %v3357
    %v3359 = vmul.f32 %v3295, %v3357
    %3362 = vrot.lane.b32.xlu0 %v3358, 126
    %v3363 = vpop.permute.xlu0 %3362
    %3364 = vrot.lane.b32.xlu0 %v3359, 126
    %v3365 = vpop.permute.xlu0 %3364
    %v3368 = vadd.f32 %v3326, %v3363
    %v3369 = vadd.f32 %v3327, %v3365
    %s3370 = sld [smem:[#allocation9 + $0x26]]
    %v3371 = vstv %s3370
    %v3372 = vmul.f32 %v3294, %v3371
    %v3373 = vmul.f32 %v3295, %v3371
    %3376 = vrot.lane.b32.xlu0 %v3372, 126
    %v3377 = vpop.permute.xlu0 %3376
    %3378 = vrot.lane.b32.xlu0 %v3373, 126
    %v3379 = vpop.permute.xlu0 %3378
    %v3382 = vadd.f32 %v3340, %v3377
    %v3383 = vadd.f32 %v3341, %v3379
    %s3384 = sld [smem:[#allocation9 + $0x41]]
    %v3385 = vstv %s3384
    %v3386 = vmul.f32 %v3294, %v3385
    %v3387 = vmul.f32 %v3295, %v3385
    %3390 = vrot.lane.b32.xlu0 %v3386, 126
    %v3391 = vpop.permute.xlu0 %3390
    %3392 = vrot.lane.b32.xlu0 %v3387, 126
    %v3393 = vpop.permute.xlu0 %3392
    %v3396 = vadd.f32 %v3354, %v3391
    %v3397 = vadd.f32 %v3355, %v3393
    %v3398 = vld [vmem:[%s2970 + $0x1] sm:$0xff]
    %v3399 = vld [vmem:[%s2970 + $0x9] sm:$0xf]
    %s3400 = sld [smem:[#allocation9 + $0xc]]
    %v3401 = vstv %s3400
    %v3402 = vmul.f32 %v3398, %v3401
    %v3403 = vmul.f32 %v3399, %v3401
    %v3404 = vadd.f32 %v3368, %v3402
    %v3405 = vadd.f32 %v3369, %v3403
    %s3406 = sld [smem:[#allocation9 + $0x27]]
    %v3407 = vstv %s3406
    %v3408 = vmul.f32 %v3398, %v3407
    %v3409 = vmul.f32 %v3399, %v3407
    %v3410 = vadd.f32 %v3382, %v3408
    %v3411 = vadd.f32 %v3383, %v3409
    %s3412 = sld [smem:[#allocation9 + $0x42]]
    %v3413 = vstv %s3412
    %v3414 = vmul.f32 %v3398, %v3413
    %v3415 = vmul.f32 %v3399, %v3413
    %v3416 = vadd.f32 %v3396, %v3414
    %v3417 = vadd.f32 %v3397, %v3415
    %s3418 = sld [smem:[#allocation9 + $0xd]]
    %v3419 = vstv %s3418
    %v3420 = vmul.f32 %v3398, %v3419
    %v3421 = vmul.f32 %v3399, %v3419
    %3424 = vrot.lane.b32.xlu0 %v3420, 127
    %v3425 = vpop.permute.xlu0 %3424
    %3426 = vrot.lane.b32.xlu0 %v3421, 127
    %v3427 = vpop.permute.xlu0 %3426
    %v3430 = vadd.f32 %v3404, %v3425
    %v3431 = vadd.f32 %v3405, %v3427
    %s3432 = sld [smem:[#allocation9 + $0x28]]
    %v3433 = vstv %s3432
    %v3434 = vmul.f32 %v3398, %v3433
    %v3435 = vmul.f32 %v3399, %v3433
    %3438 = vrot.lane.b32.xlu0 %v3434, 127
    %v3439 = vpop.permute.xlu0 %3438
    %3440 = vrot.lane.b32.xlu0 %v3435, 127
    %v3441 = vpop.permute.xlu0 %3440
    %v3444 = vadd.f32 %v3410, %v3439
    %v3445 = vadd.f32 %v3411, %v3441
    %s3446 = sld [smem:[#allocation9 + $0x43]]
    %v3447 = vstv %s3446
    %v3448 = vmul.f32 %v3398, %v3447
    %v3449 = vmul.f32 %v3399, %v3447
    %3452 = vrot.lane.b32.xlu0 %v3448, 127
    %v3453 = vpop.permute.xlu0 %3452
    %3454 = vrot.lane.b32.xlu0 %v3449, 127
    %v3455 = vpop.permute.xlu0 %3454
    %v3458 = vadd.f32 %v3416, %v3453
    %v3459 = vadd.f32 %v3417, %v3455
    %s3460 = sld [smem:[#allocation9 + $0xe]]
    %v3461 = vstv %s3460
    %v3462 = vmul.f32 %v3398, %v3461
    %v3463 = vmul.f32 %v3399, %v3461
    %3466 = vrot.lane.b32.xlu0 %v3462, 126
    %v3467 = vpop.permute.xlu0 %3466
    %3468 = vrot.lane.b32.xlu0 %v3463, 126
    %v3469 = vpop.permute.xlu0 %3468
    %v3472 = vadd.f32 %v3430, %v3467
    %v3473 = vadd.f32 %v3431, %v3469
    %s3474 = sld [smem:[#allocation9 + $0x29]]
    %v3475 = vstv %s3474
    %v3476 = vmul.f32 %v3398, %v3475
    %v3477 = vmul.f32 %v3399, %v3475
    %3480 = vrot.lane.b32.xlu0 %v3476, 126
    %v3481 = vpop.permute.xlu0 %3480
    %3482 = vrot.lane.b32.xlu0 %v3477, 126
    %v3483 = vpop.permute.xlu0 %3482
    %v3486 = vadd.f32 %v3444, %v3481
    %v3487 = vadd.f32 %v3445, %v3483
    %s3488 = sld [smem:[#allocation9 + $0x44]]
    %v3489 = vstv %s3488
    %v3490 = vmul.f32 %v3398, %v3489
    %v3491 = vmul.f32 %v3399, %v3489
    %3494 = vrot.lane.b32.xlu0 %v3490, 126
    %v3495 = vpop.permute.xlu0 %3494
    %3496 = vrot.lane.b32.xlu0 %v3491, 126
    %v3497 = vpop.permute.xlu0 %3496
    %v3500 = vadd.f32 %v3458, %v3495
    %v3501 = vadd.f32 %v3459, %v3497
    %v3502 = vld [vmem:[%s2970 + $0x2] sm:$0xff]
    %v3503 = vld [vmem:[%s2970 + $0xa] sm:$0xf]
    %s3504 = sld [smem:[#allocation9 + $0xf]]
    %v3505 = vstv %s3504
    %v3506 = vmul.f32 %v3502, %v3505
    %v3507 = vmul.f32 %v3503, %v3505
    %v3508 = vadd.f32 %v3472, %v3506
    %v3509 = vadd.f32 %v3473, %v3507
    %s3510 = sld [smem:[#allocation9 + $0x2a]]
    %v3511 = vstv %s3510
    %v3512 = vmul.f32 %v3502, %v3511
    %v3513 = vmul.f32 %v3503, %v3511
    %v3514 = vadd.f32 %v3486, %v3512
    %v3515 = vadd.f32 %v3487, %v3513
    %s3516 = sld [smem:[#allocation9 + $0x45]]
    %v3517 = vstv %s3516
    %v3518 = vmul.f32 %v3502, %v3517
    %v3519 = vmul.f32 %v3503, %v3517
    %v3520 = vadd.f32 %v3500, %v3518
    %v3521 = vadd.f32 %v3501, %v3519
    %s3522 = sld [smem:[#allocation9 + $0x10]]
    %v3523 = vstv %s3522
    %v3524 = vmul.f32 %v3502, %v3523
    %v3525 = vmul.f32 %v3503, %v3523
    %3528 = vrot.lane.b32.xlu0 %v3524, 127
    %v3529 = vpop.permute.xlu0 %3528
    %3530 = vrot.lane.b32.xlu0 %v3525, 127
    %v3531 = vpop.permute.xlu0 %3530
    %v3534 = vadd.f32 %v3508, %v3529
    %v3535 = vadd.f32 %v3509, %v3531
    %s3536 = sld [smem:[#allocation9 + $0x2b]]
    %v3537 = vstv %s3536
    %v3538 = vmul.f32 %v3502, %v3537
    %v3539 = vmul.f32 %v3503, %v3537
    %3542 = vrot.lane.b32.xlu0 %v3538, 127
    %v3543 = vpop.permute.xlu0 %3542
    %3544 = vrot.lane.b32.xlu0 %v3539, 127
    %v3545 = vpop.permute.xlu0 %3544
    %v3548 = vadd.f32 %v3514, %v3543
    %v3549 = vadd.f32 %v3515, %v3545
    %s3550 = sld [smem:[#allocation9 + $0x46]]
    %v3551 = vstv %s3550
    %v3552 = vmul.f32 %v3502, %v3551
    %v3553 = vmul.f32 %v3503, %v3551
    %3556 = vrot.lane.b32.xlu0 %v3552, 127
    %v3557 = vpop.permute.xlu0 %3556
    %3558 = vrot.lane.b32.xlu0 %v3553, 127
    %v3559 = vpop.permute.xlu0 %3558
    %v3562 = vadd.f32 %v3520, %v3557
    %v3563 = vadd.f32 %v3521, %v3559
    %s3564 = sld [smem:[#allocation9 + $0x11]]
    %v3565 = vstv %s3564
    %v3566 = vmul.f32 %v3502, %v3565
    %v3567 = vmul.f32 %v3503, %v3565
    %3570 = vrot.lane.b32.xlu0 %v3566, 126
    %v3571 = vpop.permute.xlu0 %3570
    %3572 = vrot.lane.b32.xlu0 %v3567, 126
    %v3573 = vpop.permute.xlu0 %3572
    %v3576 = vadd.f32 %v3534, %v3571
    %v3577 = vadd.f32 %v3535, %v3573
    %s3578 = sld [smem:[#allocation9 + $0x2c]]
    %v3579 = vstv %s3578
    %v3580 = vmul.f32 %v3502, %v3579
    %v3581 = vmul.f32 %v3503, %v3579
    %3584 = vrot.lane.b32.xlu0 %v3580, 126
    %v3585 = vpop.permute.xlu0 %3584
    %3586 = vrot.lane.b32.xlu0 %v3581, 126
    %v3587 = vpop.permute.xlu0 %3586
    %v3590 = vadd.f32 %v3548, %v3585
    %v3591 = vadd.f32 %v3549, %v3587
    %s3592 = sld [smem:[#allocation9 + $0x47]]
    %v3593 = vstv %s3592
    %v3594 = vmul.f32 %v3502, %v3593
    %v3595 = vmul.f32 %v3503, %v3593
    %3598 = vrot.lane.b32.xlu0 %v3594, 126
    %v3599 = vpop.permute.xlu0 %3598
    %3600 = vrot.lane.b32.xlu0 %v3595, 126
    %v3601 = vpop.permute.xlu0 %3600
    %v3604 = vadd.f32 %v3562, %v3599
    %v3605 = vadd.f32 %v3563, %v3601
    %v3606 = vld [vmem:[%s2973] sm:$0xff]
    %v3607 = vld [vmem:[%s2973 + $0x8] sm:$0xf]
    %s3608 = sld [smem:[#allocation9 + $0x12]]
    %v3609 = vstv %s3608
    %v3610 = vmul.f32 %v3606, %v3609
    %v3611 = vmul.f32 %v3607, %v3609
    %v3612 = vadd.f32 %v3576, %v3610
    %v3613 = vadd.f32 %v3577, %v3611
    %s3614 = sld [smem:[#allocation9 + $0x2d]]
    %v3615 = vstv %s3614
    %v3616 = vmul.f32 %v3606, %v3615
    %v3617 = vmul.f32 %v3607, %v3615
    %v3618 = vadd.f32 %v3590, %v3616
    %v3619 = vadd.f32 %v3591, %v3617
    %s3620 = sld [smem:[#allocation9 + $0x48]]
    %v3621 = vstv %s3620
    %v3622 = vmul.f32 %v3606, %v3621
    %v3623 = vmul.f32 %v3607, %v3621
    %v3624 = vadd.f32 %v3604, %v3622
    %v3625 = vadd.f32 %v3605, %v3623
    %s3626 = sld [smem:[#allocation9 + $0x13]]
    %v3627 = vstv %s3626
    %v3628 = vmul.f32 %v3606, %v3627
    %v3629 = vmul.f32 %v3607, %v3627
    %3632 = vrot.lane.b32.xlu0 %v3628, 127
    %v3633 = vpop.permute.xlu0 %3632
    %3634 = vrot.lane.b32.xlu0 %v3629, 127
    %v3635 = vpop.permute.xlu0 %3634
    %v3638 = vadd.f32 %v3612, %v3633
    %v3639 = vadd.f32 %v3613, %v3635
    %s3640 = sld [smem:[#allocation9 + $0x2e]]
    %v3641 = vstv %s3640
    %v3642 = vmul.f32 %v3606, %v3641
    %v3643 = vmul.f32 %v3607, %v3641
    %3646 = vrot.lane.b32.xlu0 %v3642, 127
    %v3647 = vpop.permute.xlu0 %3646
    %3648 = vrot.lane.b32.xlu0 %v3643, 127
    %v3649 = vpop.permute.xlu0 %3648
    %v3652 = vadd.f32 %v3618, %v3647
    %v3653 = vadd.f32 %v3619, %v3649
    %s3654 = sld [smem:[#allocation9 + $0x49]]
    %v3655 = vstv %s3654
    %v3656 = vmul.f32 %v3606, %v3655
    %v3657 = vmul.f32 %v3607, %v3655
    %3660 = vrot.lane.b32.xlu0 %v3656, 127
    %v3661 = vpop.permute.xlu0 %3660
    %3662 = vrot.lane.b32.xlu0 %v3657, 127
    %v3663 = vpop.permute.xlu0 %3662
    %v3666 = vadd.f32 %v3624, %v3661
    %v3667 = vadd.f32 %v3625, %v3663
    %s3668 = sld [smem:[#allocation9 + $0x14]]
    %v3669 = vstv %s3668
    %v3670 = vmul.f32 %v3606, %v3669
    %v3671 = vmul.f32 %v3607, %v3669
    %3674 = vrot.lane.b32.xlu0 %v3670, 126
    %v3675 = vpop.permute.xlu0 %3674
    %3676 = vrot.lane.b32.xlu0 %v3671, 126
    %v3677 = vpop.permute.xlu0 %3676
    %v3680 = vadd.f32 %v3638, %v3675
    %v3681 = vadd.f32 %v3639, %v3677
    %s3682 = sld [smem:[#allocation9 + $0x2f]]
    %v3683 = vstv %s3682
    %v3684 = vmul.f32 %v3606, %v3683
    %v3685 = vmul.f32 %v3607, %v3683
    %3688 = vrot.lane.b32.xlu0 %v3684, 126
    %v3689 = vpop.permute.xlu0 %3688
    %3690 = vrot.lane.b32.xlu0 %v3685, 126
    %v3691 = vpop.permute.xlu0 %3690
    %v3694 = vadd.f32 %v3652, %v3689
    %v3695 = vadd.f32 %v3653, %v3691
    %s3696 = sld [smem:[#allocation9 + $0x4a]]
    %v3697 = vstv %s3696
    %v3698 = vmul.f32 %v3606, %v3697
    %v3699 = vmul.f32 %v3607, %v3697
    %3702 = vrot.lane.b32.xlu0 %v3698, 126
    %v3703 = vpop.permute.xlu0 %3702
    %3704 = vrot.lane.b32.xlu0 %v3699, 126
    %v3705 = vpop.permute.xlu0 %3704
    %v3708 = vadd.f32 %v3666, %v3703
    %v3709 = vadd.f32 %v3667, %v3705
    %v3710 = vld [vmem:[%s2973 + $0x1] sm:$0xff]
    %v3711 = vld [vmem:[%s2973 + $0x9] sm:$0xf]
    %s3712 = sld [smem:[#allocation9 + $0x15]]
    %v3713 = vstv %s3712
    %v3714 = vmul.f32 %v3710, %v3713
    %v3715 = vmul.f32 %v3711, %v3713
    %v3716 = vadd.f32 %v3680, %v3714
    %v3717 = vadd.f32 %v3681, %v3715
    %s3718 = sld [smem:[#allocation9 + $0x30]]
    %v3719 = vstv %s3718
    %v3720 = vmul.f32 %v3710, %v3719
    %v3721 = vmul.f32 %v3711, %v3719
    %v3722 = vadd.f32 %v3694, %v3720
    %v3723 = vadd.f32 %v3695, %v3721
    %s3724 = sld [smem:[#allocation9 + $0x4b]]
    %v3725 = vstv %s3724
    %v3726 = vmul.f32 %v3710, %v3725
    %v3727 = vmul.f32 %v3711, %v3725
    %v3728 = vadd.f32 %v3708, %v3726
    %v3729 = vadd.f32 %v3709, %v3727
    %s3730 = sld [smem:[#allocation9 + $0x16]]
    %v3731 = vstv %s3730
    %v3732 = vmul.f32 %v3710, %v3731
    %v3733 = vmul.f32 %v3711, %v3731
    %3736 = vrot.lane.b32.xlu0 %v3732, 127
    %v3737 = vpop.permute.xlu0 %3736
    %3738 = vrot.lane.b32.xlu0 %v3733, 127
    %v3739 = vpop.permute.xlu0 %3738
    %v3742 = vadd.f32 %v3716, %v3737
    %v3743 = vadd.f32 %v3717, %v3739
    %s3744 = sld [smem:[#allocation9 + $0x31]]
    %v3745 = vstv %s3744
    %v3746 = vmul.f32 %v3710, %v3745
    %v3747 = vmul.f32 %v3711, %v3745
    %3750 = vrot.lane.b32.xlu0 %v3746, 127
    %v3751 = vpop.permute.xlu0 %3750
    %3752 = vrot.lane.b32.xlu0 %v3747, 127
    %v3753 = vpop.permute.xlu0 %3752
    %v3756 = vadd.f32 %v3722, %v3751
    %v3757 = vadd.f32 %v3723, %v3753
    %s3758 = sld [smem:[#allocation9 + $0x4c]]
    %v3759 = vstv %s3758
    %v3760 = vmul.f32 %v3710, %v3759
    %v3761 = vmul.f32 %v3711, %v3759
    %3764 = vrot.lane.b32.xlu0 %v3760, 127
    %v3765 = vpop.permute.xlu0 %3764
    %3766 = vrot.lane.b32.xlu0 %v3761, 127
    %v3767 = vpop.permute.xlu0 %3766
    %v3770 = vadd.f32 %v3728, %v3765
    %v3771 = vadd.f32 %v3729, %v3767
    %s3772 = sld [smem:[#allocation9 + $0x17]]
    %v3773 = vstv %s3772
    %v3774 = vmul.f32 %v3710, %v3773
    %v3775 = vmul.f32 %v3711, %v3773
    %3778 = vrot.lane.b32.xlu0 %v3774, 126
    %v3779 = vpop.permute.xlu0 %3778
    %3780 = vrot.lane.b32.xlu0 %v3775, 126
    %v3781 = vpop.permute.xlu0 %3780
    %v3784 = vadd.f32 %v3742, %v3779
    %v3785 = vadd.f32 %v3743, %v3781
    %s3786 = sld [smem:[#allocation9 + $0x32]]
    %v3787 = vstv %s3786
    %v3788 = vmul.f32 %v3710, %v3787
    %v3789 = vmul.f32 %v3711, %v3787
    %3792 = vrot.lane.b32.xlu0 %v3788, 126
    %v3793 = vpop.permute.xlu0 %3792
    %3794 = vrot.lane.b32.xlu0 %v3789, 126
    %v3795 = vpop.permute.xlu0 %3794
    %v3798 = vadd.f32 %v3756, %v3793
    %v3799 = vadd.f32 %v3757, %v3795
    %s3800 = sld [smem:[#allocation9 + $0x4d]]
    %v3801 = vstv %s3800
    %v3802 = vmul.f32 %v3710, %v3801
    %v3803 = vmul.f32 %v3711, %v3801
    %3806 = vrot.lane.b32.xlu0 %v3802, 126
    %v3807 = vpop.permute.xlu0 %3806
    %3808 = vrot.lane.b32.xlu0 %v3803, 126
    %v3809 = vpop.permute.xlu0 %3808
    %v3812 = vadd.f32 %v3770, %v3807
    %v3813 = vadd.f32 %v3771, %v3809
    %v3814 = vld [vmem:[%s2973 + $0x2] sm:$0xff]
    %v3815 = vld [vmem:[%s2973 + $0xa] sm:$0xf]
    %s3816 = sld [smem:[#allocation9 + $0x18]]
    %v3817 = vstv %s3816
    %v3818 = vmul.f32 %v3814, %v3817
    %v3819 = vmul.f32 %v3815, %v3817
    %v3820 = vadd.f32 %v3784, %v3818
    %v3821 = vadd.f32 %v3785, %v3819
    %s3822 = sld [smem:[#allocation9 + $0x33]]
    %v3823 = vstv %s3822
    %v3824 = vmul.f32 %v3814, %v3823
    %v3825 = vmul.f32 %v3815, %v3823
    %v3826 = vadd.f32 %v3798, %v3824
    %v3827 = vadd.f32 %v3799, %v3825
    %s3828 = sld [smem:[#allocation9 + $0x4e]]
    %v3829 = vstv %s3828
    %v3830 = vmul.f32 %v3814, %v3829
    %v3831 = vmul.f32 %v3815, %v3829
    %v3832 = vadd.f32 %v3812, %v3830
    %v3833 = vadd.f32 %v3813, %v3831
    %s3834 = sld [smem:[#allocation9 + $0x19]]
    %v3835 = vstv %s3834
    %v3836 = vmul.f32 %v3814, %v3835
    %v3837 = vmul.f32 %v3815, %v3835
    %3840 = vrot.lane.b32.xlu0 %v3836, 127
    %v3841 = vpop.permute.xlu0 %3840
    %3842 = vrot.lane.b32.xlu0 %v3837, 127
    %v3843 = vpop.permute.xlu0 %3842
    %v3846 = vadd.f32 %v3820, %v3841
    %v3847 = vadd.f32 %v3821, %v3843
    %s3848 = sld [smem:[#allocation9 + $0x34]]
    %v3849 = vstv %s3848
    %v3850 = vmul.f32 %v3814, %v3849
    %v3851 = vmul.f32 %v3815, %v3849
    %3854 = vrot.lane.b32.xlu0 %v3850, 127
    %v3855 = vpop.permute.xlu0 %3854
    %3856 = vrot.lane.b32.xlu0 %v3851, 127
    %v3857 = vpop.permute.xlu0 %3856
    %v3860 = vadd.f32 %v3826, %v3855
    %v3861 = vadd.f32 %v3827, %v3857
    %s3862 = sld [smem:[#allocation9 + $0x4f]]
    %v3863 = vstv %s3862
    %v3864 = vmul.f32 %v3814, %v3863
    %v3865 = vmul.f32 %v3815, %v3863
    %3868 = vrot.lane.b32.xlu0 %v3864, 127
    %v3869 = vpop.permute.xlu0 %3868
    %3870 = vrot.lane.b32.xlu0 %v3865, 127
    %v3871 = vpop.permute.xlu0 %3870
    %v3874 = vadd.f32 %v3832, %v3869
    %v3875 = vadd.f32 %v3833, %v3871
    %s3876 = sld [smem:[#allocation9 + $0x1a]]
    %v3877 = vstv %s3876
    %v3878 = vmul.f32 %v3814, %v3877
    %v3879 = vmul.f32 %v3815, %v3877
    %3882 = vrot.lane.b32.xlu0 %v3878, 126
    %v3883 = vpop.permute.xlu0 %3882
    %3884 = vrot.lane.b32.xlu0 %v3879, 126
    %v3885 = vpop.permute.xlu0 %3884
    %v3888 = vadd.f32 %v3846, %v3883
    %v3889 = vadd.f32 %v3847, %v3885
    %s3890 = sld [smem:[#allocation9 + $0x35]]
    %v3891 = vstv %s3890
    %v3892 = vmul.f32 %v3814, %v3891
    %v3893 = vmul.f32 %v3815, %v3891
    %3896 = vrot.lane.b32.xlu0 %v3892, 126
    %v3897 = vpop.permute.xlu0 %3896
    %3898 = vrot.lane.b32.xlu0 %v3893, 126
    %v3899 = vpop.permute.xlu0 %3898
    %v3902 = vadd.f32 %v3860, %v3897
    %v3903 = vadd.f32 %v3861, %v3899
    %s3904 = sld [smem:[#allocation9 + $0x50]]
    %v3905 = vstv %s3904
    %v3906 = vmul.f32 %v3814, %v3905
    %v3907 = vmul.f32 %v3815, %v3905
    %3910 = vrot.lane.b32.xlu0 %v3906, 126
    %v3911 = vpop.permute.xlu0 %3910
    %3912 = vrot.lane.b32.xlu0 %v3907, 126
    %v3913 = vpop.permute.xlu0 %3912
    %v3916 = vadd.f32 %v3874, %v3911
    %v3917 = vadd.f32 %v3875, %v3913
    %3920 = vrot.lane.b32.xlu0 %v3086, 127
    %v3921 = vpop.permute.xlu0 %3920
    %3922 = vrot.lane.b32.xlu0 %v3087, 127
    %v3923 = vpop.permute.xlu0 %3922
    %v3926 = vadd.f32 %v3888, %v3921
    %v3927 = vadd.f32 %v3889, %v3923
    %s3928 = scalar_lea.vmem %s5, 48
    %3929 = vst.msk [vmem:[%s3928] sm:$0xff] %vm1988, %v3926
    %3930 = vst.msk [vmem:[%s3928 + $0x8] sm:$0xf] %vm1990, %v3927
    %v3931 = vld [vmem:[%s2970 + $0x1] sm:$0xff]
    %v3932 = vld [vmem:[%s2970 + $0x9] sm:$0xf]
    %3935 = vrot.lane.b32.xlu0 %v3931, 127
    %v3936 = vpop.permute.xlu0 %3935
    %3937 = vrot.lane.b32.xlu0 %v3932, 127
    %v3938 = vpop.permute.xlu0 %3937
    %v3941 = vadd.f32 %v3902, %v3936
    %v3942 = vadd.f32 %v3903, %v3938
    %s3943 = scalar_lea.vmem %s5, 64
    %3944 = vst.msk [vmem:[%s3943] sm:$0xff] %vm1988, %v3941
    %3945 = vst.msk [vmem:[%s3943 + $0x8] sm:$0xf] %vm1990, %v3942
    %v3946 = vld [vmem:[%s2973 + $0x1] sm:$0xff]
    %v3947 = vld [vmem:[%s2973 + $0x9] sm:$0xf]
    %3950 = vrot.lane.b32.xlu0 %v3946, 127
    %v3951 = vpop.permute.xlu0 %3950
    %3952 = vrot.lane.b32.xlu0 %v3947, 127
    %v3953 = vpop.permute.xlu0 %3952
    %v3956 = vadd.f32 %v3916, %v3951
    %v3957 = vadd.f32 %v3917, %v3953
    %s3958 = scalar_lea.vmem %s5, 80
    %3959 = vst.msk [vmem:[%s3958] sm:$0xff] %vm1988, %v3956
    %3960 = vst.msk [vmem:[%s3958 + $0x8] sm:$0xf] %vm1990, %v3957
    // Predicated region
    $region42: #{tpu_custom_call.1} parent=1 // pred_check
      _
    $region43: #{tpu_custom_call.1} parent=1 // pred_check_branch
      %3962 = sbr.rel (0) target = $region45
    $region44: #{tpu_custom_call.1} parent=1 // pred_region
      _
    $region45: #{tpu_custom_call.1} parent=1 // pred_fallthru
      _
    // Predicated region
    $region46: #{tpu_custom_call.1} parent=1 // pred_check
      _
    $region47: #{tpu_custom_call.1} parent=1 // pred_check_branch
      %3964 = sbr.rel (0) target = $region49
    $region48: #{tpu_custom_call.1} parent=1 // pred_region
      _
    $region49: #{tpu_custom_call.1} parent=1 // pred_fallthru
      _
    %3965 = vsyncpa [#allocation4], 1
    %3966 = vsyncpa [#allocation5], 1
    %3967 = vsyncpa [#allocation8], 1
    %3968 = vsyncpa [#allocation11], 1

</llo_original>
